<compile_context>
chip_gen: v6e
topology: v6e:2x2x1
jax: 0.10.0
libtpu: 0.0.40
codegen_flags: <defaults>
</compile_context>

<pallas_src>
import jax
import jax.numpy as jnp
from jax.experimental import pallas as pl
from jax.experimental.pallas import tpu as pltpu


def _bottleneck_kernel(x_ref, xprev_ref, xnext_ref,
                       w1_ref, b1_ref, w2_ref, b2_ref, w3_ref, b3_ref,
                       out_ref, y1pad_ref, patch_ref, z_ref):
    td, H, W, Cin = x_ref.shape          # N dim is squeezed by the BlockSpec
    P = w1_ref.shape[1]
    HW = H * W
    M = td * HW
    Mp = (td + 2) * HW
    cdt = y1pad_ref.dtype                # MXU input / staging dtype (bf16 or f32)

    d_tile = pl.program_id(1)
    n_dtiles = pl.num_programs(1)

    # ---- zero only the thin H/W halo shells of the padded conv2 input ------
    y1pad_ref[:, 0:1, :, :] = jnp.zeros((td + 2, 1, W + 2, P), cdt)
    y1pad_ref[:, H + 1:H + 2, :, :] = jnp.zeros((td + 2, 1, W + 2, P), cdt)
    y1pad_ref[:, :, 0:1, :] = jnp.zeros((td + 2, H + 2, 1, P), cdt)
    y1pad_ref[:, :, W + 1:W + 2, :] = jnp.zeros((td + 2, H + 2, 1, P), cdt)

    # ---- conv1 (1x1x1) + folded bn1 + relu ----------------------------------
    w1 = w1_ref[...]
    b1 = b1_ref[...]

    def conv1(x2d):
        y = jnp.dot(x2d.astype(cdt), w1, preferred_element_type=jnp.float32)
        return jnp.maximum(y + b1, 0.0).astype(cdt)

    y1pad_ref[1:td + 1, 1:H + 1, 1:W + 1, :] = conv1(
        x_ref[...].reshape(M, Cin)).reshape(td, H, W, P)

    # Depth-halo planes: conv1 of the neighbouring planes, or zeros at the
    # global volume boundary (== conv2's zero padding along D).  pl.when
    # gates avoid wasted boundary-plane compute.
    @pl.when(d_tile == 0)
    def _():
        y1pad_ref[0:1, 1:H + 1, 1:W + 1, :] = jnp.zeros((1, H, W, P), cdt)

    @pl.when(d_tile > 0)
    def _():
        y1pad_ref[0:1, 1:H + 1, 1:W + 1, :] = conv1(
            xprev_ref[...].reshape(HW, Cin)).reshape(1, H, W, P)

    @pl.when(d_tile == n_dtiles - 1)
    def _():
        y1pad_ref[td + 1:td + 2, 1:H + 1, 1:W + 1, :] = jnp.zeros(
            (1, H, W, P), cdt)

    @pl.when(d_tile < n_dtiles - 1)
    def _():
        y1pad_ref[td + 1:td + 2, 1:H + 1, 1:W + 1, :] = conv1(
            xnext_ref[...].reshape(HW, Cin)).reshape(1, H, W, P)

    # ---- conv2 (3x3x3, pad=1) -----------------------------------------------
    # im2col patch built ONCE over all td+2 depth planes (9 H/W taps, K=9P);
    # the three kd weight slabs are packed along the MXU output dim (3P wide)
    # so conv2 is a single matmul; kd contributions are then combined by
    # depth-plane row shifts + two adds.
    for kh in range(3):
        for kw in range(3):
            t = kh * 3 + kw
            tap = y1pad_ref[:, kh:kh + H, kw:kw + W, :]
            patch_ref[:, t * P:(t + 1) * P] = tap.reshape(Mp, P)

    z_ref[...] = jnp.dot(patch_ref[...], w2_ref[...],
                         preferred_element_type=jnp.float32)

    # ---- bn2 + relu, conv3 (1x1x1) + bn3 + identity residual + relu ---------
    # Chunked per output depth plane (pl.loop) to bound vreg live ranges.
    w3 = w3_ref[...]
    b2 = b2_ref[...]
    b3 = b3_ref[...]

    @pl.loop(0, td)
    def _(d):
        r0 = pl.multiple_of(d * HW, HW)
        r1 = pl.multiple_of((d + 1) * HW, HW)
        r2 = pl.multiple_of((d + 2) * HW, HW)
        y2 = (z_ref[pl.ds(r0, HW), 0:P]
              + z_ref[pl.ds(r1, HW), P:2 * P]
              + z_ref[pl.ds(r2, HW), 2 * P:3 * P])
        y2 = jnp.maximum(y2 + b2, 0.0)
        y3 = jnp.dot(y2.astype(cdt), w3,
                     preferred_element_type=jnp.float32) + b3
        res = x_ref[d].reshape(HW, Cin).astype(jnp.float32)
        out = jnp.maximum(y3 + res, 0.0)
        out_ref[d] = out.reshape(H, W, Cin).astype(out_ref.dtype)


def _padded_bytes(shape, dtype):
    """Approximate Mosaic-tiled VMEM footprint: last dim rounded to 128 lanes,
    second-to-last rounded to the dtype's sublane packing."""
    isz = jnp.dtype(dtype).itemsize
    s = list(shape)
    s[-1] = -(-s[-1] // 128) * 128
    if len(s) >= 2:
        sub = max(8 * 4 // isz, 8)
        s[-2] = -(-s[-2] // sub) * sub
    n = 1
    for v in s:
        n *= v
    return n * isz


def bottleneck_forward(x_ndhwc, w1, bn1, w2, bn2, w3, bn3, *, eps=1e-5,
                       td=None, compute_dtype=jnp.bfloat16):
    """Fold eval-mode BN into the conv weights, reshape to matmul form and
    launch the fused, D-tiled Pallas kernel (NDHWC in, NDHWC f32 out)."""
    N, D, H, W, Cin = x_ndhwc.shape
    P = w1.shape[0]                      # planes
    assert Cin == 4 * P, "identity residual requires inplanes == 4 * planes"
    itemsize = jnp.dtype(compute_dtype).itemsize

    # ---- generation-aware scoped-VMEM limit (v5e/v6e: 128 MiB, v7x: 64 MiB) -
    try:
        vmem_cap = int(pltpu.get_tpu_info().vmem_capacity_bytes)
    except Exception:
        vmem_cap = 64 * 1024 * 1024      # conservative fallback
    vmem_limit = max(min(vmem_cap * 3 // 4, 112 * 1024 * 1024),
                     32 * 1024 * 1024)

    # ---- depth-tile auto-pick against the real (padded) per-tile footprint --
    def tile_vmem_bytes(t):
        b = 0
        b += 2 * _padded_bytes((t, H, W, Cin), compute_dtype)        # x (2-buf)
        b += 2 * 2 * _padded_bytes((1, H, W, Cin), compute_dtype)    # halo planes
        b += 2 * _padded_bytes((t, H, W, Cin), jnp.float32)          # out (2-buf)
        b += 2 * (_padded_bytes((Cin, P), compute_dtype)             # weights (2-buf)
                  + _padded_bytes((9 * P, 3 * P), compute_dtype)
                  + _padded_bytes((P, 4 * P), compute_dtype)
                  + 2 * _padded_bytes((1, P), jnp.float32)
                  + _padded_bytes((1, 4 * P), jnp.float32))
        b += _padded_bytes((t + 2, H + 2, W + 2, P), compute_dtype)  # padded y1
        b += _padded_bytes(((t + 2) * H * W, 9 * P), compute_dtype)  # im2col patch
        b += _padded_bytes(((t + 2) * H * W, 3 * P), jnp.float32)    # conv2 result
        return b

    if td is None:
        budget = vmem_limit - 4 * 1024 * 1024     # compiler-internal headroom
        feasible = [c for c in range(1, D + 1)
                    if D % c == 0 and tile_vmem_bytes(c) <= budget] or [1]
        best = max(feasible)
        # Prefer a grid that splits evenly across 2 TensorCores (v7x megacore),
        # unless that would shrink the depth tile by more than 2x.
        even = [c for c in feasible if (N * (D // c)) % 2 == 0]
        td = max(even) if even and 2 * max(even) >= best else best
    assert D % td == 0, "td must divide D"
    DT = D // td

    # ---- fold eval-mode BN: scale goes into the conv weights, bias stays ----
    def fold(bn):
        g, b, m, v = bn
        s = g / jnp.sqrt(v + eps)
        return s, b - m * s

    s1, b1 = fold(bn1)
    s2, b2 = fold(bn2)
    s3, b3 = fold(bn3)

    # PyTorch conv weights are (Cout, Cin, kD, kH, kW).
    w1m = (w1[:, :, 0, 0, 0] * s1[:, None]).T.astype(compute_dtype)   # (Cin, P)
    w2s = w2 * s2[:, None, None, None, None]                          # (P, P, 3, 3, 3)
    # rows: (kh, kw, cin)  -> matches the im2col patch column order
    # cols: (kd, cout)     -> three kd slabs packed along the MXU output dim
    w2m = jnp.transpose(w2s, (3, 4, 1, 2, 0)).reshape(9 * P, 3 * P)
    w2m = w2m.astype(compute_dtype)
    w3m = (w3[:, :, 0, 0, 0] * s3[:, None]).T.astype(compute_dtype)   # (P, 4P)
    b1 = b1.reshape(1, P).astype(jnp.float32)
    b2 = b2.reshape(1, P).astype(jnp.float32)
    b3 = b3.reshape(1, 4 * P).astype(jnp.float32)

    # x enters HBM/VMEM in the compute dtype (halves x + halo DMA bytes for
    # bf16); accumulation and the residual add are done in f32 in-kernel.
    x_c = x_ndhwc.astype(compute_dtype)

    # ---- BlockSpecs ----------------------------------------------------------
    x_spec = pl.BlockSpec((None, td, H, W, Cin), lambda n, d: (n, d, 0, 0, 0))
    xprev_spec = pl.BlockSpec(
        (None, None, H, W, Cin),
        lambda n, d: (n, jnp.maximum(d * td - 1, 0), 0, 0, 0))
    xnext_spec = pl.BlockSpec(
        (None, None, H, W, Cin),
        lambda n, d: (n, jnp.minimum(d * td + td, D - 1), 0, 0, 0))
    out_spec = pl.BlockSpec((None, td, H, W, Cin), lambda n, d: (n, d, 0, 0, 0))

    # TODO(synk): mark the constant-index weight/bias specs single-buffered
    #             (pipeline_mode=pl.Buffered(1)) once that is uniformly
    #             supported; negligible at P=32.
    w1_spec = pl.BlockSpec((Cin, P), lambda n, d: (0, 0))
    b1_spec = pl.BlockSpec((1, P), lambda n, d: (0, 0))
    w2_spec = pl.BlockSpec((9 * P, 3 * P), lambda n, d: (0, 0))
    b2_spec = pl.BlockSpec((1, P), lambda n, d: (0, 0))
    w3_spec = pl.BlockSpec((P, 4 * P), lambda n, d: (0, 0))
    b3_spec = pl.BlockSpec((1, 4 * P), lambda n, d: (0, 0))

    flops = 2 * N * D * H * W * (Cin * P + 27 * P * P + P * Cin)
    bytes_accessed = (N * D * H * W * Cin * itemsize            # x
                      + 2 * N * DT * H * W * Cin * itemsize     # depth halo reads
                      + N * D * H * W * Cin * 4                 # out (f32)
                      + (w1m.size + w2m.size + w3m.size) * itemsize
                      + (b1.size + b2.size + b3.size) * 4)

    grid_spec = pltpu.PrefetchScalarGridSpec(
        num_scalar_prefetch=0,
        grid=(N, DT),
        in_specs=[x_spec, xprev_spec, xnext_spec, w1_spec, b1_spec,
                  w2_spec, b2_spec, w3_spec, b3_spec],
        out_specs=out_spec,
        scratch_shapes=[
            pltpu.VMEM((td + 2, H + 2, W + 2, P), compute_dtype),   # padded y1
            pltpu.VMEM(((td + 2) * H * W, 9 * P), compute_dtype),   # im2col patch
            pltpu.VMEM(((td + 2) * H * W, 3 * P), jnp.float32),     # conv2 result
        ],
    )

    return pl.pallas_call(
        _bottleneck_kernel,
        out_shape=jax.ShapeDtypeStruct((N, D, H, W, Cin), jnp.float32),
        grid_spec=grid_spec,
        compiler_params=pltpu.CompilerParams(
            dimension_semantics=("parallel", "parallel"),
            vmem_limit_bytes=int(vmem_limit),
        ),
        cost_estimate=pl.CostEstimate(
            flops=int(flops), transcendentals=0,
            bytes_accessed=int(bytes_accessed)),
    )(x_c, x_c, x_c, w1m, b1, w2m, b2, w3m, b3)


def bottleneck_reference(x_ncdhw, w1, bn1, w2, bn2, w3, bn3, eps=1e-5):
    """Pure-JAX f32 reference mirroring the PyTorch forward (NCDHW)."""
    def bn(y, p):
        g, b, m, v = p
        sh = (1, -1, 1, 1, 1)
        return (y - m.reshape(sh)) * (g / jnp.sqrt(v + eps)).reshape(sh) + b.reshape(sh)

    dn = ('NCDHW', 'OIDHW', 'NCDHW')
    out = jax.lax.conv_general_dilated(x_ncdhw, w1, (1, 1, 1), 'VALID',
                                       dimension_numbers=dn)
    out = jax.nn.relu(bn(out, bn1))
    out = jax.lax.conv_general_dilated(out, w2, (1, 1, 1),
                                       ((1, 1), (1, 1), (1, 1)),
                                       dimension_numbers=dn)
    out = jax.nn.relu(bn(out, bn2))
    out = jax.lax.conv_general_dilated(out, w3, (1, 1, 1), 'VALID',
                                       dimension_numbers=dn)
    out = bn(out, bn3)
    return jax.nn.relu(out + x_ncdhw)


if __name__ == "__main__":
    key = jax.random.PRNGKey(0)
    N, D, H, W = 2, 8, 8, 8
    planes = 32
    inplanes = planes * 4          # 128 -> lane-dense residual/output channels

    ks = jax.random.split(key, 7)

    def bn_params(k, c):
        k1, k2, k3, k4 = jax.random.split(k, 4)
        gamma = jax.random.uniform(k1, (c,), jnp.float32, 0.5, 1.5)
        beta = 0.1 * jax.random.normal(k2, (c,), jnp.float32)
        mean = 0.1 * jax.random.normal(k3, (c,), jnp.float32)
        var = jax.random.uniform(k4, (c,), jnp.float32, 0.5, 1.5)
        return (gamma, beta, mean, var)

    x_ncdhw = jax.random.normal(ks[0], (N, inplanes, D, H, W), jnp.float32)
    w1 = 0.1 * jax.random.normal(ks[1], (planes, inplanes, 1, 1, 1), jnp.float32)
    w2 = 0.1 * jax.random.normal(ks[2], (planes, planes, 3, 3, 3), jnp.float32)
    w3 = 0.1 * jax.random.normal(ks[3], (planes * 4, planes, 1, 1, 1), jnp.float32)
    bn1 = bn_params(ks[4], planes)
    bn2 = bn_params(ks[5], planes)
    bn3 = bn_params(ks[6], planes * 4)

    # Kernel consumes NDHWC.
    x_ndhwc = jnp.transpose(x_ncdhw, (0, 2, 3, 4, 1))
    ref = bottleneck_reference(x_ncdhw, w1, bn1, w2, bn2, w3, bn3)

    # 1) f32 MXU path, td=2 (4 depth tiles): rigorous check of boundary and
    #    interior depth halos against the f32 reference.
    out32 = bottleneck_forward(x_ndhwc, w1, bn1, w2, bn2, w3, bn3,
                               td=2, compute_dtype=jnp.float32)
    out32 = jax.block_until_ready(out32)
    out32_ncdhw = jnp.transpose(out32, (0, 4, 1, 2, 3))
    assert out32_ncdhw.shape == ref.shape
    assert jnp.allclose(out32_ncdhw, ref, atol=1e-3, rtol=1e-3), \
        float(jnp.max(jnp.abs(out32_ncdhw - ref)))

    # 2) bf16 MXU/storage path with explicit depth tiling (exercises halos);
    #    looser tolerance since x, activations and matmul inputs are bf16
    #    (accumulation and residual add stay f32).
    outbf = bottleneck_forward(x_ndhwc, w1, bn1, w2, bn2, w3, bn3, td=2)
    outbf = jax.block_until_ready(outbf)
    outbf_ncdhw = jnp.transpose(outbf, (0, 4, 1, 2, 3))
    assert jnp.allclose(outbf_ncdhw, ref, atol=2e-1, rtol=1e-1), \
        float(jnp.max(jnp.abs(outbf_ncdhw - ref)))

    # 3) default performance configuration: bf16 + auto depth tile / VMEM limit.
    outauto = bottleneck_forward(x_ndhwc, w1, bn1, w2, bn2, w3, bn3)
    outauto = jax.block_until_ready(outauto)
    outauto_ncdhw = jnp.transpose(outauto, (0, 4, 1, 2, 3))
    assert jnp.allclose(outauto_ncdhw, ref, atol=2e-1, rtol=1e-1), \
        float(jnp.max(jnp.abs(outauto_ncdhw - ref)))

    print("KERNEL_OK")
</pallas_src>

<mosaic_0001>
module attributes {stable_mosaic.version = 11 : i64} {
  func.func @_bottleneck_kernel(%arg0: i32, %arg1: i32, %arg2: memref<1x2x8x8x128xf32, #tpu.memory_space<vmem>>, %arg3: memref<1x1x8x8x128xf32, #tpu.memory_space<vmem>>, %arg4: memref<1x1x8x8x128xf32, #tpu.memory_space<vmem>>, %arg5: memref<128x32xf32, #tpu.memory_space<vmem>>, %arg6: memref<1x32xf32, #tpu.memory_space<vmem>>, %arg7: memref<288x96xf32, #tpu.memory_space<vmem>>, %arg8: memref<1x32xf32, #tpu.memory_space<vmem>>, %arg9: memref<32x128xf32, #tpu.memory_space<vmem>>, %arg10: memref<1x128xf32, #tpu.memory_space<vmem>>, %arg11: memref<1x2x8x8x128xf32, #tpu.memory_space<vmem>>, %arg12: memref<4x10x10x32xf32, #tpu.memory_space<vmem>>, %arg13: memref<256x288xf32, #tpu.memory_space<vmem>>, %arg14: memref<256x96xf32, #tpu.memory_space<vmem>>) attributes {dimension_semantics = [#tpu.dimension_semantics<parallel>, #tpu.dimension_semantics<parallel>], iteration_bounds = array<i64: 2, 4>, scalar_prefetch = 0 : i64, scratch_operands = 3 : i64, tpu.core_type = #tpu.core_type<tc>, window_params = [{transform_indices = @transform_0, window_bounds = array<i64: 1, 2, 8, 8, 128>}, {transform_indices = @transform_1, window_bounds = array<i64: 1, 1, 8, 8, 128>}, {transform_indices = @transform_2, window_bounds = array<i64: 1, 1, 8, 8, 128>}, {pipeline_mode = #tpu.pipeline_mode<synchronous>, transform_indices = @transform_3, window_bounds = array<i64: 128, 32>}, {pipeline_mode = #tpu.pipeline_mode<synchronous>, transform_indices = @transform_4, window_bounds = array<i64: 1, 32>}, {pipeline_mode = #tpu.pipeline_mode<synchronous>, transform_indices = @transform_5, window_bounds = array<i64: 288, 96>}, {pipeline_mode = #tpu.pipeline_mode<synchronous>, transform_indices = @transform_6, window_bounds = array<i64: 1, 32>}, {pipeline_mode = #tpu.pipeline_mode<synchronous>, transform_indices = @transform_7, window_bounds = array<i64: 32, 128>}, {pipeline_mode = #tpu.pipeline_mode<synchronous>, transform_indices = @transform_8, window_bounds = array<i64: 1, 128>}, {transform_indices = @transform_9, window_bounds = array<i64: 1, 2, 8, 8, 128>}]} {
    %cst = arith.constant 0.000000e+00 : f32
    %0 = vector.broadcast %cst : f32 to vector<4x1x10x32xf32>
    %c0 = arith.constant 0 : index
    %c0_0 = arith.constant 0 : index
    %c0_1 = arith.constant 0 : index
    %c0_2 = arith.constant 0 : index
    %1 = vector.load %arg12[%c0, %c0_0, %c0_1, %c0_2] : memref<4x10x10x32xf32, #tpu.memory_space<vmem>>, vector<4x1x10x32xf32>
    tpu.vector_store %arg12[%c0, %c0_0, %c0_1, %c0_2], %0 {strides = array<i32>} : memref<4x10x10x32xf32, #tpu.memory_space<vmem>>, vector<4x1x10x32xf32>,
    %cst_3 = arith.constant 0.000000e+00 : f32
    %2 = vector.broadcast %cst_3 : f32 to vector<4x1x10x32xf32>
    %c0_4 = arith.constant 0 : index
    %c9 = arith.constant 9 : index
    %c0_5 = arith.constant 0 : index
    %c0_6 = arith.constant 0 : index
    %3 = vector.load %arg12[%c0_4, %c9, %c0_5, %c0_6] : memref<4x10x10x32xf32, #tpu.memory_space<vmem>>, vector<4x1x10x32xf32>
    tpu.vector_store %arg12[%c0_4, %c9, %c0_5, %c0_6], %2 {strides = array<i32>} : memref<4x10x10x32xf32, #tpu.memory_space<vmem>>, vector<4x1x10x32xf32>,
    %cst_7 = arith.constant 0.000000e+00 : f32
    %4 = vector.broadcast %cst_7 : f32 to vector<4x10x1x32xf32>
    %c0_8 = arith.constant 0 : index
    %c0_9 = arith.constant 0 : index
    %c0_10 = arith.constant 0 : index
    %c0_11 = arith.constant 0 : index
    %5 = vector.load %arg12[%c0_8, %c0_9, %c0_10, %c0_11] : memref<4x10x10x32xf32, #tpu.memory_space<vmem>>, vector<4x10x1x32xf32>
    tpu.vector_store %arg12[%c0_8, %c0_9, %c0_10, %c0_11], %4 {strides = array<i32>} : memref<4x10x10x32xf32, #tpu.memory_space<vmem>>, vector<4x10x1x32xf32>,
    %cst_12 = arith.constant 0.000000e+00 : f32
    %6 = vector.broadcast %cst_12 : f32 to vector<4x10x1x32xf32>
    %c0_13 = arith.constant 0 : index
    %c0_14 = arith.constant 0 : index
    %c9_15 = arith.constant 9 : index
    %c0_16 = arith.constant 0 : index
    %7 = vector.load %arg12[%c0_13, %c0_14, %c9_15, %c0_16] : memref<4x10x10x32xf32, #tpu.memory_space<vmem>>, vector<4x10x1x32xf32>
    tpu.vector_store %arg12[%c0_13, %c0_14, %c9_15, %c0_16], %6 {strides = array<i32>} : memref<4x10x10x32xf32, #tpu.memory_space<vmem>>, vector<4x10x1x32xf32>,
    %c0_17 = arith.constant 0 : index
    %c0_18 = arith.constant 0 : index
    %8 = vector.load %arg5[%c0_17, %c0_18] : memref<128x32xf32, #tpu.memory_space<vmem>>, vector<128x32xf32>
    %c0_19 = arith.constant 0 : index
    %c0_20 = arith.constant 0 : index
    %9 = vector.load %arg6[%c0_19, %c0_20] : memref<1x32xf32, #tpu.memory_space<vmem>>, vector<1x32xf32>
    %c0_21 = arith.constant 0 : index
    %c0_22 = arith.constant 0 : index
    %c0_23 = arith.constant 0 : index
    %c0_24 = arith.constant 0 : index
    %c0_25 = arith.constant 0 : index
    %10 = vector.load %arg2[%c0_21, %c0_22, %c0_23, %c0_24, %c0_25] : memref<1x2x8x8x128xf32, #tpu.memory_space<vmem>>, vector<1x2x8x8x128xf32>
    %11 = vector.shape_cast %10 : vector<1x2x8x8x128xf32> to vector<2x8x8x128xf32>
    %12 = vector.shape_cast %11 : vector<2x8x8x128xf32> to vector<128x128xf32>
    %cst_26 = arith.constant dense<0.000000e+00> : vector<128x32xf32>
    %13 = tpu.matmul %12, %8, %cst_26 {dimension_numbers = #tpu.dot_dimension_numbers<[1], [0], [0], [1], [0, 0, 1, 1], [], []>} : vector<128x128xf32>, vector<128x32xf32>, vector<128x32xf32> -> vector<128x32xf32>
    %14 = vector.broadcast %9 : vector<1x32xf32> to vector<128x32xf32>
    %15 = arith.addf %13, %14 : vector<128x32xf32>
    %cst_27 = arith.constant 0.000000e+00 : f32
    %16 = vector.broadcast %cst_27 : f32 to vector<128x32xf32>
    %17 = arith.maximumf %15, %16 : vector<128x32xf32>
    %18 = vector.shape_cast %17 : vector<128x32xf32> to vector<2x8x8x32xf32>
    %c1 = arith.constant 1 : index
    %c1_28 = arith.constant 1 : index
    %c1_29 = arith.constant 1 : index
    %c0_30 = arith.constant 0 : index
    %19 = vector.load %arg12[%c1, %c1_28, %c1_29, %c0_30] : memref<4x10x10x32xf32, #tpu.memory_space<vmem>>, vector<2x8x8x32xf32>
    tpu.vector_store %arg12[%c1, %c1_28, %c1_29, %c0_30], %18 {strides = array<i32>} : memref<4x10x10x32xf32, #tpu.memory_space<vmem>>, vector<2x8x8x32xf32>,
    %c0_i32 = arith.constant 0 : i32
    %20 = arith.cmpi eq, %arg1, %c0_i32 : i32
    %21 = arith.extui %20 : i1 to i32
    %c0_i32_31 = arith.constant 0 : i32
    %22 = arith.cmpi ne, %21, %c0_i32_31 : i32
    scf.if %22 {
      %cst_97 = arith.constant 0.000000e+00 : f32
      %67 = vector.broadcast %cst_97 : f32 to vector<1x8x8x32xf32>
      %c0_98 = arith.constant 0 : index
      %c1_99 = arith.constant 1 : index
      %c1_100 = arith.constant 1 : index
      %c0_101 = arith.constant 0 : index
      %68 = vector.load %arg12[%c0_98, %c1_99, %c1_100, %c0_101] : memref<4x10x10x32xf32, #tpu.memory_space<vmem>>, vector<1x8x8x32xf32>
      tpu.vector_store %arg12[%c0_98, %c1_99, %c1_100, %c0_101], %67 {strides = array<i32>} : memref<4x10x10x32xf32, #tpu.memory_space<vmem>>, vector<1x8x8x32xf32>,
    } else {
    }
    %c0_i32_32 = arith.constant 0 : i32
    %23 = arith.cmpi sgt, %arg1, %c0_i32_32 : i32
    %24 = arith.extui %23 : i1 to i32
    %c0_i32_33 = arith.constant 0 : i32
    %25 = arith.cmpi ne, %24, %c0_i32_33 : i32
    scf.if %25 {
      %c0_97 = arith.constant 0 : index
      %c0_98 = arith.constant 0 : index
      %c0_99 = arith.constant 0 : index
      %c0_100 = arith.constant 0 : index
      %c0_101 = arith.constant 0 : index
      %67 = vector.load %arg3[%c0_97, %c0_98, %c0_99, %c0_100, %c0_101] : memref<1x1x8x8x128xf32, #tpu.memory_space<vmem>>, vector<1x1x8x8x128xf32>
      %68 = vector.shape_cast %67 : vector<1x1x8x8x128xf32> to vector<8x8x128xf32>
      %69 = vector.shape_cast %68 : vector<8x8x128xf32> to vector<64x128xf32>
      %cst_102 = arith.constant dense<0.000000e+00> : vector<64x32xf32>
      %70 = tpu.matmul %69, %8, %cst_102 {dimension_numbers = #tpu.dot_dimension_numbers<[1], [0], [0], [1], [0, 0, 1, 1], [], []>} : vector<64x128xf32>, vector<128x32xf32>, vector<64x32xf32> -> vector<64x32xf32>
      %71 = vector.broadcast %9 : vector<1x32xf32> to vector<64x32xf32>
      %72 = arith.addf %70, %71 : vector<64x32xf32>
      %cst_103 = arith.constant 0.000000e+00 : f32
      %73 = vector.broadcast %cst_103 : f32 to vector<64x32xf32>
      %74 = arith.maximumf %72, %73 : vector<64x32xf32>
      %75 = vector.shape_cast %74 : vector<64x32xf32> to vector<1x8x8x32xf32>
      %c0_104 = arith.constant 0 : index
      %c1_105 = arith.constant 1 : index
      %c1_106 = arith.constant 1 : index
      %c0_107 = arith.constant 0 : index
      %76 = vector.load %arg12[%c0_104, %c1_105, %c1_106, %c0_107] : memref<4x10x10x32xf32, #tpu.memory_space<vmem>>, vector<1x8x8x32xf32>
      tpu.vector_store %arg12[%c0_104, %c1_105, %c1_106, %c0_107], %75 {strides = array<i32>} : memref<4x10x10x32xf32, #tpu.memory_space<vmem>>, vector<1x8x8x32xf32>,
    } else {
    }
    %c3_i32 = arith.constant 3 : i32
    %26 = arith.cmpi eq, %arg1, %c3_i32 : i32
    %27 = arith.extui %26 : i1 to i32
    %c0_i32_34 = arith.constant 0 : i32
    %28 = arith.cmpi ne, %27, %c0_i32_34 : i32
    scf.if %28 {
      %cst_97 = arith.constant 0.000000e+00 : f32
      %67 = vector.broadcast %cst_97 : f32 to vector<1x8x8x32xf32>
      %c3 = arith.constant 3 : index
      %c1_98 = arith.constant 1 : index
      %c1_99 = arith.constant 1 : index
      %c0_100 = arith.constant 0 : index
      %68 = vector.load %arg12[%c3, %c1_98, %c1_99, %c0_100] : memref<4x10x10x32xf32, #tpu.memory_space<vmem>>, vector<1x8x8x32xf32>
      tpu.vector_store %arg12[%c3, %c1_98, %c1_99, %c0_100], %67 {strides = array<i32>} : memref<4x10x10x32xf32, #tpu.memory_space<vmem>>, vector<1x8x8x32xf32>,
    } else {
    }
    %c3_i32_35 = arith.constant 3 : i32
    %29 = arith.cmpi slt, %arg1, %c3_i32_35 : i32
    %30 = arith.extui %29 : i1 to i32
    %c0_i32_36 = arith.constant 0 : i32
    %31 = arith.cmpi ne, %30, %c0_i32_36 : i32
    scf.if %31 {
      %c0_97 = arith.constant 0 : index
      %c0_98 = arith.constant 0 : index
      %c0_99 = arith.constant 0 : index
      %c0_100 = arith.constant 0 : index
      %c0_101 = arith.constant 0 : index
      %67 = vector.load %arg4[%c0_97, %c0_98, %c0_99, %c0_100, %c0_101] : memref<1x1x8x8x128xf32, #tpu.memory_space<vmem>>, vector<1x1x8x8x128xf32>
      %68 = vector.shape_cast %67 : vector<1x1x8x8x128xf32> to vector<8x8x128xf32>
      %69 = vector.shape_cast %68 : vector<8x8x128xf32> to vector<64x128xf32>
      %cst_102 = arith.constant dense<0.000000e+00> : vector<64x32xf32>
      %70 = tpu.matmul %69, %8, %cst_102 {dimension_numbers = #tpu.dot_dimension_numbers<[1], [0], [0], [1], [0, 0, 1, 1], [], []>} : vector<64x128xf32>, vector<128x32xf32>, vector<64x32xf32> -> vector<64x32xf32>
      %71 = vector.broadcast %9 : vector<1x32xf32> to vector<64x32xf32>
      %72 = arith.addf %70, %71 : vector<64x32xf32>
      %cst_103 = arith.constant 0.000000e+00 : f32
      %73 = vector.broadcast %cst_103 : f32 to vector<64x32xf32>
      %74 = arith.maximumf %72, %73 : vector<64x32xf32>
      %75 = vector.shape_cast %74 : vector<64x32xf32> to vector<1x8x8x32xf32>
      %c3 = arith.constant 3 : index
      %c1_104 = arith.constant 1 : index
      %c1_105 = arith.constant 1 : index
      %c0_106 = arith.constant 0 : index
      %76 = vector.load %arg12[%c3, %c1_104, %c1_105, %c0_106] : memref<4x10x10x32xf32, #tpu.memory_space<vmem>>, vector<1x8x8x32xf32>
      tpu.vector_store %arg12[%c3, %c1_104, %c1_105, %c0_106], %75 {strides = array<i32>} : memref<4x10x10x32xf32, #tpu.memory_space<vmem>>, vector<1x8x8x32xf32>,
    } else {
    }
    %c0_37 = arith.constant 0 : index
    %c0_38 = arith.constant 0 : index
    %c0_39 = arith.constant 0 : index
    %c0_40 = arith.constant 0 : index
    %32 = vector.load %arg12[%c0_37, %c0_38, %c0_39, %c0_40] : memref<4x10x10x32xf32, #tpu.memory_space<vmem>>, vector<4x8x8x32xf32>
    %33 = vector.shape_cast %32 : vector<4x8x8x32xf32> to vector<256x32xf32>
    %c0_41 = arith.constant 0 : index
    %c0_42 = arith.constant 0 : index
    %34 = vector.load %arg13[%c0_41, %c0_42] : memref<256x288xf32, #tpu.memory_space<vmem>>, vector<256x32xf32>
    tpu.vector_store %arg13[%c0_41, %c0_42], %33 {strides = array<i32>} : memref<256x288xf32, #tpu.memory_space<vmem>>, vector<256x32xf32>,
    %c0_43 = arith.constant 0 : index
    %c0_44 = arith.constant 0 : index
    %c1_45 = arith.constant 1 : index
    %c0_46 = arith.constant 0 : index
    %35 = vector.load %arg12[%c0_43, %c0_44, %c1_45, %c0_46] : memref<4x10x10x32xf32, #tpu.memory_space<vmem>>, vector<4x8x8x32xf32>
    %36 = vector.shape_cast %35 : vector<4x8x8x32xf32> to vector<256x32xf32>
    %c0_47 = arith.constant 0 : index
    %c32 = arith.constant 32 : index
    %37 = vector.load %arg13[%c0_47, %c32] : memref<256x288xf32, #tpu.memory_space<vmem>>, vector<256x32xf32>
    tpu.vector_store %arg13[%c0_47, %c32], %36 {strides = array<i32>} : memref<256x288xf32, #tpu.memory_space<vmem>>, vector<256x32xf32>,
    %c0_48 = arith.constant 0 : index
    %c0_49 = arith.constant 0 : index
    %c2 = arith.constant 2 : index
    %c0_50 = arith.constant 0 : index
    %38 = vector.load %arg12[%c0_48, %c0_49, %c2, %c0_50] : memref<4x10x10x32xf32, #tpu.memory_space<vmem>>, vector<4x8x8x32xf32>
    %39 = vector.shape_cast %38 : vector<4x8x8x32xf32> to vector<256x32xf32>
    %c0_51 = arith.constant 0 : index
    %c64 = arith.constant 64 : index
    %40 = vector.load %arg13[%c0_51, %c64] : memref<256x288xf32, #tpu.memory_space<vmem>>, vector<256x32xf32>
    tpu.vector_store %arg13[%c0_51, %c64], %39 {strides = array<i32>} : memref<256x288xf32, #tpu.memory_space<vmem>>, vector<256x32xf32>,
    %c0_52 = arith.constant 0 : index
    %c1_53 = arith.constant 1 : index
    %c0_54 = arith.constant 0 : index
    %c0_55 = arith.constant 0 : index
    %41 = vector.load %arg12[%c0_52, %c1_53, %c0_54, %c0_55] : memref<4x10x10x32xf32, #tpu.memory_space<vmem>>, vector<4x8x8x32xf32>
    %42 = vector.shape_cast %41 : vector<4x8x8x32xf32> to vector<256x32xf32>
    %c0_56 = arith.constant 0 : index
    %c96 = arith.constant 96 : index
    %43 = vector.load %arg13[%c0_56, %c96] : memref<256x288xf32, #tpu.memory_space<vmem>>, vector<256x32xf32>
    tpu.vector_store %arg13[%c0_56, %c96], %42 {strides = array<i32>} : memref<256x288xf32, #tpu.memory_space<vmem>>, vector<256x32xf32>,
    %c0_57 = arith.constant 0 : index
    %c1_58 = arith.constant 1 : index
    %c1_59 = arith.constant 1 : index
    %c0_60 = arith.constant 0 : index
    %44 = vector.load %arg12[%c0_57, %c1_58, %c1_59, %c0_60] : memref<4x10x10x32xf32, #tpu.memory_space<vmem>>, vector<4x8x8x32xf32>
    %45 = vector.shape_cast %44 : vector<4x8x8x32xf32> to vector<256x32xf32>
    %c0_61 = arith.constant 0 : index
    %c128 = arith.constant 128 : index
    %46 = vector.load %arg13[%c0_61, %c128] : memref<256x288xf32, #tpu.memory_space<vmem>>, vector<256x32xf32>
    tpu.vector_store %arg13[%c0_61, %c128], %45 {strides = array<i32>} : memref<256x288xf32, #tpu.memory_space<vmem>>, vector<256x32xf32>,
    %c0_62 = arith.constant 0 : index
    %c1_63 = arith.constant 1 : index
    %c2_64 = arith.constant 2 : index
    %c0_65 = arith.constant 0 : index
    %47 = vector.load %arg12[%c0_62, %c1_63, %c2_64, %c0_65] : memref<4x10x10x32xf32, #tpu.memory_space<vmem>>, vector<4x8x8x32xf32>
    %48 = vector.shape_cast %47 : vector<4x8x8x32xf32> to vector<256x32xf32>
    %c0_66 = arith.constant 0 : index
    %c160 = arith.constant 160 : index
    %49 = vector.load %arg13[%c0_66, %c160] : memref<256x288xf32, #tpu.memory_space<vmem>>, vector<256x32xf32>
    tpu.vector_store %arg13[%c0_66, %c160], %48 {strides = array<i32>} : memref<256x288xf32, #tpu.memory_space<vmem>>, vector<256x32xf32>,
    %c0_67 = arith.constant 0 : index
    %c2_68 = arith.constant 2 : index
    %c0_69 = arith.constant 0 : index
    %c0_70 = arith.constant 0 : index
    %50 = vector.load %arg12[%c0_67, %c2_68, %c0_69, %c0_70] : memref<4x10x10x32xf32, #tpu.memory_space<vmem>>, vector<4x8x8x32xf32>
    %51 = vector.shape_cast %50 : vector<4x8x8x32xf32> to vector<256x32xf32>
    %c0_71 = arith.constant 0 : index
    %c192 = arith.constant 192 : index
    %52 = vector.load %arg13[%c0_71, %c192] : memref<256x288xf32, #tpu.memory_space<vmem>>, vector<256x32xf32>
    tpu.vector_store %arg13[%c0_71, %c192], %51 {strides = array<i32>} : memref<256x288xf32, #tpu.memory_space<vmem>>, vector<256x32xf32>,
    %c0_72 = arith.constant 0 : index
    %c2_73 = arith.constant 2 : index
    %c1_74 = arith.constant 1 : index
    %c0_75 = arith.constant 0 : index
    %53 = vector.load %arg12[%c0_72, %c2_73, %c1_74, %c0_75] : memref<4x10x10x32xf32, #tpu.memory_space<vmem>>, vector<4x8x8x32xf32>
    %54 = vector.shape_cast %53 : vector<4x8x8x32xf32> to vector<256x32xf32>
    %c0_76 = arith.constant 0 : index
    %c224 = arith.constant 224 : index
    %55 = vector.load %arg13[%c0_76, %c224] : memref<256x288xf32, #tpu.memory_space<vmem>>, vector<256x32xf32>
    tpu.vector_store %arg13[%c0_76, %c224], %54 {strides = array<i32>} : memref<256x288xf32, #tpu.memory_space<vmem>>, vector<256x32xf32>,
    %c0_77 = arith.constant 0 : index
    %c2_78 = arith.constant 2 : index
    %c2_79 = arith.constant 2 : index
    %c0_80 = arith.constant 0 : index
    %56 = vector.load %arg12[%c0_77, %c2_78, %c2_79, %c0_80] : memref<4x10x10x32xf32, #tpu.memory_space<vmem>>, vector<4x8x8x32xf32>
    %57 = vector.shape_cast %56 : vector<4x8x8x32xf32> to vector<256x32xf32>
    %c0_81 = arith.constant 0 : index
    %c256 = arith.constant 256 : index
    %58 = vector.load %arg13[%c0_81, %c256] : memref<256x288xf32, #tpu.memory_space<vmem>>, vector<256x32xf32>
    tpu.vector_store %arg13[%c0_81, %c256], %57 {strides = array<i32>} : memref<256x288xf32, #tpu.memory_space<vmem>>, vector<256x32xf32>,
    %c0_82 = arith.constant 0 : index
    %c0_83 = arith.constant 0 : index
    %59 = vector.load %arg13[%c0_82, %c0_83] : memref<256x288xf32, #tpu.memory_space<vmem>>, vector<256x288xf32>
    %c0_84 = arith.constant 0 : index
    %c0_85 = arith.constant 0 : index
    %60 = vector.load %arg7[%c0_84, %c0_85] : memref<288x96xf32, #tpu.memory_space<vmem>>, vector<288x96xf32>
    %cst_86 = arith.constant dense<0.000000e+00> : vector<256x96xf32>
    %61 = tpu.matmul %59, %60, %cst_86 {dimension_numbers = #tpu.dot_dimension_numbers<[1], [0], [0], [1], [0, 0, 1, 1], [], []>} : vector<256x288xf32>, vector<288x96xf32>, vector<256x96xf32> -> vector<256x96xf32>
    %c0_87 = arith.constant 0 : index
    %c0_88 = arith.constant 0 : index
    %62 = vector.load %arg14[%c0_87, %c0_88] : memref<256x96xf32, #tpu.memory_space<vmem>>, vector<256x96xf32>
    tpu.vector_store %arg14[%c0_87, %c0_88], %61 {strides = array<i32>} : memref<256x96xf32, #tpu.memory_space<vmem>>, vector<256x96xf32>,
    %c0_89 = arith.constant 0 : index
    %c0_90 = arith.constant 0 : index
    %63 = vector.load %arg9[%c0_89, %c0_90] : memref<32x128xf32, #tpu.memory_space<vmem>>, vector<32x128xf32>
    %c0_91 = arith.constant 0 : index
    %c0_92 = arith.constant 0 : index
    %64 = vector.load %arg8[%c0_91, %c0_92] : memref<1x32xf32, #tpu.memory_space<vmem>>, vector<1x32xf32>
    %c0_93 = arith.constant 0 : index
    %c0_94 = arith.constant 0 : index
    %65 = vector.load %arg10[%c0_93, %c0_94] : memref<1x128xf32, #tpu.memory_space<vmem>>, vector<1x128xf32>
    %c0_i32_95 = arith.constant 0 : i32
    %c2_i32 = arith.constant 2 : i32
    %66 = arith.addi %c0_i32_95, %c2_i32 : i32
    %c1_i32 = arith.constant 1 : i32
    scf.for %arg15 = %c0_i32_95 to %66 step %c1_i32  : i32 {
      %c1_i32_97 = arith.constant 1 : i32
      %67 = arith.muli %arg15, %c1_i32_97 : i32
      %c0_i32_98 = arith.constant 0 : i32
      %68 = arith.addi %c0_i32_98, %67 : i32
      %c64_i32 = arith.constant 64 : i32
      %69 = arith.muli %68, %c64_i32 : i32
      %70 = tpu.assume_multiple %69, 64 : i32
      %c1_i32_99 = arith.constant 1 : i32
      %71 = arith.addi %68, %c1_i32_99 : i32
      %c64_i32_100 = arith.constant 64 : i32
      %72 = arith.muli %71, %c64_i32_100 : i32
      %73 = tpu.assume_multiple %72, 64 : i32
      %c2_i32_101 = arith.constant 2 : i32
      %74 = arith.addi %68, %c2_i32_101 : i32
      %c64_i32_102 = arith.constant 64 : i32
      %75 = arith.muli %74, %c64_i32_102 : i32
      %76 = tpu.assume_multiple %75, 64 : i32
      %77 = arith.index_cast %70 : i32 to index
      %c0_103 = arith.constant 0 : index
      %78 = vector.load %arg14[%77, %c0_103] : memref<256x96xf32, #tpu.memory_space<vmem>>, vector<64x32xf32>
      %79 = arith.index_cast %73 : i32 to index
      %c32_104 = arith.constant 32 : index
      %80 = vector.load %arg14[%79, %c32_104] : memref<256x96xf32, #tpu.memory_space<vmem>>, vector<64x32xf32>
      %81 = arith.addf %78, %80 : vector<64x32xf32>
      %82 = arith.index_cast %76 : i32 to index
      %c64_105 = arith.constant 64 : index
      %83 = vector.load %arg14[%82, %c64_105] : memref<256x96xf32, #tpu.memory_space<vmem>>, vector<64x32xf32>
      %84 = arith.addf %81, %83 : vector<64x32xf32>
      %85 = vector.broadcast %64 : vector<1x32xf32> to vector<64x32xf32>
      %86 = arith.addf %84, %85 : vector<64x32xf32>
      %cst_106 = arith.constant 0.000000e+00 : f32
      %87 = vector.broadcast %cst_106 : f32 to vector<64x32xf32>
      %88 = arith.maximumf %86, %87 : vector<64x32xf32>
      %cst_107 = arith.constant dense<0.000000e+00> : vector<64x128xf32>
      %89 = tpu.matmul %88, %63, %cst_107 {dimension_numbers = #tpu.dot_dimension_numbers<[1], [0], [0], [1], [0, 0, 1, 1], [], []>} : vector<64x32xf32>, vector<32x128xf32>, vector<64x128xf32> -> vector<64x128xf32>
      %90 = vector.broadcast %65 : vector<1x128xf32> to vector<64x128xf32>
      %91 = arith.addf %89, %90 : vector<64x128xf32>
      %c0_108 = arith.constant 0 : index
      %92 = arith.index_cast %68 : i32 to index
      %c0_109 = arith.constant 0 : index
      %c0_110 = arith.constant 0 : index
      %c0_111 = arith.constant 0 : index
      %93 = vector.load %arg2[%c0_108, %92, %c0_109, %c0_110, %c0_111] : memref<1x2x8x8x128xf32, #tpu.memory_space<vmem>>, vector<1x1x8x8x128xf32>
      %94 = vector.shape_cast %93 : vector<1x1x8x8x128xf32> to vector<8x8x128xf32>
      %95 = vector.shape_cast %94 : vector<8x8x128xf32> to vector<64x128xf32>
      %96 = arith.addf %91, %95 : vector<64x128xf32>
      %cst_112 = arith.constant 0.000000e+00 : f32
      %97 = vector.broadcast %cst_112 : f32 to vector<64x128xf32>
      %98 = arith.maximumf %96, %97 : vector<64x128xf32>
      %99 = vector.shape_cast %98 : vector<64x128xf32> to vector<8x8x128xf32>
      %c0_113 = arith.constant 0 : index
      %100 = arith.index_cast %68 : i32 to index
      %c0_114 = arith.constant 0 : index
      %c0_115 = arith.constant 0 : index
      %c0_116 = arith.constant 0 : index
      %101 = vector.load %arg11[%c0_113, %100, %c0_114, %c0_115, %c0_116] : memref<1x2x8x8x128xf32, #tpu.memory_space<vmem>>, vector<1x1x8x8x128xf32>
      %102 = vector.shape_cast %101 : vector<1x1x8x8x128xf32> to vector<8x8x128xf32>
      %103 = vector.shape_cast %99 : vector<8x8x128xf32> to vector<1x1x8x8x128xf32>
      tpu.vector_store %arg11[%c0_113, %100, %c0_114, %c0_115, %c0_116], %103 {strides = array<i32>} : memref<1x2x8x8x128xf32, #tpu.memory_space<vmem>>, vector<1x1x8x8x128xf32>,
    }
    %c2_i32_96 = arith.constant 2 : i32
    return
  }
  func.func @transform_0(%arg0: i32, %arg1: i32) -> (i32, i32, i32, i32, i32) {
    %c0_i32 = arith.constant 0 : i32
    %c0_i32_0 = arith.constant 0 : i32
    %c0_i32_1 = arith.constant 0 : i32
    %c0_i32_2 = arith.constant 0 : i32
    return %arg0, %arg1, %c0_i32, %c0_i32_0, %c0_i32_1 : i32, i32, i32, i32, i32
  }
  func.func @transform_1(%arg0: i32, %arg1: i32) -> (i32, i32, i32, i32, i32) {
    %c2_i32 = arith.constant 2 : i32
    %0 = arith.muli %arg1, %c2_i32 : i32
    %c1_i32 = arith.constant 1 : i32
    %1 = arith.subi %0, %c1_i32 : i32
    %c0_i32 = arith.constant 0 : i32
    %2 = arith.maxsi %1, %c0_i32 : i32
    %c0_i32_0 = arith.constant 0 : i32
    %c0_i32_1 = arith.constant 0 : i32
    %c0_i32_2 = arith.constant 0 : i32
    %c0_i32_3 = arith.constant 0 : i32
    return %arg0, %2, %c0_i32_0, %c0_i32_1, %c0_i32_2 : i32, i32, i32, i32, i32
  }
  func.func @transform_2(%arg0: i32, %arg1: i32) -> (i32, i32, i32, i32, i32) {
    %c2_i32 = arith.constant 2 : i32
    %0 = arith.muli %arg1, %c2_i32 : i32
    %c2_i32_0 = arith.constant 2 : i32
    %1 = arith.addi %0, %c2_i32_0 : i32
    %c7_i32 = arith.constant 7 : i32
    %2 = arith.minsi %1, %c7_i32 : i32
    %c0_i32 = arith.constant 0 : i32
    %c0_i32_1 = arith.constant 0 : i32
    %c0_i32_2 = arith.constant 0 : i32
    %c0_i32_3 = arith.constant 0 : i32
    return %arg0, %2, %c0_i32, %c0_i32_1, %c0_i32_2 : i32, i32, i32, i32, i32
  }
  func.func @transform_3(%arg0: i32, %arg1: i32) -> (i32, i32) {
    %c0_i32 = arith.constant 0 : i32
    %c0_i32_0 = arith.constant 0 : i32
    %c0_i32_1 = arith.constant 0 : i32
    return %c0_i32, %c0_i32_0 : i32, i32
  }
  func.func @transform_4(%arg0: i32, %arg1: i32) -> (i32, i32) {
    %c0_i32 = arith.constant 0 : i32
    %c0_i32_0 = arith.constant 0 : i32
    %c0_i32_1 = arith.constant 0 : i32
    return %c0_i32, %c0_i32_0 : i32, i32
  }
  func.func @transform_5(%arg0: i32, %arg1: i32) -> (i32, i32) {
    %c0_i32 = arith.constant 0 : i32
    %c0_i32_0 = arith.constant 0 : i32
    %c0_i32_1 = arith.constant 0 : i32
    return %c0_i32, %c0_i32_0 : i32, i32
  }
  func.func @transform_6(%arg0: i32, %arg1: i32) -> (i32, i32) {
    %c0_i32 = arith.constant 0 : i32
    %c0_i32_0 = arith.constant 0 : i32
    %c0_i32_1 = arith.constant 0 : i32
    return %c0_i32, %c0_i32_0 : i32, i32
  }
  func.func @transform_7(%arg0: i32, %arg1: i32) -> (i32, i32) {
    %c0_i32 = arith.constant 0 : i32
    %c0_i32_0 = arith.constant 0 : i32
    %c0_i32_1 = arith.constant 0 : i32
    return %c0_i32, %c0_i32_0 : i32, i32
  }
  func.func @transform_8(%arg0: i32, %arg1: i32) -> (i32, i32) {
    %c0_i32 = arith.constant 0 : i32
    %c0_i32_0 = arith.constant 0 : i32
    %c0_i32_1 = arith.constant 0 : i32
    return %c0_i32, %c0_i32_0 : i32, i32
  }
  func.func @transform_9(%arg0: i32, %arg1: i32) -> (i32, i32, i32, i32, i32) {
    %c0_i32 = arith.constant 0 : i32
    %c0_i32_0 = arith.constant 0 : i32
    %c0_i32_1 = arith.constant 0 : i32
    %c0_i32_2 = arith.constant 0 : i32
    return %arg0, %arg1, %c0_i32, %c0_i32_0, %c0_i32_1 : i32, i32, i32, i32, i32
  }
}

</mosaic_0001>

<llo_original>
// kernel: tpu_custom_call.1
$region0: #{tpu_custom_call.1}
  #allocation0 [shape = 'u32[]', space=smem, size = 0x4, offset = 0x4, fixed_abs, tag = 'smem constant byte address 0x4 - core index']
  #allocation1 [shape = 'u32[144,128]{1,0:T(1,128)}', space=vmem, size = 0x12000, scoped, tag = 'internal scratch']
  #allocation2 [shape = 'f32[4,10,10,32]{3,2,1,0:T(8,128)}', space=vmem, size = 0x50000, scoped, tag = 'scratch operand']
  #allocation3 [shape = 'f32[256,288]{1,0:T(8,128)}', space=vmem, size = 0x60000, scoped, tag = 'scratch operand']
  #allocation4 [shape = 'f32[256,96]{1,0:T(8,128)}', space=vmem, size = 0x20000, scoped, tag = 'scratch operand']
  %s0 = inlined_call_operand.hbm [shape: f32[2,8,8,8,128], index: 0, kind: input, shape index: {}]
  %s1 = inlined_call_operand.hbm [shape: f32[2,8,8,8,128], index: 1, kind: input, shape index: {}]
  %s2 = inlined_call_operand.hbm [shape: f32[2,8,8,8,128], index: 2, kind: input, shape index: {}]
  %s3 = inlined_call_operand.vmem [shape: f32[128,32], index: 3, kind: input, shape index: {}]
  %s4 = inlined_call_operand.vmem [shape: f32[1,32], index: 4, kind: input, shape index: {}]
  %s5 = inlined_call_operand.hbm [shape: f32[288,96], index: 5, kind: input, shape index: {}]
  %s6 = inlined_call_operand.vmem [shape: f32[1,32], index: 6, kind: input, shape index: {}]
  %s7 = inlined_call_operand.vmem [shape: f32[32,128], index: 7, kind: input, shape index: {}]
  %s8 = inlined_call_operand.vmem [shape: f32[1,128], index: 8, kind: input, shape index: {}]
  %s9 = inlined_call_operand.hbm [shape: f32[2,8,8,8,128], index: 9, kind: output, shape index: {}]
  %s10 = sld [smem:[#allocation0]]
  $region108: #{tpu_custom_call.1} parent=0
    _
  %s12 = ssub.s32 1, %s10
  %s13 = scalar_select 0, %s12, %s10
  $region1: #{tpu_custom_call.1} parent=0
    #allocation5 [shape = 'u8[131072]{0}', space=vmem, size = 0x20000, scoped, tag = 'input window, operand 0']
    #allocation6 [shape = 's32[2]{0}', space=sflag, size = 0x8, scoped, tag = 'scoped memory for tpu_custom_call.1']
    #allocation7 [shape = 's32[2]{0}', space=sflag, size = 0x8, scoped, tag = 'scoped memory for tpu_custom_call.1']
    #allocation8 [shape = 'u8[65536]{0}', space=vmem, size = 0x10000, scoped, tag = 'input window, operand 1']
    #allocation9 [shape = 's32[2]{0}', space=sflag, size = 0x8, scoped, tag = 'scoped memory for tpu_custom_call.1']
    #allocation10 [shape = 'u8[65536]{0}', space=vmem, size = 0x10000, scoped, tag = 'input window, operand 2']
    #allocation11 [shape = 'u8[147456]{0}', space=vmem, size = 0x24000, scoped, tag = 'input window, operand 5, single buffered']
    #allocation12 [shape = 's32[1]{0}', space=sflag, size = 0x4, scoped, tag = 'scoped memory for tpu_custom_call.1']
    #allocation13 [shape = 'u8[131072]{0}', space=vmem, size = 0x20000, scoped, tag = 'output window, operand 0']
    %14 = vsyncpa [#allocation6], 0
    %s15 = scalar_lea.sflag [#allocation6], 1
    %16 = vsyncpa %s15, 0
    %17 = vsyncpa [#allocation9], 0
    %s18 = scalar_lea.sflag [#allocation9], 1
    %19 = vsyncpa %s18, 0
    %20 = vsyncpa [#allocation12], 0
    %21 = vsyncpa [#allocation7], 0
    %s22 = scalar_lea.sflag [#allocation7], 1
    %23 = vsyncpa %s22, 0
    loop: start=0, step=1, limit=10
    $region2: #{tpu_custom_call.1} parent=1 // loop_pre_header
      _
    $region3: #{tpu_custom_call.1} parent=1 // loop_header
      %s25 = sphi 0, %s29
      %p26 = scmp.ge.s32.totalorder %s25, 10
      %s32 = sphi 0, %s44
      %s33 = sphi 0, %s40
      %s34 = sphi 0, %s32
      %s35 = sphi 0, %s33
      %s36 = sphi 0, %s34
      %s37 = sphi 0, %s35
      %s49 = sphi 0, %s51
      %s52 = sphi 0, %s49
      %s53 = sphi 0, %s52
      %s69 = sphi 0, %s53
      %s85 = sphi 0, %s87
      %s88 = sphi 0, %s85
      %s89 = sphi 0, %s88
      %s105 = sphi 0, %s89
      %s121 = sphi 0, %s123
      %s124 = sphi 0, %s121
      %s125 = sphi 0, %s124
      %s141 = sphi 0, %s125
      %s145 = sphi 0, %s145
      %s147 = sphi 0, %s145
      %s148 = sphi 0, %s147
      %s162 = sphi 0, %s148
      %s166 = sphi 0, %s166
      %s168 = sphi 0, %s166
      %s169 = sphi 0, %s168
      %s183 = sphi 0, %s169
      %s187 = sphi 0, %s187
      %s189 = sphi 0, %s187
      %s190 = sphi 0, %s189
      %s204 = sphi 0, %s190
      %s208 = sphi 0, %s208
      %s210 = sphi 0, %s208
      %s211 = sphi 0, %s210
      %s225 = sphi 0, %s211
      %s229 = sphi 0, %s229
      %s231 = sphi 0, %s229
      %s232 = sphi 0, %s231
      %s246 = sphi 0, %s232
      %s250 = sphi 0, %s250
      %s252 = sphi 0, %s250
      %s253 = sphi 0, %s252
      %s267 = sphi 0, %s253
      %s275 = sphi 0, %s277
      %s278 = sphi 0, %s275
      %s279 = sphi 0, %s278
      %s295 = sphi 0, %s279
    $region4: #{tpu_custom_call.1} parent=1 // loop_header_branch
      %28 = sbr.rel (%p26) target = $region8
    $region5: #{tpu_custom_call.1} parent=1 // loop_body
      %s30 = ssub.s32 %s25, 1
      %s31 = ssub.s32 %s25, 2
      %s38 = sadd.s32 1, %s33
      %p39 = scmp.ge.s32.totalorder %s38, 4
      %s40 = scalar_select %p39, 0, %s38
      %s41 = sadd.s32 1, %s32
      %s42 = scalar_select %p39, %s41, %s32
      %p43 = scmp.ge.s32.totalorder %s42, 2
      %s44 = scalar_select %p43, 0, %s42
      %s45 = ssub.s32 %s32, %s44
      %s46 = ssub.s32 %s33, %s40
      %s47 = sor.u32 %s45, %s46
      %p48 = scmp.eq.s32.totalorder %s47, 0
      %s50 = sadd.s32 %s49, 1
      %s51 = scalar_select %p48, %s49, %s50
      %p54 = pneg %p48
      %p55 = scmp.eq.s32.totalorder %s25, 7
      %p56 = por %p54, %p55
      %p57 = scmp.ne.s32.totalorder %s49, %s52
      %p58 = scmp.eq.s32.totalorder %s25, 0
      %p59 = por %p57, %p58
      %p60 = scmp.ne.s32.totalorder %s49, %s52
      %p61 = scmp.eq.s32.totalorder %s30, 7
      %p62 = por %p60, %p61
      %p63 = scmp.ne.s32.totalorder %s52, %s53
      %p64 = scmp.eq.s32.totalorder %s30, 0
      %p65 = por %p63, %p64
      %p66 = scmp.ne.s32.totalorder %s52, %s53
      %p67 = scmp.eq.s32.totalorder %s31, 7
      %p68 = por %p66, %p67
      %p70 = scmp.ne.s32.totalorder %s53, %s69
      %p71 = scmp.eq.s32.totalorder %s31, 0
      %p72 = por %p70, %p71
      %s73 = smul.u32 %s33, 2
      %s74 = ssub.s32 %s73, 1
      %p75 = scmp.gt.s32.totalorder %s74, 0
      %s76 = scalar_select %p75, %s74, 0
      %s77 = smul.u32 %s40, 2
      %s78 = ssub.s32 %s77, 1
      %p79 = scmp.gt.s32.totalorder %s78, 0
      %s80 = scalar_select %p79, %s78, 0
      %s81 = ssub.s32 %s32, %s44
      %s82 = ssub.s32 %s76, %s80
      %s83 = sor.u32 %s81, %s82
      %p84 = scmp.eq.s32.totalorder %s83, 0
      %s86 = sadd.s32 %s85, 1
      %s87 = scalar_select %p84, %s85, %s86
      %p90 = pneg %p84
      %p91 = scmp.eq.s32.totalorder %s25, 7
      %p92 = por %p90, %p91
      %p93 = scmp.ne.s32.totalorder %s85, %s88
      %p94 = scmp.eq.s32.totalorder %s25, 0
      %p95 = por %p93, %p94
      %p96 = scmp.ne.s32.totalorder %s85, %s88
      %p97 = scmp.eq.s32.totalorder %s30, 7
      %p98 = por %p96, %p97
      %p99 = scmp.ne.s32.totalorder %s88, %s89
      %p100 = scmp.eq.s32.totalorder %s30, 0
      %p101 = por %p99, %p100
      %p102 = scmp.ne.s32.totalorder %s88, %s89
      %p103 = scmp.eq.s32.totalorder %s31, 7
      %p104 = por %p102, %p103
      %p106 = scmp.ne.s32.totalorder %s89, %s105
      %p107 = scmp.eq.s32.totalorder %s31, 0
      %p108 = por %p106, %p107
      %s109 = smul.u32 %s33, 2
      %s110 = sadd.s32 %s109, 2
      %p111 = scmp.lt.s32.totalorder %s110, 7
      %s112 = scalar_select %p111, %s110, 7
      %s113 = smul.u32 %s40, 2
      %s114 = sadd.s32 %s113, 2
      %p115 = scmp.lt.s32.totalorder %s114, 7
      %s116 = scalar_select %p115, %s114, 7
      %s117 = ssub.s32 %s32, %s44
      %s118 = ssub.s32 %s112, %s116
      %s119 = sor.u32 %s117, %s118
      %p120 = scmp.eq.s32.totalorder %s119, 0
      %s122 = sadd.s32 %s121, 1
      %s123 = scalar_select %p120, %s121, %s122
      %p126 = pneg %p120
      %p127 = scmp.eq.s32.totalorder %s25, 7
      %p128 = por %p126, %p127
      %p129 = scmp.ne.s32.totalorder %s121, %s124
      %p130 = scmp.eq.s32.totalorder %s25, 0
      %p131 = por %p129, %p130
      %p132 = scmp.ne.s32.totalorder %s121, %s124
      %p133 = scmp.eq.s32.totalorder %s30, 7
      %p134 = por %p132, %p133
      %p135 = scmp.ne.s32.totalorder %s124, %s125
      %p136 = scmp.eq.s32.totalorder %s30, 0
      %p137 = por %p135, %p136
      %p138 = scmp.ne.s32.totalorder %s124, %s125
      %p139 = scmp.eq.s32.totalorder %s31, 7
      %p140 = por %p138, %p139
      %p142 = scmp.ne.s32.totalorder %s125, %s141
      %p143 = scmp.eq.s32.totalorder %s31, 0
      %p144 = por %p142, %p143
      %s146 = sadd.s32 %s145, 1
      %p149 = scmp.eq.s32.totalorder %s25, 7
      %p150 = scmp.ne.s32.totalorder %s145, %s147
      %p151 = scmp.eq.s32.totalorder %s25, 0
      %p152 = por %p150, %p151
      %p153 = scmp.ne.s32.totalorder %s145, %s147
      %p154 = scmp.eq.s32.totalorder %s30, 7
      %p155 = por %p153, %p154
      %p156 = scmp.ne.s32.totalorder %s147, %s148
      %p157 = scmp.eq.s32.totalorder %s30, 0
      %p158 = por %p156, %p157
      %p159 = scmp.ne.s32.totalorder %s147, %s148
      %p160 = scmp.eq.s32.totalorder %s31, 7
      %p161 = por %p159, %p160
      %p163 = scmp.ne.s32.totalorder %s148, %s162
      %p164 = scmp.eq.s32.totalorder %s31, 0
      %p165 = por %p163, %p164
      %s167 = sadd.s32 %s166, 1
      %p170 = scmp.eq.s32.totalorder %s25, 7
      %p171 = scmp.ne.s32.totalorder %s166, %s168
      %p172 = scmp.eq.s32.totalorder %s25, 0
      %p173 = por %p171, %p172
      %p174 = scmp.ne.s32.totalorder %s166, %s168
      %p175 = scmp.eq.s32.totalorder %s30, 7
      %p176 = por %p174, %p175
      %p177 = scmp.ne.s32.totalorder %s168, %s169
      %p178 = scmp.eq.s32.totalorder %s30, 0
      %p179 = por %p177, %p178
      %p180 = scmp.ne.s32.totalorder %s168, %s169
      %p181 = scmp.eq.s32.totalorder %s31, 7
      %p182 = por %p180, %p181
      %p184 = scmp.ne.s32.totalorder %s169, %s183
      %p185 = scmp.eq.s32.totalorder %s31, 0
      %p186 = por %p184, %p185
      %s188 = sadd.s32 %s187, 1
      %p191 = scmp.eq.s32.totalorder %s25, 7
      %p192 = scmp.ne.s32.totalorder %s187, %s189
      %p193 = scmp.eq.s32.totalorder %s25, 0
      %p194 = por %p192, %p193
      %p195 = scmp.ne.s32.totalorder %s187, %s189
      %p196 = scmp.eq.s32.totalorder %s30, 7
      %p197 = por %p195, %p196
      %p198 = scmp.ne.s32.totalorder %s189, %s190
      %p199 = scmp.eq.s32.totalorder %s30, 0
      %p200 = por %p198, %p199
      %p201 = scmp.ne.s32.totalorder %s189, %s190
      %p202 = scmp.eq.s32.totalorder %s31, 7
      %p203 = por %p201, %p202
      %p205 = scmp.ne.s32.totalorder %s190, %s204
      %p206 = scmp.eq.s32.totalorder %s31, 0
      %p207 = por %p205, %p206
      %s209 = sadd.s32 %s208, 1
      %p212 = scmp.eq.s32.totalorder %s25, 7
      %p213 = scmp.ne.s32.totalorder %s208, %s210
      %p214 = scmp.eq.s32.totalorder %s25, 0
      %p215 = por %p213, %p214
      %p216 = scmp.ne.s32.totalorder %s208, %s210
      %p217 = scmp.eq.s32.totalorder %s30, 7
      %p218 = por %p216, %p217
      %p219 = scmp.ne.s32.totalorder %s210, %s211
      %p220 = scmp.eq.s32.totalorder %s30, 0
      %p221 = por %p219, %p220
      %p222 = scmp.ne.s32.totalorder %s210, %s211
      %p223 = scmp.eq.s32.totalorder %s31, 7
      %p224 = por %p222, %p223
      %p226 = scmp.ne.s32.totalorder %s211, %s225
      %p227 = scmp.eq.s32.totalorder %s31, 0
      %p228 = por %p226, %p227
      %s230 = sadd.s32 %s229, 1
      %p233 = scmp.eq.s32.totalorder %s25, 7
      %p234 = scmp.ne.s32.totalorder %s229, %s231
      %p235 = scmp.eq.s32.totalorder %s25, 0
      %p236 = por %p234, %p235
      %p237 = scmp.ne.s32.totalorder %s229, %s231
      %p238 = scmp.eq.s32.totalorder %s30, 7
      %p239 = por %p237, %p238
      %p240 = scmp.ne.s32.totalorder %s231, %s232
      %p241 = scmp.eq.s32.totalorder %s30, 0
      %p242 = por %p240, %p241
      %p243 = scmp.ne.s32.totalorder %s231, %s232
      %p244 = scmp.eq.s32.totalorder %s31, 7
      %p245 = por %p243, %p244
      %p247 = scmp.ne.s32.totalorder %s232, %s246
      %p248 = scmp.eq.s32.totalorder %s31, 0
      %p249 = por %p247, %p248
      %s251 = sadd.s32 %s250, 1
      %p254 = scmp.eq.s32.totalorder %s25, 7
      %p255 = scmp.ne.s32.totalorder %s250, %s252
      %p256 = scmp.eq.s32.totalorder %s25, 0
      %p257 = por %p255, %p256
      %p258 = scmp.ne.s32.totalorder %s250, %s252
      %p259 = scmp.eq.s32.totalorder %s30, 7
      %p260 = por %p258, %p259
      %p261 = scmp.ne.s32.totalorder %s252, %s253
      %p262 = scmp.eq.s32.totalorder %s30, 0
      %p263 = por %p261, %p262
      %p264 = scmp.ne.s32.totalorder %s252, %s253
      %p265 = scmp.eq.s32.totalorder %s31, 7
      %p266 = por %p264, %p265
      %p268 = scmp.ne.s32.totalorder %s253, %s267
      %p269 = scmp.eq.s32.totalorder %s31, 0
      %p270 = por %p268, %p269
      %s271 = ssub.s32 %s32, %s44
      %s272 = ssub.s32 %s33, %s40
      %s273 = sor.u32 %s271, %s272
      %p274 = scmp.eq.s32.totalorder %s273, 0
      %s276 = sadd.s32 %s275, 1
      %s277 = scalar_select %p274, %s275, %s276
      %p280 = pneg %p274
      %p281 = scmp.eq.s32.totalorder %s25, 7
      %p282 = por %p280, %p281
      %p283 = scmp.ne.s32.totalorder %s275, %s278
      %p284 = scmp.eq.s32.totalorder %s25, 0
      %p285 = por %p283, %p284
      %p286 = scmp.ne.s32.totalorder %s275, %s278
      %p287 = scmp.eq.s32.totalorder %s30, 7
      %p288 = por %p286, %p287
      %p289 = scmp.ne.s32.totalorder %s278, %s279
      %p290 = scmp.eq.s32.totalorder %s30, 0
      %p291 = por %p289, %p290
      %p292 = scmp.ne.s32.totalorder %s278, %s279
      %p293 = scmp.eq.s32.totalorder %s31, 7
      %p294 = por %p292, %p293
      %p296 = scmp.ne.s32.totalorder %s279, %s295
      %p297 = scmp.eq.s32.totalorder %s31, 0
      %p298 = por %p296, %p297
      %p299 = scmp.le.s32.totalorder 1, %s25
      %p300 = scmp.lt.s32.totalorder %s25, 9
      %p301 = pnand %p299, %p300
      %p302 = pneg %p301
      // Predicated region
      $region9: #{tpu_custom_call.1} parent=5 // pred_check
        _
      $region10: #{tpu_custom_call.1} parent=5 // pred_check_branch
        %304 = sbr.rel (%p301) target = $region12
      $region11: #{tpu_custom_call.1} parent=5 // pred_region
        %s305 = ssub.s32 %s25, 1
        // Predicated region
        $region13: #{tpu_custom_call.1} parent=11 // pred_check
          %p306 = pneg %p158
        $region14: #{tpu_custom_call.1} parent=11 // pred_check_branch
          %308 = sbr.rel (%p306) target = $region16
        $region15: #{tpu_custom_call.1} parent=11 // pred_region
          _
        $region16: #{tpu_custom_call.1} parent=11 // pred_fallthru
          _
        // Predicated region
        $region17: #{tpu_custom_call.1} parent=11 // pred_check
          %p309 = pneg %p179
        $region18: #{tpu_custom_call.1} parent=11 // pred_check_branch
          %311 = sbr.rel (%p309) target = $region20
        $region19: #{tpu_custom_call.1} parent=11 // pred_region
          _
        $region20: #{tpu_custom_call.1} parent=11 // pred_fallthru
          _
        // Predicated region
        $region21: #{tpu_custom_call.1} parent=11 // pred_check
          %p312 = pneg %p200
        $region22: #{tpu_custom_call.1} parent=11 // pred_check_branch
          %314 = sbr.rel (%p312) target = $region24
        $region23: #{tpu_custom_call.1} parent=11 // pred_region
          %s316 = ssub.s32 4608, 4608
          %317 = vsyncadd [#allocation12], %s316
          %s318 = sshll.u32 [#allocation11], 4
          %s319 = int_to_ptr.vmem [resolvable:$true] %s318
          %324 = dma.hbm_to_vmem [thread:$0]  %s5, 4608, %s319, [#allocation12], 128, 128, 8
        $region24: #{tpu_custom_call.1} parent=11 // pred_fallthru
          _
        // Predicated region
        $region25: #{tpu_custom_call.1} parent=11 // pred_check
          %p325 = pneg %p221
        $region26: #{tpu_custom_call.1} parent=11 // pred_check_branch
          %327 = sbr.rel (%p325) target = $region28
        $region27: #{tpu_custom_call.1} parent=11 // pred_region
          _
        $region28: #{tpu_custom_call.1} parent=11 // pred_fallthru
          _
        // Predicated region
        $region29: #{tpu_custom_call.1} parent=11 // pred_check
          %p328 = pneg %p242
        $region30: #{tpu_custom_call.1} parent=11 // pred_check_branch
          %330 = sbr.rel (%p328) target = $region32
        $region31: #{tpu_custom_call.1} parent=11 // pred_region
          _
        $region32: #{tpu_custom_call.1} parent=11 // pred_fallthru
          _
        // Predicated region
        $region33: #{tpu_custom_call.1} parent=11 // pred_check
          %p331 = pneg %p263
        $region34: #{tpu_custom_call.1} parent=11 // pred_check_branch
          %333 = sbr.rel (%p331) target = $region36
        $region35: #{tpu_custom_call.1} parent=11 // pred_region
          _
        $region36: #{tpu_custom_call.1} parent=11 // pred_fallthru
          _
      $region12: #{tpu_custom_call.1} parent=5 // pred_fallthru
        _
      %p334 = scmp.lt.s32.totalorder %s25, 8
      // Predicated region
      $region37: #{tpu_custom_call.1} parent=5 // pred_check
        %p335 = pneg %p334
      $region38: #{tpu_custom_call.1} parent=5 // pred_check_branch
        %337 = sbr.rel (%p335) target = $region40
      $region39: #{tpu_custom_call.1} parent=5 // pred_region
        // Predicated region
        $region41: #{tpu_custom_call.1} parent=39 // pred_check
          %p338 = pneg %p59
        $region42: #{tpu_custom_call.1} parent=39 // pred_check_branch
          %340 = sbr.rel (%p338) target = $region44
        $region43: #{tpu_custom_call.1} parent=39 // pred_region
          %s341 = sand.u32 %s49, 1
          %s342 = scalar_lea.sflag [#allocation6], %s341
          %s343 = sand.u32 %s49, 1
          %s344 = smul.addr %s343, 128
          %s345 = scalar_lea.vmem [#allocation5], %s344
          %s346 = smul.u32 2, %s33
          %s348 = ssub.s32 2048, 2048
          %349 = vsyncadd %s342, %s348
          %s350 = smul.addr %s346, 8
          %s351 = smul.addr %s32, 64
          %s352 = sadd.s32 %s350, %s351
          %s353 = smul.addr %s352, 128
          %s354 = scalar_lea.hbm %s0, %s353
          %s355 = sshll.u32 %s345, 4
          %s356 = int_to_ptr.vmem [resolvable:$true] %s355
          %361 = dma.hbm_to_vmem [thread:$0]  %s354, 2048, %s356, %s342, 128, 128, 8
        $region44: #{tpu_custom_call.1} parent=39 // pred_fallthru
          _
        // Predicated region
        $region45: #{tpu_custom_call.1} parent=39 // pred_check
          %p362 = pneg %p95
        $region46: #{tpu_custom_call.1} parent=39 // pred_check_branch
          %364 = sbr.rel (%p362) target = $region48
        $region47: #{tpu_custom_call.1} parent=39 // pred_region
          %s365 = sand.u32 %s25, 1
          %s366 = scalar_lea.sflag [#allocation9], %s365
          %s367 = sand.u32 %s85, 1
          %s368 = smul.addr %s367, 64
          %s369 = scalar_lea.vmem [#allocation8], %s368
          %s370 = smul.u32 %s33, 2
          %s371 = ssub.s32 %s370, 1
          %p372 = scmp.gt.s32.totalorder %s371, 0
          %s373 = scalar_select %p372, %s371, 0
          %s375 = ssub.s32 1024, 1024
          %376 = vsyncadd %s366, %s375
          %s377 = smul.addr %s373, 8
          %s378 = smul.addr %s32, 64
          %s379 = sadd.s32 %s377, %s378
          %s380 = smul.addr %s379, 128
          %s381 = scalar_lea.hbm %s1, %s380
          %s382 = sshll.u32 %s369, 4
          %s383 = int_to_ptr.vmem [resolvable:$true] %s382
          %388 = dma.hbm_to_vmem [thread:$0]  %s381, 1024, %s383, %s366, 128, 128, 8
        $region48: #{tpu_custom_call.1} parent=39 // pred_fallthru
          _
        // Predicated region
        $region49: #{tpu_custom_call.1} parent=39 // pred_check
          %p389 = pneg %p131
        $region50: #{tpu_custom_call.1} parent=39 // pred_check_branch
          %391 = sbr.rel (%p389) target = $region52
        $region51: #{tpu_custom_call.1} parent=39 // pred_region
          %s392 = sand.u32 %s25, 1
          %s393 = scalar_lea.sflag [#allocation9], %s392
          %s394 = sand.u32 %s121, 1
          %s395 = smul.addr %s394, 64
          %s396 = scalar_lea.vmem [#allocation10], %s395
          %s397 = smul.u32 %s33, 2
          %s398 = sadd.s32 %s397, 2
          %p399 = scmp.lt.s32.totalorder %s398, 7
          %s400 = scalar_select %p399, %s398, 7
          %s402 = ssub.s32 1024, 1024
          %403 = vsyncadd %s393, %s402
          %s404 = smul.addr %s400, 8
          %s405 = smul.addr %s32, 64
          %s406 = sadd.s32 %s404, %s405
          %s407 = smul.addr %s406, 128
          %s408 = scalar_lea.hbm %s2, %s407
          %s409 = sshll.u32 %s396, 4
          %s410 = int_to_ptr.vmem [resolvable:$true] %s409
          %415 = dma.hbm_to_vmem [thread:$0]  %s408, 1024, %s410, %s393, 128, 128, 8
        $region52: #{tpu_custom_call.1} parent=39 // pred_fallthru
          _
      $region40: #{tpu_custom_call.1} parent=5 // pred_fallthru
        _
      %p416 = scmp.le.s32.totalorder 1, %s25
      %p417 = scmp.lt.s32.totalorder %s25, 9
      %p418 = pnand %p416, %p417
      %p419 = pneg %p418
      // Predicated region
      $region53: #{tpu_custom_call.1} parent=5 // pred_check
        _
      $region54: #{tpu_custom_call.1} parent=5 // pred_check_branch
        %421 = sbr.rel (%p418) target = $region56
      $region55: #{tpu_custom_call.1} parent=5 // pred_region
        %s422 = ssub.s32 %s25, 1
        %s423 = sand.u32 %s52, 1
        %s424 = scalar_lea.sflag [#allocation6], %s423
        %s425 = sand.u32 %s52, 1
        %s426 = smul.addr %s425, 128
        %s427 = scalar_lea.vmem [#allocation5], %s426
        // Predicated region
        $region57: #{tpu_custom_call.1} parent=55 // pred_check
          %p428 = pneg %p65
        $region58: #{tpu_custom_call.1} parent=55 // pred_check_branch
          %430 = sbr.rel (%p428) target = $region60
        $region59: #{tpu_custom_call.1} parent=55 // pred_region
          %431 = dma.done %s424, 2048
        $region60: #{tpu_custom_call.1} parent=55 // pred_fallthru
          _
        %s432 = sand.u32 %s30, 1
        %s433 = scalar_lea.sflag [#allocation9], %s432
        %s434 = sand.u32 %s88, 1
        %s435 = smul.addr %s434, 64
        %s436 = scalar_lea.vmem [#allocation8], %s435
        // Predicated region
        $region61: #{tpu_custom_call.1} parent=55 // pred_check
          %p437 = pneg %p101
        $region62: #{tpu_custom_call.1} parent=55 // pred_check_branch
          %439 = sbr.rel (%p437) target = $region64
        $region63: #{tpu_custom_call.1} parent=55 // pred_region
          %440 = dma.done %s433, 1024
        $region64: #{tpu_custom_call.1} parent=55 // pred_fallthru
          _
        %s441 = sand.u32 %s30, 1
        %s442 = scalar_lea.sflag [#allocation9], %s441
        %s443 = sand.u32 %s124, 1
        %s444 = smul.addr %s443, 64
        %s445 = scalar_lea.vmem [#allocation10], %s444
        // Predicated region
        $region65: #{tpu_custom_call.1} parent=55 // pred_check
          %p446 = pneg %p137
        $region66: #{tpu_custom_call.1} parent=55 // pred_check_branch
          %448 = sbr.rel (%p446) target = $region68
        $region67: #{tpu_custom_call.1} parent=55 // pred_region
          %449 = dma.done %s442, 1024
        $region68: #{tpu_custom_call.1} parent=55 // pred_fallthru
          _
        // Predicated region
        $region69: #{tpu_custom_call.1} parent=55 // pred_check
          %p450 = pneg %p200
        $region70: #{tpu_custom_call.1} parent=55 // pred_check_branch
          %452 = sbr.rel (%p450) target = $region72
        $region71: #{tpu_custom_call.1} parent=55 // pred_region
          %453 = dma.done [#allocation12], 4608
        $region72: #{tpu_custom_call.1} parent=55 // pred_fallthru
          _
        %s454 = sand.u32 %s52, 1
        %s455 = scalar_lea.sflag [#allocation6], %s454
        %s456 = sand.u32 %s52, 1
        %s457 = smul.addr %s456, 128
        %s458 = scalar_lea.vmem [#allocation5], %s457
        %p459 = pneg %p65
        %p460 = pneg %p62
        %s461 = sand.u32 %s30, 1
        %s462 = scalar_lea.sflag [#allocation9], %s461
        %s463 = sand.u32 %s88, 1
        %s464 = smul.addr %s463, 64
        %s465 = scalar_lea.vmem [#allocation8], %s464
        %p466 = pneg %p101
        %p467 = pneg %p98
        %s468 = sand.u32 %s30, 1
        %s469 = scalar_lea.sflag [#allocation9], %s468
        %s470 = sand.u32 %s124, 1
        %s471 = smul.addr %s470, 64
        %s472 = scalar_lea.vmem [#allocation10], %s471
        %p473 = pneg %p137
        %p474 = pneg %p134
        %p475 = pneg %p158
        %p476 = pneg %p155
        %p477 = pneg %p179
        %p478 = pneg %p176
        %p479 = pneg %p200
        %p480 = pneg %p197
        %p481 = pneg %p221
        %p482 = pneg %p218
        %p483 = pneg %p242
        %p484 = pneg %p239
        %p485 = pneg %p263
        %p486 = pneg %p260
        %p487 = pneg %p291
        %p488 = pneg %p288
        %s489 = sand.u32 %s278, 1
        %s490 = scalar_lea.sflag [#allocation7], %s489
        %s491 = sand.u32 %s278, 1
        %s492 = smul.addr %s491, 128
        %s493 = scalar_lea.vmem [#allocation13], %s492
        %s494 = smul.u32 2, %s35
        %s495 = smul.u32 %s35, 2
        %s496 = ssub.s32 %s495, 1
        %p497 = scmp.gt.s32.totalorder %s496, 0
        %s498 = scalar_select %p497, %s496, 0
        %s499 = smul.u32 %s35, 2
        %s500 = sadd.s32 %s499, 2
        %p501 = scmp.lt.s32.totalorder %s500, 7
        %s502 = scalar_select %p501, %s500, 7
        %s503 = smul.u32 2, %s35
        %vm504 = vcmask 261120
        %505 = vst.msk [vmem:[#allocation2] sm:$0xff] %vm504, 0.0
        %vm506 = vcmask 254976
        %507 = vst.msk [vmem:[#allocation2 + $0x8] sm:$0x3] %vm506, 0.0
        %508 = vst.msk [vmem:[#allocation2 + $0xa0] sm:$0xff] %vm504, 0.0
        %509 = vst.msk [vmem:[#allocation2 + $0xa8] sm:$0x3] %vm506, 0.0
        %510 = vst.msk [vmem:[#allocation2 + $0x140] sm:$0xff] %vm504, 0.0
        %511 = vst.msk [vmem:[#allocation2 + $0x148] sm:$0x3] %vm506, 0.0
        %512 = vst.msk [vmem:[#allocation2 + $0x1e0] sm:$0xff] %vm504, 0.0
        %513 = vst.msk [vmem:[#allocation2 + $0x1e8] sm:$0x3] %vm506, 0.0
        %s514 = scalar_lea.vmem [#allocation2], 144
        %515 = vst.msk [vmem:[%s514] sm:$0xff] %vm504, 0.0
        %516 = vst.msk [vmem:[%s514 + $0x8] sm:$0x3] %vm506, 0.0
        %517 = vst.msk [vmem:[%s514 + $0xa0] sm:$0xff] %vm504, 0.0
        %518 = vst.msk [vmem:[%s514 + $0xa8] sm:$0x3] %vm506, 0.0
        %519 = vst.msk [vmem:[%s514 + $0x140] sm:$0xff] %vm504, 0.0
        %520 = vst.msk [vmem:[%s514 + $0x148] sm:$0x3] %vm506, 0.0
        %521 = vst.msk [vmem:[%s514 + $0x1e0] sm:$0xff] %vm504, 0.0
        %522 = vst.msk [vmem:[%s514 + $0x1e8] sm:$0x3] %vm506, 0.0
        %vm523 = vcmask 253952
        %524 = vst.msk [vmem:[#allocation2] sm:$0x1] %vm523, 0.0
        %525 = vst.msk [vmem:[#allocation2 + $0x10] sm:$0x1] %vm523, 0.0
        %526 = vst.msk [vmem:[#allocation2 + $0x20] sm:$0x1] %vm523, 0.0
        %527 = vst.msk [vmem:[#allocation2 + $0x30] sm:$0x1] %vm523, 0.0
        %528 = vst.msk [vmem:[#allocation2 + $0x40] sm:$0x1] %vm523, 0.0
        %529 = vst.msk [vmem:[#allocation2 + $0x50] sm:$0x1] %vm523, 0.0
        %530 = vst.msk [vmem:[#allocation2 + $0x60] sm:$0x1] %vm523, 0.0
        %531 = vst.msk [vmem:[#allocation2 + $0x70] sm:$0x1] %vm523, 0.0
        %532 = vst.msk [vmem:[#allocation2 + $0x80] sm:$0x1] %vm523, 0.0
        %533 = vst.msk [vmem:[#allocation2 + $0x90] sm:$0x1] %vm523, 0.0
        %534 = vst.msk [vmem:[#allocation2 + $0xa0] sm:$0x1] %vm523, 0.0
        %535 = vst.msk [vmem:[#allocation2 + $0xb0] sm:$0x1] %vm523, 0.0
        %536 = vst.msk [vmem:[#allocation2 + $0xc0] sm:$0x1] %vm523, 0.0
        %537 = vst.msk [vmem:[#allocation2 + $0xd0] sm:$0x1] %vm523, 0.0
        %538 = vst.msk [vmem:[#allocation2 + $0xe0] sm:$0x1] %vm523, 0.0
        %539 = vst.msk [vmem:[#allocation2 + $0xf0] sm:$0x1] %vm523, 0.0
        %540 = vst.msk [vmem:[#allocation2 + $0x100] sm:$0x1] %vm523, 0.0
        %541 = vst.msk [vmem:[#allocation2 + $0x110] sm:$0x1] %vm523, 0.0
        %542 = vst.msk [vmem:[#allocation2 + $0x120] sm:$0x1] %vm523, 0.0
        %543 = vst.msk [vmem:[#allocation2 + $0x130] sm:$0x1] %vm523, 0.0
        %544 = vst.msk [vmem:[#allocation2 + $0x140] sm:$0x1] %vm523, 0.0
        %545 = vst.msk [vmem:[#allocation2 + $0x150] sm:$0x1] %vm523, 0.0
        %546 = vst.msk [vmem:[#allocation2 + $0x160] sm:$0x1] %vm523, 0.0
        %547 = vst.msk [vmem:[#allocation2 + $0x170] sm:$0x1] %vm523, 0.0
        %548 = vst.msk [vmem:[#allocation2 + $0x180] sm:$0x1] %vm523, 0.0
        %549 = vst.msk [vmem:[#allocation2 + $0x190] sm:$0x1] %vm523, 0.0
        %550 = vst.msk [vmem:[#allocation2 + $0x1a0] sm:$0x1] %vm523, 0.0
        %551 = vst.msk [vmem:[#allocation2 + $0x1b0] sm:$0x1] %vm523, 0.0
        %552 = vst.msk [vmem:[#allocation2 + $0x1c0] sm:$0x1] %vm523, 0.0
        %553 = vst.msk [vmem:[#allocation2 + $0x1d0] sm:$0x1] %vm523, 0.0
        %554 = vst.msk [vmem:[#allocation2 + $0x1e0] sm:$0x1] %vm523, 0.0
        %555 = vst.msk [vmem:[#allocation2 + $0x1f0] sm:$0x1] %vm523, 0.0
        %556 = vst.msk [vmem:[#allocation2 + $0x200] sm:$0x1] %vm523, 0.0
        %557 = vst.msk [vmem:[#allocation2 + $0x210] sm:$0x1] %vm523, 0.0
        %558 = vst.msk [vmem:[#allocation2 + $0x220] sm:$0x1] %vm523, 0.0
        %559 = vst.msk [vmem:[#allocation2 + $0x230] sm:$0x1] %vm523, 0.0
        %560 = vst.msk [vmem:[#allocation2 + $0x240] sm:$0x1] %vm523, 0.0
        %561 = vst.msk [vmem:[#allocation2 + $0x250] sm:$0x1] %vm523, 0.0
        %562 = vst.msk [vmem:[#allocation2 + $0x260] sm:$0x1] %vm523, 0.0
        %563 = vst.msk [vmem:[#allocation2 + $0x270] sm:$0x1] %vm523, 0.0
        %564 = vst.msk [vmem:[#allocation2 + $0x9] sm:$0x1] %vm523, 0.0
        %565 = vst.msk [vmem:[#allocation2 + $0x19] sm:$0x1] %vm523, 0.0
        %566 = vst.msk [vmem:[#allocation2 + $0x29] sm:$0x1] %vm523, 0.0
        %567 = vst.msk [vmem:[#allocation2 + $0x39] sm:$0x1] %vm523, 0.0
        %568 = vst.msk [vmem:[#allocation2 + $0x49] sm:$0x1] %vm523, 0.0
        %569 = vst.msk [vmem:[#allocation2 + $0x59] sm:$0x1] %vm523, 0.0
        %570 = vst.msk [vmem:[#allocation2 + $0x69] sm:$0x1] %vm523, 0.0
        %571 = vst.msk [vmem:[#allocation2 + $0x79] sm:$0x1] %vm523, 0.0
        %572 = vst.msk [vmem:[#allocation2 + $0x89] sm:$0x1] %vm523, 0.0
        %573 = vst.msk [vmem:[#allocation2 + $0x99] sm:$0x1] %vm523, 0.0
        %574 = vst.msk [vmem:[#allocation2 + $0xa9] sm:$0x1] %vm523, 0.0
        %575 = vst.msk [vmem:[#allocation2 + $0xb9] sm:$0x1] %vm523, 0.0
        %576 = vst.msk [vmem:[#allocation2 + $0xc9] sm:$0x1] %vm523, 0.0
        %577 = vst.msk [vmem:[#allocation2 + $0xd9] sm:$0x1] %vm523, 0.0
        %578 = vst.msk [vmem:[#allocation2 + $0xe9] sm:$0x1] %vm523, 0.0
        %579 = vst.msk [vmem:[#allocation2 + $0xf9] sm:$0x1] %vm523, 0.0
        %580 = vst.msk [vmem:[#allocation2 + $0x109] sm:$0x1] %vm523, 0.0
        %581 = vst.msk [vmem:[#allocation2 + $0x119] sm:$0x1] %vm523, 0.0
        %582 = vst.msk [vmem:[#allocation2 + $0x129] sm:$0x1] %vm523, 0.0
        %583 = vst.msk [vmem:[#allocation2 + $0x139] sm:$0x1] %vm523, 0.0
        %584 = vst.msk [vmem:[#allocation2 + $0x149] sm:$0x1] %vm523, 0.0
        %585 = vst.msk [vmem:[#allocation2 + $0x159] sm:$0x1] %vm523, 0.0
        %586 = vst.msk [vmem:[#allocation2 + $0x169] sm:$0x1] %vm523, 0.0
        %587 = vst.msk [vmem:[#allocation2 + $0x179] sm:$0x1] %vm523, 0.0
        %588 = vst.msk [vmem:[#allocation2 + $0x189] sm:$0x1] %vm523, 0.0
        %589 = vst.msk [vmem:[#allocation2 + $0x199] sm:$0x1] %vm523, 0.0
        %590 = vst.msk [vmem:[#allocation2 + $0x1a9] sm:$0x1] %vm523, 0.0
        %591 = vst.msk [vmem:[#allocation2 + $0x1b9] sm:$0x1] %vm523, 0.0
        %592 = vst.msk [vmem:[#allocation2 + $0x1c9] sm:$0x1] %vm523, 0.0
        %593 = vst.msk [vmem:[#allocation2 + $0x1d9] sm:$0x1] %vm523, 0.0
        %594 = vst.msk [vmem:[#allocation2 + $0x1e9] sm:$0x1] %vm523, 0.0
        %595 = vst.msk [vmem:[#allocation2 + $0x1f9] sm:$0x1] %vm523, 0.0
        %596 = vst.msk [vmem:[#allocation2 + $0x209] sm:$0x1] %vm523, 0.0
        %597 = vst.msk [vmem:[#allocation2 + $0x219] sm:$0x1] %vm523, 0.0
        %598 = vst.msk [vmem:[#allocation2 + $0x229] sm:$0x1] %vm523, 0.0
        %599 = vst.msk [vmem:[#allocation2 + $0x239] sm:$0x1] %vm523, 0.0
        %600 = vst.msk [vmem:[#allocation2 + $0x249] sm:$0x1] %vm523, 0.0
        %601 = vst.msk [vmem:[#allocation2 + $0x259] sm:$0x1] %vm523, 0.0
        %602 = vst.msk [vmem:[#allocation2 + $0x269] sm:$0x1] %vm523, 0.0
        %603 = vst.msk [vmem:[#allocation2 + $0x279] sm:$0x1] %vm523, 0.0
        %v604 = vld [vmem:[%s3] sm:$0xff]
        %v605 = vld [vmem:[%s3 + $0x8] sm:$0xff]
        %v606 = vld [vmem:[%s3 + $0x10] sm:$0xff]
        %v607 = vld [vmem:[%s3 + $0x18] sm:$0xff]
        %v608 = vld [vmem:[%s3 + $0x20] sm:$0xff]
        %v609 = vld [vmem:[%s3 + $0x28] sm:$0xff]
        %v610 = vld [vmem:[%s3 + $0x30] sm:$0xff]
        %v611 = vld [vmem:[%s3 + $0x38] sm:$0xff]
        %v612 = vld [vmem:[%s3 + $0x40] sm:$0xff]
        %v613 = vld [vmem:[%s3 + $0x48] sm:$0xff]
        %v614 = vld [vmem:[%s3 + $0x50] sm:$0xff]
        %v615 = vld [vmem:[%s3 + $0x58] sm:$0xff]
        %v616 = vld [vmem:[%s3 + $0x60] sm:$0xff]
        %v617 = vld [vmem:[%s3 + $0x68] sm:$0xff]
        %v618 = vld [vmem:[%s3 + $0x70] sm:$0xff]
        %v619 = vld [vmem:[%s3 + $0x78] sm:$0xff]
        %v620 = vld [vmem:[%s4] sm:$0x1]
        %v621 = vld [vmem:[%s427] sm:$0xff]
        %v622 = vld [vmem:[%s427 + $0x8] sm:$0xff]
        %v623 = vld [vmem:[%s427 + $0x10] sm:$0xff]
        %v624 = vld [vmem:[%s427 + $0x18] sm:$0xff]
        %v625 = vld [vmem:[%s427 + $0x20] sm:$0xff]
        %v626 = vld [vmem:[%s427 + $0x28] sm:$0xff]
        %v627 = vld [vmem:[%s427 + $0x30] sm:$0xff]
        %v628 = vld [vmem:[%s427 + $0x38] sm:$0xff]
        %v629 = vld [vmem:[%s427 + $0x40] sm:$0xff]
        %v630 = vld [vmem:[%s427 + $0x48] sm:$0xff]
        %v631 = vld [vmem:[%s427 + $0x50] sm:$0xff]
        %v632 = vld [vmem:[%s427 + $0x58] sm:$0xff]
        %v633 = vld [vmem:[%s427 + $0x60] sm:$0xff]
        %v634 = vld [vmem:[%s427 + $0x68] sm:$0xff]
        %v635 = vld [vmem:[%s427 + $0x70] sm:$0xff]
        %v636 = vld [vmem:[%s427 + $0x78] sm:$0xff]
        %v638 = vlaneseq
        %v639 = vshrl.u32 %v638, 7
        %v640 = vsub.s32 0, %v639
        %v641 = vrot.slane %v620, %v640
        %643 = vmatprep.subr.mxu0 0.0
        %644 = vmatpush1.msra.mxu0 %v619
        %645 = vmatprep.subr.mxu0 0.0
        %646 = vmatpush1.msra.mxu0 %v618
        %647 = vmatprep.subr.mxu0 0.0
        %648 = vmatpush1.msra.mxu0 %v617
        %649 = vmatprep.subr.mxu0 0.0
        %650 = vmatpush1.msra.mxu0 %v616
        %651 = vmatprep.subr.mxu0 0.0
        %652 = vmatpush1.msra.mxu0 %v615
        %653 = vmatprep.subr.mxu0 0.0
        %654 = vmatpush1.msra.mxu0 %v614
        %655 = vmatprep.subr.mxu0 0.0
        %656 = vmatpush1.msra.mxu0 %v613
        %657 = vmatprep.subr.mxu0 0.0
        %658 = vmatpush1.msra.mxu0 %v612
        %659 = vmatprep.subr.mxu0 0.0
        %660 = vmatpush1.msra.mxu0 %v611
        %661 = vmatprep.subr.mxu0 0.0
        %662 = vmatpush1.msra.mxu0 %v610
        %663 = vmatprep.subr.mxu0 0.0
        %664 = vmatpush1.msra.mxu0 %v609
        %665 = vmatprep.subr.mxu0 0.0
        %666 = vmatpush1.msra.mxu0 %v608
        %667 = vmatprep.subr.mxu0 0.0
        %668 = vmatpush1.msra.mxu0 %v607
        %669 = vmatprep.subr.mxu0 0.0
        %670 = vmatpush1.msra.mxu0 %v606
        %671 = vmatprep.subr.mxu0 0.0
        %672 = vmatpush1.msra.mxu0 %v605
        %673 = vmatprep.subr.mxu0 0.0
        %674 = vmatpush1.msra.mxu0 %v604
        %675 = vmatprep.subr.mxu0 0.0
        %676 = vmatpush2.msra.mxu0 0.0
        %677 = vmatprep.subr.mxu0 0.0
        %678 = vmatpush2.msra.mxu0 0.0
        %679 = vmatprep.subr.mxu0 0.0
        %680 = vmatpush2.msra.mxu0 0.0
        %681 = vmatprep.subr.mxu0 0.0
        %682 = vmatpush2.msra.mxu0 0.0
        %683 = vmatprep.subr.mxu0 0.0
        %684 = vmatpush2.msra.mxu0 0.0
        %685 = vmatprep.subr.mxu0 0.0
        %686 = vmatpush2.msra.mxu0 0.0
        %687 = vmatprep.subr.mxu0 0.0
        %688 = vmatpush2.msra.mxu0 0.0
        %689 = vmatprep.subr.mxu0 0.0
        %690 = vmatpush2.msra.mxu0 0.0
        %691 = vmatprep.subr.mxu0 0.0
        %692 = vmatpush2.msra.mxu0 0.0
        %693 = vmatprep.subr.mxu0 0.0
        %694 = vmatpush2.msra.mxu0 0.0
        %695 = vmatprep.subr.mxu0 0.0
        %696 = vmatpush2.msra.mxu0 0.0
        %697 = vmatprep.subr.mxu0 0.0
        %698 = vmatpush2.msra.mxu0 0.0
        %699 = vmatprep.subr.mxu0 0.0
        %700 = vmatpush2.msra.mxu0 0.0
        %701 = vmatprep.subr.mxu0 0.0
        %702 = vmatpush2.msra.mxu0 0.0
        %703 = vmatprep.subr.mxu0 0.0
        %704 = vmatpush2.msra.mxu0 0.0
        %705 = vmatprep.subr.mxu0 0.0
        %706 = vmatpush2.msra.mxu0 0.0
        %707 = vmatprep.mubr.f32.mxu0 0.0
        %708 = vmatmul.mubr.f32.gmra.mxu0 %v621
        %v709 = vpop.f32.mrf.mxu0
        %v710 = vadd.f32 %v641, %v709
        %v711 = vpop.f32.mrf.mxu0
        %712 = vmatprep.mubr.f32.mxu0 0.0
        %713 = vmatmul.mubr.f32.gmra.mxu0 %v622
        %v714 = vpop.f32.mrf.mxu0
        %v715 = vadd.f32 %v641, %v714
        %v716 = vpop.f32.mrf.mxu0
        %717 = vmatprep.mubr.f32.mxu0 0.0
        %718 = vmatmul.mubr.f32.gmra.mxu0 %v623
        %v719 = vpop.f32.mrf.mxu0
        %v720 = vadd.f32 %v641, %v719
        %v721 = vpop.f32.mrf.mxu0
        %722 = vmatprep.mubr.f32.mxu0 0.0
        %723 = vmatmul.mubr.f32.gmra.mxu0 %v624
        %v724 = vpop.f32.mrf.mxu0
        %v725 = vadd.f32 %v641, %v724
        %v726 = vpop.f32.mrf.mxu0
        %727 = vmatprep.mubr.f32.mxu0 0.0
        %728 = vmatmul.mubr.f32.gmra.mxu0 %v625
        %v729 = vpop.f32.mrf.mxu0
        %v730 = vadd.f32 %v641, %v729
        %v731 = vpop.f32.mrf.mxu0
        %732 = vmatprep.mubr.f32.mxu0 0.0
        %733 = vmatmul.mubr.f32.gmra.mxu0 %v626
        %v734 = vpop.f32.mrf.mxu0
        %v735 = vadd.f32 %v641, %v734
        %v736 = vpop.f32.mrf.mxu0
        %737 = vmatprep.mubr.f32.mxu0 0.0
        %738 = vmatmul.mubr.f32.gmra.mxu0 %v627
        %v739 = vpop.f32.mrf.mxu0
        %v740 = vadd.f32 %v641, %v739
        %v741 = vpop.f32.mrf.mxu0
        %742 = vmatprep.mubr.f32.mxu0 0.0
        %743 = vmatmul.mubr.f32.gmra.mxu0 %v628
        %v744 = vpop.f32.mrf.mxu0
        %v745 = vadd.f32 %v641, %v744
        %v746 = vpop.f32.mrf.mxu0
        %747 = vmatprep.mubr.f32.mxu0 0.0
        %748 = vmatmul.mubr.f32.gmra.mxu0 %v629
        %v749 = vpop.f32.mrf.mxu0
        %v750 = vadd.f32 %v641, %v749
        %v751 = vpop.f32.mrf.mxu0
        %752 = vmatprep.mubr.f32.mxu0 0.0
        %753 = vmatmul.mubr.f32.gmra.mxu0 %v630
        %v754 = vpop.f32.mrf.mxu0
        %v755 = vadd.f32 %v641, %v754
        %v756 = vpop.f32.mrf.mxu0
        %757 = vmatprep.mubr.f32.mxu0 0.0
        %758 = vmatmul.mubr.f32.gmra.mxu0 %v631
        %v759 = vpop.f32.mrf.mxu0
        %v760 = vadd.f32 %v641, %v759
        %v761 = vpop.f32.mrf.mxu0
        %762 = vmatprep.mubr.f32.mxu0 0.0
        %763 = vmatmul.mubr.f32.gmra.mxu0 %v632
        %v764 = vpop.f32.mrf.mxu0
        %v765 = vadd.f32 %v641, %v764
        %v766 = vpop.f32.mrf.mxu0
        %767 = vmatprep.mubr.f32.mxu0 0.0
        %768 = vmatmul.mubr.f32.gmra.mxu0 %v633
        %v769 = vpop.f32.mrf.mxu0
        %v770 = vadd.f32 %v641, %v769
        %v771 = vpop.f32.mrf.mxu0
        %772 = vmatprep.mubr.f32.mxu0 0.0
        %773 = vmatmul.mubr.f32.gmra.mxu0 %v634
        %v774 = vpop.f32.mrf.mxu0
        %v775 = vadd.f32 %v641, %v774
        %v776 = vpop.f32.mrf.mxu0
        %777 = vmatprep.mubr.f32.mxu0 0.0
        %778 = vmatmul.mubr.f32.gmra.mxu0 %v635
        %v779 = vpop.f32.mrf.mxu0
        %v780 = vadd.f32 %v641, %v779
        %v781 = vpop.f32.mrf.mxu0
        %782 = vmatprep.mubr.f32.mxu0 0.0
        %783 = vmatmul.mubr.f32.gmra.mxu0 %v636
        %v784 = vpop.f32.mrf.mxu0
        %v785 = vadd.f32 %v641, %v784
        %v786 = vpop.f32.mrf.mxu0
        %787 = vdwg.mxu0
        %v788 = vmax.f32 %v710, 0.0
        %v789 = vmax.f32 %v715, 0.0
        %v790 = vmax.f32 %v720, 0.0
        %v791 = vmax.f32 %v725, 0.0
        %v792 = vmax.f32 %v730, 0.0
        %v793 = vmax.f32 %v735, 0.0
        %v794 = vmax.f32 %v740, 0.0
        %v795 = vmax.f32 %v745, 0.0
        %v796 = vmax.f32 %v750, 0.0
        %v797 = vmax.f32 %v755, 0.0
        %v798 = vmax.f32 %v760, 0.0
        %v799 = vmax.f32 %v765, 0.0
        %v800 = vmax.f32 %v770, 0.0
        %v801 = vmax.f32 %v775, 0.0
        %v802 = vmax.f32 %v780, 0.0
        %v803 = vmax.f32 %v785, 0.0
        %s804 = scalar_lea.vmem [#allocation2], 176
        %805 = vst.msk [vmem:[%s804 + $0x1] sm:$0xff] %vm504, %v788
        %806 = vst.msk [vmem:[%s804 + $0x11] sm:$0xff] %vm504, %v789
        %807 = vst.msk [vmem:[%s804 + $0x21] sm:$0xff] %vm504, %v790
        %808 = vst.msk [vmem:[%s804 + $0x31] sm:$0xff] %vm504, %v791
        %809 = vst.msk [vmem:[%s804 + $0x41] sm:$0xff] %vm504, %v792
        %810 = vst.msk [vmem:[%s804 + $0x51] sm:$0xff] %vm504, %v793
        %811 = vst.msk [vmem:[%s804 + $0x61] sm:$0xff] %vm504, %v794
        %812 = vst.msk [vmem:[%s804 + $0x71] sm:$0xff] %vm504, %v795
        %813 = vst.msk [vmem:[%s804 + $0xa1] sm:$0xff] %vm504, %v796
        %814 = vst.msk [vmem:[%s804 + $0xb1] sm:$0xff] %vm504, %v797
        %815 = vst.msk [vmem:[%s804 + $0xc1] sm:$0xff] %vm504, %v798
        %816 = vst.msk [vmem:[%s804 + $0xd1] sm:$0xff] %vm504, %v799
        %817 = vst.msk [vmem:[%s804 + $0xe1] sm:$0xff] %vm504, %v800
        %818 = vst.msk [vmem:[%s804 + $0xf1] sm:$0xff] %vm504, %v801
        %819 = vst.msk [vmem:[%s804 + $0x101] sm:$0xff] %vm504, %v802
        %820 = vst.msk [vmem:[%s804 + $0x111] sm:$0xff] %vm504, %v803
        %p821 = scmp.eq.s32.totalorder %s35, 0
        // Predicated region
        $region73: #{tpu_custom_call.1} parent=55 // pred_check
          %p822 = pneg %p821
        $region74: #{tpu_custom_call.1} parent=55 // pred_check_branch
          %824 = sbr.rel (%p822) target = $region76
        $region75: #{tpu_custom_call.1} parent=55 // pred_region
          %s825 = scalar_lea.vmem [#allocation2], 16
          %826 = vst.msk [vmem:[%s825 + $0x1] sm:$0xff] %vm504, 0.0
          %827 = vst.msk [vmem:[%s825 + $0x11] sm:$0xff] %vm504, 0.0
          %828 = vst.msk [vmem:[%s825 + $0x21] sm:$0xff] %vm504, 0.0
          %829 = vst.msk [vmem:[%s825 + $0x31] sm:$0xff] %vm504, 0.0
          %830 = vst.msk [vmem:[%s825 + $0x41] sm:$0xff] %vm504, 0.0
          %831 = vst.msk [vmem:[%s825 + $0x51] sm:$0xff] %vm504, 0.0
          %832 = vst.msk [vmem:[%s825 + $0x61] sm:$0xff] %vm504, 0.0
          %833 = vst.msk [vmem:[%s825 + $0x71] sm:$0xff] %vm504, 0.0
        $region76: #{tpu_custom_call.1} parent=55 // pred_fallthru
          _
        %p834 = scmp.gt.s32.totalorder %s35, 0
        // Predicated region
        $region77: #{tpu_custom_call.1} parent=55 // pred_check
          %p835 = pneg %p834
        $region78: #{tpu_custom_call.1} parent=55 // pred_check_branch
          %837 = sbr.rel (%p835) target = $region80
        $region79: #{tpu_custom_call.1} parent=55 // pred_region
          %v838 = vld [vmem:[%s436] sm:$0xff]
          %v839 = vld [vmem:[%s436 + $0x8] sm:$0xff]
          %v840 = vld [vmem:[%s436 + $0x10] sm:$0xff]
          %v841 = vld [vmem:[%s436 + $0x18] sm:$0xff]
          %v842 = vld [vmem:[%s436 + $0x20] sm:$0xff]
          %v843 = vld [vmem:[%s436 + $0x28] sm:$0xff]
          %v844 = vld [vmem:[%s436 + $0x30] sm:$0xff]
          %v845 = vld [vmem:[%s436 + $0x38] sm:$0xff]
          %846 = vmatprep.subr.mxu0 0.0
          %847 = vmatpush1.msra.mxu0 %v619
          %848 = vmatprep.subr.mxu0 0.0
          %849 = vmatpush1.msra.mxu0 %v618
          %850 = vmatprep.subr.mxu0 0.0
          %851 = vmatpush1.msra.mxu0 %v617
          %852 = vmatprep.subr.mxu0 0.0
          %853 = vmatpush1.msra.mxu0 %v616
          %854 = vmatprep.subr.mxu0 0.0
          %855 = vmatpush1.msra.mxu0 %v615
          %856 = vmatprep.subr.mxu0 0.0
          %857 = vmatpush1.msra.mxu0 %v614
          %858 = vmatprep.subr.mxu0 0.0
          %859 = vmatpush1.msra.mxu0 %v613
          %860 = vmatprep.subr.mxu0 0.0
          %861 = vmatpush1.msra.mxu0 %v612
          %862 = vmatprep.subr.mxu0 0.0
          %863 = vmatpush1.msra.mxu0 %v611
          %864 = vmatprep.subr.mxu0 0.0
          %865 = vmatpush1.msra.mxu0 %v610
          %866 = vmatprep.subr.mxu0 0.0
          %867 = vmatpush1.msra.mxu0 %v609
          %868 = vmatprep.subr.mxu0 0.0
          %869 = vmatpush1.msra.mxu0 %v608
          %870 = vmatprep.subr.mxu0 0.0
          %871 = vmatpush1.msra.mxu0 %v607
          %872 = vmatprep.subr.mxu0 0.0
          %873 = vmatpush1.msra.mxu0 %v606
          %874 = vmatprep.subr.mxu0 0.0
          %875 = vmatpush1.msra.mxu0 %v605
          %876 = vmatprep.subr.mxu0 0.0
          %877 = vmatpush1.msra.mxu0 %v604
          %878 = vmatprep.subr.mxu0 0.0
          %879 = vmatpush2.msra.mxu0 0.0
          %880 = vmatprep.subr.mxu0 0.0
          %881 = vmatpush2.msra.mxu0 0.0
          %882 = vmatprep.subr.mxu0 0.0
          %883 = vmatpush2.msra.mxu0 0.0
          %884 = vmatprep.subr.mxu0 0.0
          %885 = vmatpush2.msra.mxu0 0.0
          %886 = vmatprep.subr.mxu0 0.0
          %887 = vmatpush2.msra.mxu0 0.0
          %888 = vmatprep.subr.mxu0 0.0
          %889 = vmatpush2.msra.mxu0 0.0
          %890 = vmatprep.subr.mxu0 0.0
          %891 = vmatpush2.msra.mxu0 0.0
          %892 = vmatprep.subr.mxu0 0.0
          %893 = vmatpush2.msra.mxu0 0.0
          %894 = vmatprep.subr.mxu0 0.0
          %895 = vmatpush2.msra.mxu0 0.0
          %896 = vmatprep.subr.mxu0 0.0
          %897 = vmatpush2.msra.mxu0 0.0
          %898 = vmatprep.subr.mxu0 0.0
          %899 = vmatpush2.msra.mxu0 0.0
          %900 = vmatprep.subr.mxu0 0.0
          %901 = vmatpush2.msra.mxu0 0.0
          %902 = vmatprep.subr.mxu0 0.0
          %903 = vmatpush2.msra.mxu0 0.0
          %904 = vmatprep.subr.mxu0 0.0
          %905 = vmatpush2.msra.mxu0 0.0
          %906 = vmatprep.subr.mxu0 0.0
          %907 = vmatpush2.msra.mxu0 0.0
          %908 = vmatprep.subr.mxu0 0.0
          %909 = vmatpush2.msra.mxu0 0.0
          %910 = vmatprep.mubr.f32.mxu0 0.0
          %911 = vmatmul.mubr.f32.gmra.mxu0 %v838
          %v912 = vpop.f32.mrf.mxu0
          %v913 = vadd.f32 %v641, %v912
          %v914 = vpop.f32.mrf.mxu0
          %915 = vmatprep.mubr.f32.mxu0 0.0
          %916 = vmatmul.mubr.f32.gmra.mxu0 %v839
          %v917 = vpop.f32.mrf.mxu0
          %v918 = vadd.f32 %v641, %v917
          %v919 = vpop.f32.mrf.mxu0
          %920 = vmatprep.mubr.f32.mxu0 0.0
          %921 = vmatmul.mubr.f32.gmra.mxu0 %v840
          %v922 = vpop.f32.mrf.mxu0
          %v923 = vadd.f32 %v641, %v922
          %v924 = vpop.f32.mrf.mxu0
          %925 = vmatprep.mubr.f32.mxu0 0.0
          %926 = vmatmul.mubr.f32.gmra.mxu0 %v841
          %v927 = vpop.f32.mrf.mxu0
          %v928 = vadd.f32 %v641, %v927
          %v929 = vpop.f32.mrf.mxu0
          %930 = vmatprep.mubr.f32.mxu0 0.0
          %931 = vmatmul.mubr.f32.gmra.mxu0 %v842
          %v932 = vpop.f32.mrf.mxu0
          %v933 = vadd.f32 %v641, %v932
          %v934 = vpop.f32.mrf.mxu0
          %935 = vmatprep.mubr.f32.mxu0 0.0
          %936 = vmatmul.mubr.f32.gmra.mxu0 %v843
          %v937 = vpop.f32.mrf.mxu0
          %v938 = vadd.f32 %v641, %v937
          %v939 = vpop.f32.mrf.mxu0
          %940 = vmatprep.mubr.f32.mxu0 0.0
          %941 = vmatmul.mubr.f32.gmra.mxu0 %v844
          %v942 = vpop.f32.mrf.mxu0
          %v943 = vadd.f32 %v641, %v942
          %v944 = vpop.f32.mrf.mxu0
          %945 = vmatprep.mubr.f32.mxu0 0.0
          %946 = vmatmul.mubr.f32.gmra.mxu0 %v845
          %v947 = vpop.f32.mrf.mxu0
          %v948 = vadd.f32 %v641, %v947
          %v949 = vpop.f32.mrf.mxu0
          %950 = vdwg.mxu0
          %v951 = vmax.f32 %v913, 0.0
          %v952 = vmax.f32 %v918, 0.0
          %v953 = vmax.f32 %v923, 0.0
          %v954 = vmax.f32 %v928, 0.0
          %v955 = vmax.f32 %v933, 0.0
          %v956 = vmax.f32 %v938, 0.0
          %v957 = vmax.f32 %v943, 0.0
          %v958 = vmax.f32 %v948, 0.0
          %s959 = scalar_lea.vmem [#allocation2], 16
          %960 = vst.msk [vmem:[%s959 + $0x1] sm:$0xff] %vm504, %v951
          %961 = vst.msk [vmem:[%s959 + $0x11] sm:$0xff] %vm504, %v952
          %962 = vst.msk [vmem:[%s959 + $0x21] sm:$0xff] %vm504, %v953
          %963 = vst.msk [vmem:[%s959 + $0x31] sm:$0xff] %vm504, %v954
          %964 = vst.msk [vmem:[%s959 + $0x41] sm:$0xff] %vm504, %v955
          %965 = vst.msk [vmem:[%s959 + $0x51] sm:$0xff] %vm504, %v956
          %966 = vst.msk [vmem:[%s959 + $0x61] sm:$0xff] %vm504, %v957
          %967 = vst.msk [vmem:[%s959 + $0x71] sm:$0xff] %vm504, %v958
        $region80: #{tpu_custom_call.1} parent=55 // pred_fallthru
          _
        %p968 = scmp.eq.s32.totalorder %s35, 3
        // Predicated region
        $region81: #{tpu_custom_call.1} parent=55 // pred_check
          %p969 = pneg %p968
        $region82: #{tpu_custom_call.1} parent=55 // pred_check_branch
          %971 = sbr.rel (%p969) target = $region84
        $region83: #{tpu_custom_call.1} parent=55 // pred_region
          %s972 = scalar_lea.vmem [#allocation2], 496
          %973 = vst.msk [vmem:[%s972 + $0x1] sm:$0xff] %vm504, 0.0
          %974 = vst.msk [vmem:[%s972 + $0x11] sm:$0xff] %vm504, 0.0
          %975 = vst.msk [vmem:[%s972 + $0x21] sm:$0xff] %vm504, 0.0
          %976 = vst.msk [vmem:[%s972 + $0x31] sm:$0xff] %vm504, 0.0
          %977 = vst.msk [vmem:[%s972 + $0x41] sm:$0xff] %vm504, 0.0
          %978 = vst.msk [vmem:[%s972 + $0x51] sm:$0xff] %vm504, 0.0
          %979 = vst.msk [vmem:[%s972 + $0x61] sm:$0xff] %vm504, 0.0
          %980 = vst.msk [vmem:[%s972 + $0x71] sm:$0xff] %vm504, 0.0
        $region84: #{tpu_custom_call.1} parent=55 // pred_fallthru
          _
        %p981 = scmp.lt.s32.totalorder %s35, 3
        // Predicated region
        $region85: #{tpu_custom_call.1} parent=55 // pred_check
          %p982 = pneg %p981
        $region86: #{tpu_custom_call.1} parent=55 // pred_check_branch
          %984 = sbr.rel (%p982) target = $region88
        $region87: #{tpu_custom_call.1} parent=55 // pred_region
          %v985 = vld [vmem:[%s445] sm:$0xff]
          %v986 = vld [vmem:[%s445 + $0x8] sm:$0xff]
          %v987 = vld [vmem:[%s445 + $0x10] sm:$0xff]
          %v988 = vld [vmem:[%s445 + $0x18] sm:$0xff]
          %v989 = vld [vmem:[%s445 + $0x20] sm:$0xff]
          %v990 = vld [vmem:[%s445 + $0x28] sm:$0xff]
          %v991 = vld [vmem:[%s445 + $0x30] sm:$0xff]
          %v992 = vld [vmem:[%s445 + $0x38] sm:$0xff]
          %993 = vmatprep.subr.mxu0 0.0
          %994 = vmatpush1.msra.mxu0 %v619
          %995 = vmatprep.subr.mxu0 0.0
          %996 = vmatpush1.msra.mxu0 %v618
          %997 = vmatprep.subr.mxu0 0.0
          %998 = vmatpush1.msra.mxu0 %v617
          %999 = vmatprep.subr.mxu0 0.0
          %1000 = vmatpush1.msra.mxu0 %v616
          %1001 = vmatprep.subr.mxu0 0.0
          %1002 = vmatpush1.msra.mxu0 %v615
          %1003 = vmatprep.subr.mxu0 0.0
          %1004 = vmatpush1.msra.mxu0 %v614
          %1005 = vmatprep.subr.mxu0 0.0
          %1006 = vmatpush1.msra.mxu0 %v613
          %1007 = vmatprep.subr.mxu0 0.0
          %1008 = vmatpush1.msra.mxu0 %v612
          %1009 = vmatprep.subr.mxu0 0.0
          %1010 = vmatpush1.msra.mxu0 %v611
          %1011 = vmatprep.subr.mxu0 0.0
          %1012 = vmatpush1.msra.mxu0 %v610
          %1013 = vmatprep.subr.mxu0 0.0
          %1014 = vmatpush1.msra.mxu0 %v609
          %1015 = vmatprep.subr.mxu0 0.0
          %1016 = vmatpush1.msra.mxu0 %v608
          %1017 = vmatprep.subr.mxu0 0.0
          %1018 = vmatpush1.msra.mxu0 %v607
          %1019 = vmatprep.subr.mxu0 0.0
          %1020 = vmatpush1.msra.mxu0 %v606
          %1021 = vmatprep.subr.mxu0 0.0
          %1022 = vmatpush1.msra.mxu0 %v605
          %1023 = vmatprep.subr.mxu0 0.0
          %1024 = vmatpush1.msra.mxu0 %v604
          %1025 = vmatprep.subr.mxu0 0.0
          %1026 = vmatpush2.msra.mxu0 0.0
          %1027 = vmatprep.subr.mxu0 0.0
          %1028 = vmatpush2.msra.mxu0 0.0
          %1029 = vmatprep.subr.mxu0 0.0
          %1030 = vmatpush2.msra.mxu0 0.0
          %1031 = vmatprep.subr.mxu0 0.0
          %1032 = vmatpush2.msra.mxu0 0.0
          %1033 = vmatprep.subr.mxu0 0.0
          %1034 = vmatpush2.msra.mxu0 0.0
          %1035 = vmatprep.subr.mxu0 0.0
          %1036 = vmatpush2.msra.mxu0 0.0
          %1037 = vmatprep.subr.mxu0 0.0
          %1038 = vmatpush2.msra.mxu0 0.0
          %1039 = vmatprep.subr.mxu0 0.0
          %1040 = vmatpush2.msra.mxu0 0.0
          %1041 = vmatprep.subr.mxu0 0.0
          %1042 = vmatpush2.msra.mxu0 0.0
          %1043 = vmatprep.subr.mxu0 0.0
          %1044 = vmatpush2.msra.mxu0 0.0
          %1045 = vmatprep.subr.mxu0 0.0
          %1046 = vmatpush2.msra.mxu0 0.0
          %1047 = vmatprep.subr.mxu0 0.0
          %1048 = vmatpush2.msra.mxu0 0.0
          %1049 = vmatprep.subr.mxu0 0.0
          %1050 = vmatpush2.msra.mxu0 0.0
          %1051 = vmatprep.subr.mxu0 0.0
          %1052 = vmatpush2.msra.mxu0 0.0
          %1053 = vmatprep.subr.mxu0 0.0
          %1054 = vmatpush2.msra.mxu0 0.0
          %1055 = vmatprep.subr.mxu0 0.0
          %1056 = vmatpush2.msra.mxu0 0.0
          %1057 = vmatprep.mubr.f32.mxu0 0.0
          %1058 = vmatmul.mubr.f32.gmra.mxu0 %v985
          %v1059 = vpop.f32.mrf.mxu0
          %v1060 = vadd.f32 %v641, %v1059
          %v1061 = vpop.f32.mrf.mxu0
          %1062 = vmatprep.mubr.f32.mxu0 0.0
          %1063 = vmatmul.mubr.f32.gmra.mxu0 %v986
          %v1064 = vpop.f32.mrf.mxu0
          %v1065 = vadd.f32 %v641, %v1064
          %v1066 = vpop.f32.mrf.mxu0
          %1067 = vmatprep.mubr.f32.mxu0 0.0
          %1068 = vmatmul.mubr.f32.gmra.mxu0 %v987
          %v1069 = vpop.f32.mrf.mxu0
          %v1070 = vadd.f32 %v641, %v1069
          %v1071 = vpop.f32.mrf.mxu0
          %1072 = vmatprep.mubr.f32.mxu0 0.0
          %1073 = vmatmul.mubr.f32.gmra.mxu0 %v988
          %v1074 = vpop.f32.mrf.mxu0
          %v1075 = vadd.f32 %v641, %v1074
          %v1076 = vpop.f32.mrf.mxu0
          %1077 = vmatprep.mubr.f32.mxu0 0.0
          %1078 = vmatmul.mubr.f32.gmra.mxu0 %v989
          %v1079 = vpop.f32.mrf.mxu0
          %v1080 = vadd.f32 %v641, %v1079
          %v1081 = vpop.f32.mrf.mxu0
          %1082 = vmatprep.mubr.f32.mxu0 0.0
          %1083 = vmatmul.mubr.f32.gmra.mxu0 %v990
          %v1084 = vpop.f32.mrf.mxu0
          %v1085 = vadd.f32 %v641, %v1084
          %v1086 = vpop.f32.mrf.mxu0
          %1087 = vmatprep.mubr.f32.mxu0 0.0
          %1088 = vmatmul.mubr.f32.gmra.mxu0 %v991
          %v1089 = vpop.f32.mrf.mxu0
          %v1090 = vadd.f32 %v641, %v1089
          %v1091 = vpop.f32.mrf.mxu0
          %1092 = vmatprep.mubr.f32.mxu0 0.0
          %1093 = vmatmul.mubr.f32.gmra.mxu0 %v992
          %v1094 = vpop.f32.mrf.mxu0
          %v1095 = vadd.f32 %v641, %v1094
          %v1096 = vpop.f32.mrf.mxu0
          %1097 = vdwg.mxu0
          %v1098 = vmax.f32 %v1060, 0.0
          %v1099 = vmax.f32 %v1065, 0.0
          %v1100 = vmax.f32 %v1070, 0.0
          %v1101 = vmax.f32 %v1075, 0.0
          %v1102 = vmax.f32 %v1080, 0.0
          %v1103 = vmax.f32 %v1085, 0.0
          %v1104 = vmax.f32 %v1090, 0.0
          %v1105 = vmax.f32 %v1095, 0.0
          %s1106 = scalar_lea.vmem [#allocation2], 496
          %1107 = vst.msk [vmem:[%s1106 + $0x1] sm:$0xff] %vm504, %v1098
          %1108 = vst.msk [vmem:[%s1106 + $0x11] sm:$0xff] %vm504, %v1099
          %1109 = vst.msk [vmem:[%s1106 + $0x21] sm:$0xff] %vm504, %v1100
          %1110 = vst.msk [vmem:[%s1106 + $0x31] sm:$0xff] %vm504, %v1101
          %1111 = vst.msk [vmem:[%s1106 + $0x41] sm:$0xff] %vm504, %v1102
          %1112 = vst.msk [vmem:[%s1106 + $0x51] sm:$0xff] %vm504, %v1103
          %1113 = vst.msk [vmem:[%s1106 + $0x61] sm:$0xff] %vm504, %v1104
          %1114 = vst.msk [vmem:[%s1106 + $0x71] sm:$0xff] %vm504, %v1105
        $region88: #{tpu_custom_call.1} parent=55 // pred_fallthru
          _
        %v1115 = vld [vmem:[#allocation2] sm:$0xff]
        %v1116 = vld [vmem:[#allocation2 + $0x10] sm:$0xff]
        %v1117 = vld [vmem:[#allocation2 + $0x20] sm:$0xff]
        %v1118 = vld [vmem:[#allocation2 + $0x30] sm:$0xff]
        %v1119 = vld [vmem:[#allocation2 + $0x40] sm:$0xff]
        %v1120 = vld [vmem:[#allocation2 + $0x50] sm:$0xff]
        %v1121 = vld [vmem:[#allocation2 + $0x60] sm:$0xff]
        %v1122 = vld [vmem:[#allocation2 + $0x70] sm:$0xff]
        %v1123 = vld [vmem:[#allocation2 + $0xa0] sm:$0xff]
        %v1124 = vld [vmem:[#allocation2 + $0xb0] sm:$0xff]
        %v1125 = vld [vmem:[#allocation2 + $0xc0] sm:$0xff]
        %v1126 = vld [vmem:[#allocation2 + $0xd0] sm:$0xff]
        %v1127 = vld [vmem:[#allocation2 + $0xe0] sm:$0xff]
        %v1128 = vld [vmem:[#allocation2 + $0xf0] sm:$0xff]
        %v1129 = vld [vmem:[#allocation2 + $0x100] sm:$0xff]
        %v1130 = vld [vmem:[#allocation2 + $0x110] sm:$0xff]
        %v1131 = vld [vmem:[#allocation2 + $0x140] sm:$0xff]
        %v1132 = vld [vmem:[#allocation2 + $0x150] sm:$0xff]
        %v1133 = vld [vmem:[#allocation2 + $0x160] sm:$0xff]
        %v1134 = vld [vmem:[#allocation2 + $0x170] sm:$0xff]
        %v1135 = vld [vmem:[#allocation2 + $0x180] sm:$0xff]
        %v1136 = vld [vmem:[#allocation2 + $0x190] sm:$0xff]
        %v1137 = vld [vmem:[#allocation2 + $0x1a0] sm:$0xff]
        %v1138 = vld [vmem:[#allocation2 + $0x1b0] sm:$0xff]
        %v1139 = vld [vmem:[#allocation2 + $0x1e0] sm:$0xff]
        %v1140 = vld [vmem:[#allocation2 + $0x1f0] sm:$0xff]
        %v1141 = vld [vmem:[#allocation2 + $0x200] sm:$0xff]
        %v1142 = vld [vmem:[#allocation2 + $0x210] sm:$0xff]
        %v1143 = vld [vmem:[#allocation2 + $0x220] sm:$0xff]
        %v1144 = vld [vmem:[#allocation2 + $0x230] sm:$0xff]
        %v1145 = vld [vmem:[#allocation2 + $0x240] sm:$0xff]
        %v1146 = vld [vmem:[#allocation2 + $0x250] sm:$0xff]
        %1147 = vst.msk [vmem:[#allocation3] sm:$0xff] %vm504, %v1115
        %1148 = vst.msk [vmem:[#allocation3 + $0x18] sm:$0xff] %vm504, %v1116
        %1149 = vst.msk [vmem:[#allocation3 + $0x30] sm:$0xff] %vm504, %v1117
        %1150 = vst.msk [vmem:[#allocation3 + $0x48] sm:$0xff] %vm504, %v1118
        %1151 = vst.msk [vmem:[#allocation3 + $0x60] sm:$0xff] %vm504, %v1119
        %1152 = vst.msk [vmem:[#allocation3 + $0x78] sm:$0xff] %vm504, %v1120
        %1153 = vst.msk [vmem:[#allocation3 + $0x90] sm:$0xff] %vm504, %v1121
        %1154 = vst.msk [vmem:[#allocation3 + $0xa8] sm:$0xff] %vm504, %v1122
        %1155 = vst.msk [vmem:[#allocation3 + $0xc0] sm:$0xff] %vm504, %v1123
        %1156 = vst.msk [vmem:[#allocation3 + $0xd8] sm:$0xff] %vm504, %v1124
        %1157 = vst.msk [vmem:[#allocation3 + $0xf0] sm:$0xff] %vm504, %v1125
        %1158 = vst.msk [vmem:[#allocation3 + $0x108] sm:$0xff] %vm504, %v1126
        %1159 = vst.msk [vmem:[#allocation3 + $0x120] sm:$0xff] %vm504, %v1127
        %1160 = vst.msk [vmem:[#allocation3 + $0x138] sm:$0xff] %vm504, %v1128
        %1161 = vst.msk [vmem:[#allocation3 + $0x150] sm:$0xff] %vm504, %v1129
        %1162 = vst.msk [vmem:[#allocation3 + $0x168] sm:$0xff] %vm504, %v1130
        %1163 = vst.msk [vmem:[#allocation3 + $0x180] sm:$0xff] %vm504, %v1131
        %1164 = vst.msk [vmem:[#allocation3 + $0x198] sm:$0xff] %vm504, %v1132
        %1165 = vst.msk [vmem:[#allocation3 + $0x1b0] sm:$0xff] %vm504, %v1133
        %1166 = vst.msk [vmem:[#allocation3 + $0x1c8] sm:$0xff] %vm504, %v1134
        %1167 = vst.msk [vmem:[#allocation3 + $0x1e0] sm:$0xff] %vm504, %v1135
        %1168 = vst.msk [vmem:[#allocation3 + $0x1f8] sm:$0xff] %vm504, %v1136
        %1169 = vst.msk [vmem:[#allocation3 + $0x210] sm:$0xff] %vm504, %v1137
        %1170 = vst.msk [vmem:[#allocation3 + $0x228] sm:$0xff] %vm504, %v1138
        %1171 = vst.msk [vmem:[#allocation3 + $0x240] sm:$0xff] %vm504, %v1139
        %1172 = vst.msk [vmem:[#allocation3 + $0x258] sm:$0xff] %vm504, %v1140
        %1173 = vst.msk [vmem:[#allocation3 + $0x270] sm:$0xff] %vm504, %v1141
        %1174 = vst.msk [vmem:[#allocation3 + $0x288] sm:$0xff] %vm504, %v1142
        %1175 = vst.msk [vmem:[#allocation3 + $0x2a0] sm:$0xff] %vm504, %v1143
        %1176 = vst.msk [vmem:[#allocation3 + $0x2b8] sm:$0xff] %vm504, %v1144
        %1177 = vst.msk [vmem:[#allocation3 + $0x2d0] sm:$0xff] %vm504, %v1145
        %1178 = vst.msk [vmem:[#allocation3 + $0x2e8] sm:$0xff] %vm504, %v1146
        %v1179 = vld [vmem:[#allocation2 + $0x1] sm:$0xff]
        %v1180 = vld [vmem:[#allocation2 + $0x11] sm:$0xff]
        %v1181 = vld [vmem:[#allocation2 + $0x21] sm:$0xff]
        %v1182 = vld [vmem:[#allocation2 + $0x31] sm:$0xff]
        %v1183 = vld [vmem:[#allocation2 + $0x41] sm:$0xff]
        %v1184 = vld [vmem:[#allocation2 + $0x51] sm:$0xff]
        %v1185 = vld [vmem:[#allocation2 + $0x61] sm:$0xff]
        %v1186 = vld [vmem:[#allocation2 + $0x71] sm:$0xff]
        %v1187 = vld [vmem:[#allocation2 + $0xa1] sm:$0xff]
        %v1188 = vld [vmem:[#allocation2 + $0xb1] sm:$0xff]
        %v1189 = vld [vmem:[#allocation2 + $0xc1] sm:$0xff]
        %v1190 = vld [vmem:[#allocation2 + $0xd1] sm:$0xff]
        %v1191 = vld [vmem:[#allocation2 + $0xe1] sm:$0xff]
        %v1192 = vld [vmem:[#allocation2 + $0xf1] sm:$0xff]
        %v1193 = vld [vmem:[#allocation2 + $0x101] sm:$0xff]
        %v1194 = vld [vmem:[#allocation2 + $0x111] sm:$0xff]
        %v1195 = vld [vmem:[#allocation2 + $0x141] sm:$0xff]
        %v1196 = vld [vmem:[#allocation2 + $0x151] sm:$0xff]
        %v1197 = vld [vmem:[#allocation2 + $0x161] sm:$0xff]
        %v1198 = vld [vmem:[#allocation2 + $0x171] sm:$0xff]
        %v1199 = vld [vmem:[#allocation2 + $0x181] sm:$0xff]
        %v1200 = vld [vmem:[#allocation2 + $0x191] sm:$0xff]
        %v1201 = vld [vmem:[#allocation2 + $0x1a1] sm:$0xff]
        %v1202 = vld [vmem:[#allocation2 + $0x1b1] sm:$0xff]
        %v1203 = vld [vmem:[#allocation2 + $0x1e1] sm:$0xff]
        %v1204 = vld [vmem:[#allocation2 + $0x1f1] sm:$0xff]
        %v1205 = vld [vmem:[#allocation2 + $0x201] sm:$0xff]
        %v1206 = vld [vmem:[#allocation2 + $0x211] sm:$0xff]
        %v1207 = vld [vmem:[#allocation2 + $0x221] sm:$0xff]
        %v1208 = vld [vmem:[#allocation2 + $0x231] sm:$0xff]
        %v1209 = vld [vmem:[#allocation2 + $0x241] sm:$0xff]
        %v1210 = vld [vmem:[#allocation2 + $0x251] sm:$0xff]
        %1243 = vrot.lane.b32.xlu0 %v1179, 32
        %v1244 = vpop.permute.xlu0 %1243
        %1245 = vrot.lane.b32.xlu0 %v1180, 32
        %v1246 = vpop.permute.xlu0 %1245
        %1247 = vrot.lane.b32.xlu0 %v1181, 32
        %v1248 = vpop.permute.xlu0 %1247
        %1249 = vrot.lane.b32.xlu0 %v1182, 32
        %v1250 = vpop.permute.xlu0 %1249
        %1251 = vrot.lane.b32.xlu0 %v1183, 32
        %v1252 = vpop.permute.xlu0 %1251
        %1253 = vrot.lane.b32.xlu0 %v1184, 32
        %v1254 = vpop.permute.xlu0 %1253
        %1255 = vrot.lane.b32.xlu0 %v1185, 32
        %v1256 = vpop.permute.xlu0 %1255
        %1257 = vrot.lane.b32.xlu0 %v1186, 32
        %v1258 = vpop.permute.xlu0 %1257
        %1259 = vrot.lane.b32.xlu0 %v1187, 32
        %v1260 = vpop.permute.xlu0 %1259
        %1261 = vrot.lane.b32.xlu0 %v1188, 32
        %v1262 = vpop.permute.xlu0 %1261
        %1263 = vrot.lane.b32.xlu0 %v1189, 32
        %v1264 = vpop.permute.xlu0 %1263
        %1265 = vrot.lane.b32.xlu0 %v1190, 32
        %v1266 = vpop.permute.xlu0 %1265
        %1267 = vrot.lane.b32.xlu0 %v1191, 32
        %v1268 = vpop.permute.xlu0 %1267
        %1269 = vrot.lane.b32.xlu0 %v1192, 32
        %v1270 = vpop.permute.xlu0 %1269
        %1271 = vrot.lane.b32.xlu0 %v1193, 32
        %v1272 = vpop.permute.xlu0 %1271
        %1273 = vrot.lane.b32.xlu0 %v1194, 32
        %v1274 = vpop.permute.xlu0 %1273
        %1275 = vrot.lane.b32.xlu0 %v1195, 32
        %v1276 = vpop.permute.xlu0 %1275
        %1277 = vrot.lane.b32.xlu0 %v1196, 32
        %v1278 = vpop.permute.xlu0 %1277
        %1279 = vrot.lane.b32.xlu0 %v1197, 32
        %v1280 = vpop.permute.xlu0 %1279
        %1281 = vrot.lane.b32.xlu0 %v1198, 32
        %v1282 = vpop.permute.xlu0 %1281
        %1283 = vrot.lane.b32.xlu0 %v1199, 32
        %v1284 = vpop.permute.xlu0 %1283
        %1285 = vrot.lane.b32.xlu0 %v1200, 32
        %v1286 = vpop.permute.xlu0 %1285
        %1287 = vrot.lane.b32.xlu0 %v1201, 32
        %v1288 = vpop.permute.xlu0 %1287
        %1289 = vrot.lane.b32.xlu0 %v1202, 32
        %v1290 = vpop.permute.xlu0 %1289
        %1291 = vrot.lane.b32.xlu0 %v1203, 32
        %v1292 = vpop.permute.xlu0 %1291
        %1293 = vrot.lane.b32.xlu0 %v1204, 32
        %v1294 = vpop.permute.xlu0 %1293
        %1295 = vrot.lane.b32.xlu0 %v1205, 32
        %v1296 = vpop.permute.xlu0 %1295
        %1297 = vrot.lane.b32.xlu0 %v1206, 32
        %v1298 = vpop.permute.xlu0 %1297
        %1299 = vrot.lane.b32.xlu0 %v1207, 32
        %v1300 = vpop.permute.xlu0 %1299
        %1301 = vrot.lane.b32.xlu0 %v1208, 32
        %v1302 = vpop.permute.xlu0 %1301
        %1303 = vrot.lane.b32.xlu0 %v1209, 32
        %v1304 = vpop.permute.xlu0 %1303
        %1305 = vrot.lane.b32.xlu0 %v1210, 32
        %v1306 = vpop.permute.xlu0 %1305
        %vm1339 = vcmask 523520
        %1340 = vst.msk [vmem:[#allocation3] sm:$0xff] %vm1339, %v1244
        %1341 = vst.msk [vmem:[#allocation3 + $0x18] sm:$0xff] %vm1339, %v1246
        %1342 = vst.msk [vmem:[#allocation3 + $0x30] sm:$0xff] %vm1339, %v1248
        %1343 = vst.msk [vmem:[#allocation3 + $0x48] sm:$0xff] %vm1339, %v1250
        %1344 = vst.msk [vmem:[#allocation3 + $0x60] sm:$0xff] %vm1339, %v1252
        %1345 = vst.msk [vmem:[#allocation3 + $0x78] sm:$0xff] %vm1339, %v1254
        %1346 = vst.msk [vmem:[#allocation3 + $0x90] sm:$0xff] %vm1339, %v1256
        %1347 = vst.msk [vmem:[#allocation3 + $0xa8] sm:$0xff] %vm1339, %v1258
        %1348 = vst.msk [vmem:[#allocation3 + $0xc0] sm:$0xff] %vm1339, %v1260
        %1349 = vst.msk [vmem:[#allocation3 + $0xd8] sm:$0xff] %vm1339, %v1262
        %1350 = vst.msk [vmem:[#allocation3 + $0xf0] sm:$0xff] %vm1339, %v1264
        %1351 = vst.msk [vmem:[#allocation3 + $0x108] sm:$0xff] %vm1339, %v1266
        %1352 = vst.msk [vmem:[#allocation3 + $0x120] sm:$0xff] %vm1339, %v1268
        %1353 = vst.msk [vmem:[#allocation3 + $0x138] sm:$0xff] %vm1339, %v1270
        %1354 = vst.msk [vmem:[#allocation3 + $0x150] sm:$0xff] %vm1339, %v1272
        %1355 = vst.msk [vmem:[#allocation3 + $0x168] sm:$0xff] %vm1339, %v1274
        %1356 = vst.msk [vmem:[#allocation3 + $0x180] sm:$0xff] %vm1339, %v1276
        %1357 = vst.msk [vmem:[#allocation3 + $0x198] sm:$0xff] %vm1339, %v1278
        %1358 = vst.msk [vmem:[#allocation3 + $0x1b0] sm:$0xff] %vm1339, %v1280
        %1359 = vst.msk [vmem:[#allocation3 + $0x1c8] sm:$0xff] %vm1339, %v1282
        %1360 = vst.msk [vmem:[#allocation3 + $0x1e0] sm:$0xff] %vm1339, %v1284
        %1361 = vst.msk [vmem:[#allocation3 + $0x1f8] sm:$0xff] %vm1339, %v1286
        %1362 = vst.msk [vmem:[#allocation3 + $0x210] sm:$0xff] %vm1339, %v1288
        %1363 = vst.msk [vmem:[#allocation3 + $0x228] sm:$0xff] %vm1339, %v1290
        %1364 = vst.msk [vmem:[#allocation3 + $0x240] sm:$0xff] %vm1339, %v1292
        %1365 = vst.msk [vmem:[#allocation3 + $0x258] sm:$0xff] %vm1339, %v1294
        %1366 = vst.msk [vmem:[#allocation3 + $0x270] sm:$0xff] %vm1339, %v1296
        %1367 = vst.msk [vmem:[#allocation3 + $0x288] sm:$0xff] %vm1339, %v1298
        %1368 = vst.msk [vmem:[#allocation3 + $0x2a0] sm:$0xff] %vm1339, %v1300
        %1369 = vst.msk [vmem:[#allocation3 + $0x2b8] sm:$0xff] %vm1339, %v1302
        %1370 = vst.msk [vmem:[#allocation3 + $0x2d0] sm:$0xff] %vm1339, %v1304
        %1371 = vst.msk [vmem:[#allocation3 + $0x2e8] sm:$0xff] %vm1339, %v1306
        %v1372 = vld [vmem:[#allocation2 + $0x2] sm:$0xff]
        %v1373 = vld [vmem:[#allocation2 + $0x12] sm:$0xff]
        %v1374 = vld [vmem:[#allocation2 + $0x22] sm:$0xff]
        %v1375 = vld [vmem:[#allocation2 + $0x32] sm:$0xff]
        %v1376 = vld [vmem:[#allocation2 + $0x42] sm:$0xff]
        %v1377 = vld [vmem:[#allocation2 + $0x52] sm:$0xff]
        %v1378 = vld [vmem:[#allocation2 + $0x62] sm:$0xff]
        %v1379 = vld [vmem:[#allocation2 + $0x72] sm:$0xff]
        %v1380 = vld [vmem:[#allocation2 + $0xa2] sm:$0xff]
        %v1381 = vld [vmem:[#allocation2 + $0xb2] sm:$0xff]
        %v1382 = vld [vmem:[#allocation2 + $0xc2] sm:$0xff]
        %v1383 = vld [vmem:[#allocation2 + $0xd2] sm:$0xff]
        %v1384 = vld [vmem:[#allocation2 + $0xe2] sm:$0xff]
        %v1385 = vld [vmem:[#allocation2 + $0xf2] sm:$0xff]
        %v1386 = vld [vmem:[#allocation2 + $0x102] sm:$0xff]
        %v1387 = vld [vmem:[#allocation2 + $0x112] sm:$0xff]
        %v1388 = vld [vmem:[#allocation2 + $0x142] sm:$0xff]
        %v1389 = vld [vmem:[#allocation2 + $0x152] sm:$0xff]
        %v1390 = vld [vmem:[#allocation2 + $0x162] sm:$0xff]
        %v1391 = vld [vmem:[#allocation2 + $0x172] sm:$0xff]
        %v1392 = vld [vmem:[#allocation2 + $0x182] sm:$0xff]
        %v1393 = vld [vmem:[#allocation2 + $0x192] sm:$0xff]
        %v1394 = vld [vmem:[#allocation2 + $0x1a2] sm:$0xff]
        %v1395 = vld [vmem:[#allocation2 + $0x1b2] sm:$0xff]
        %v1396 = vld [vmem:[#allocation2 + $0x1e2] sm:$0xff]
        %v1397 = vld [vmem:[#allocation2 + $0x1f2] sm:$0xff]
        %v1398 = vld [vmem:[#allocation2 + $0x202] sm:$0xff]
        %v1399 = vld [vmem:[#allocation2 + $0x212] sm:$0xff]
        %v1400 = vld [vmem:[#allocation2 + $0x222] sm:$0xff]
        %v1401 = vld [vmem:[#allocation2 + $0x232] sm:$0xff]
        %v1402 = vld [vmem:[#allocation2 + $0x242] sm:$0xff]
        %v1403 = vld [vmem:[#allocation2 + $0x252] sm:$0xff]
        %1436 = vrot.lane.b32.xlu0 %v1372, 64
        %v1437 = vpop.permute.xlu0 %1436
        %1438 = vrot.lane.b32.xlu0 %v1373, 64
        %v1439 = vpop.permute.xlu0 %1438
        %1440 = vrot.lane.b32.xlu0 %v1374, 64
        %v1441 = vpop.permute.xlu0 %1440
        %1442 = vrot.lane.b32.xlu0 %v1375, 64
        %v1443 = vpop.permute.xlu0 %1442
        %1444 = vrot.lane.b32.xlu0 %v1376, 64
        %v1445 = vpop.permute.xlu0 %1444
        %1446 = vrot.lane.b32.xlu0 %v1377, 64
        %v1447 = vpop.permute.xlu0 %1446
        %1448 = vrot.lane.b32.xlu0 %v1378, 64
        %v1449 = vpop.permute.xlu0 %1448
        %1450 = vrot.lane.b32.xlu0 %v1379, 64
        %v1451 = vpop.permute.xlu0 %1450
        %1452 = vrot.lane.b32.xlu0 %v1380, 64
        %v1453 = vpop.permute.xlu0 %1452
        %1454 = vrot.lane.b32.xlu0 %v1381, 64
        %v1455 = vpop.permute.xlu0 %1454
        %1456 = vrot.lane.b32.xlu0 %v1382, 64
        %v1457 = vpop.permute.xlu0 %1456
        %1458 = vrot.lane.b32.xlu0 %v1383, 64
        %v1459 = vpop.permute.xlu0 %1458
        %1460 = vrot.lane.b32.xlu0 %v1384, 64
        %v1461 = vpop.permute.xlu0 %1460
        %1462 = vrot.lane.b32.xlu0 %v1385, 64
        %v1463 = vpop.permute.xlu0 %1462
        %1464 = vrot.lane.b32.xlu0 %v1386, 64
        %v1465 = vpop.permute.xlu0 %1464
        %1466 = vrot.lane.b32.xlu0 %v1387, 64
        %v1467 = vpop.permute.xlu0 %1466
        %1468 = vrot.lane.b32.xlu0 %v1388, 64
        %v1469 = vpop.permute.xlu0 %1468
        %1470 = vrot.lane.b32.xlu0 %v1389, 64
        %v1471 = vpop.permute.xlu0 %1470
        %1472 = vrot.lane.b32.xlu0 %v1390, 64
        %v1473 = vpop.permute.xlu0 %1472
        %1474 = vrot.lane.b32.xlu0 %v1391, 64
        %v1475 = vpop.permute.xlu0 %1474
        %1476 = vrot.lane.b32.xlu0 %v1392, 64
        %v1477 = vpop.permute.xlu0 %1476
        %1478 = vrot.lane.b32.xlu0 %v1393, 64
        %v1479 = vpop.permute.xlu0 %1478
        %1480 = vrot.lane.b32.xlu0 %v1394, 64
        %v1481 = vpop.permute.xlu0 %1480
        %1482 = vrot.lane.b32.xlu0 %v1395, 64
        %v1483 = vpop.permute.xlu0 %1482
        %1484 = vrot.lane.b32.xlu0 %v1396, 64
        %v1485 = vpop.permute.xlu0 %1484
        %1486 = vrot.lane.b32.xlu0 %v1397, 64
        %v1487 = vpop.permute.xlu0 %1486
        %1488 = vrot.lane.b32.xlu0 %v1398, 64
        %v1489 = vpop.permute.xlu0 %1488
        %1490 = vrot.lane.b32.xlu0 %v1399, 64
        %v1491 = vpop.permute.xlu0 %1490
        %1492 = vrot.lane.b32.xlu0 %v1400, 64
        %v1493 = vpop.permute.xlu0 %1492
        %1494 = vrot.lane.b32.xlu0 %v1401, 64
        %v1495 = vpop.permute.xlu0 %1494
        %1496 = vrot.lane.b32.xlu0 %v1402, 64
        %v1497 = vpop.permute.xlu0 %1496
        %1498 = vrot.lane.b32.xlu0 %v1403, 64
        %v1499 = vpop.permute.xlu0 %1498
        %vm1532 = vcmask 785920
        %1533 = vst.msk [vmem:[#allocation3] sm:$0xff] %vm1532, %v1437
        %1534 = vst.msk [vmem:[#allocation3 + $0x18] sm:$0xff] %vm1532, %v1439
        %1535 = vst.msk [vmem:[#allocation3 + $0x30] sm:$0xff] %vm1532, %v1441
        %1536 = vst.msk [vmem:[#allocation3 + $0x48] sm:$0xff] %vm1532, %v1443
        %1537 = vst.msk [vmem:[#allocation3 + $0x60] sm:$0xff] %vm1532, %v1445
        %1538 = vst.msk [vmem:[#allocation3 + $0x78] sm:$0xff] %vm1532, %v1447
        %1539 = vst.msk [vmem:[#allocation3 + $0x90] sm:$0xff] %vm1532, %v1449
        %1540 = vst.msk [vmem:[#allocation3 + $0xa8] sm:$0xff] %vm1532, %v1451
        %1541 = vst.msk [vmem:[#allocation3 + $0xc0] sm:$0xff] %vm1532, %v1453
        %1542 = vst.msk [vmem:[#allocation3 + $0xd8] sm:$0xff] %vm1532, %v1455
        %1543 = vst.msk [vmem:[#allocation3 + $0xf0] sm:$0xff] %vm1532, %v1457
        %1544 = vst.msk [vmem:[#allocation3 + $0x108] sm:$0xff] %vm1532, %v1459
        %1545 = vst.msk [vmem:[#allocation3 + $0x120] sm:$0xff] %vm1532, %v1461
        %1546 = vst.msk [vmem:[#allocation3 + $0x138] sm:$0xff] %vm1532, %v1463
        %1547 = vst.msk [vmem:[#allocation3 + $0x150] sm:$0xff] %vm1532, %v1465
        %1548 = vst.msk [vmem:[#allocation3 + $0x168] sm:$0xff] %vm1532, %v1467
        %1549 = vst.msk [vmem:[#allocation3 + $0x180] sm:$0xff] %vm1532, %v1469
        %1550 = vst.msk [vmem:[#allocation3 + $0x198] sm:$0xff] %vm1532, %v1471
        %1551 = vst.msk [vmem:[#allocation3 + $0x1b0] sm:$0xff] %vm1532, %v1473
        %1552 = vst.msk [vmem:[#allocation3 + $0x1c8] sm:$0xff] %vm1532, %v1475
        %1553 = vst.msk [vmem:[#allocation3 + $0x1e0] sm:$0xff] %vm1532, %v1477
        %1554 = vst.msk [vmem:[#allocation3 + $0x1f8] sm:$0xff] %vm1532, %v1479
        %1555 = vst.msk [vmem:[#allocation3 + $0x210] sm:$0xff] %vm1532, %v1481
        %1556 = vst.msk [vmem:[#allocation3 + $0x228] sm:$0xff] %vm1532, %v1483
        %1557 = vst.msk [vmem:[#allocation3 + $0x240] sm:$0xff] %vm1532, %v1485
        %1558 = vst.msk [vmem:[#allocation3 + $0x258] sm:$0xff] %vm1532, %v1487
        %1559 = vst.msk [vmem:[#allocation3 + $0x270] sm:$0xff] %vm1532, %v1489
        %1560 = vst.msk [vmem:[#allocation3 + $0x288] sm:$0xff] %vm1532, %v1491
        %1561 = vst.msk [vmem:[#allocation3 + $0x2a0] sm:$0xff] %vm1532, %v1493
        %1562 = vst.msk [vmem:[#allocation3 + $0x2b8] sm:$0xff] %vm1532, %v1495
        %1563 = vst.msk [vmem:[#allocation3 + $0x2d0] sm:$0xff] %vm1532, %v1497
        %1564 = vst.msk [vmem:[#allocation3 + $0x2e8] sm:$0xff] %vm1532, %v1499
        %s1565 = scalar_lea.vmem [#allocation2], 16
        %v1566 = vld [vmem:[%s1565] sm:$0xff]
        %v1567 = vld [vmem:[%s1565 + $0x10] sm:$0xff]
        %v1568 = vld [vmem:[%s1565 + $0x20] sm:$0xff]
        %v1569 = vld [vmem:[%s1565 + $0x30] sm:$0xff]
        %v1570 = vld [vmem:[%s1565 + $0x40] sm:$0xff]
        %v1571 = vld [vmem:[%s1565 + $0x50] sm:$0xff]
        %v1572 = vld [vmem:[%s1565 + $0x60] sm:$0xff]
        %v1573 = vld [vmem:[%s1565 + $0x70] sm:$0xff]
        %v1574 = vld [vmem:[%s1565 + $0xa0] sm:$0xff]
        %v1575 = vld [vmem:[%s1565 + $0xb0] sm:$0xff]
        %v1576 = vld [vmem:[%s1565 + $0xc0] sm:$0xff]
        %v1577 = vld [vmem:[%s1565 + $0xd0] sm:$0xff]
        %v1578 = vld [vmem:[%s1565 + $0xe0] sm:$0xff]
        %v1579 = vld [vmem:[%s1565 + $0xf0] sm:$0xff]
        %v1580 = vld [vmem:[%s1565 + $0x100] sm:$0xff]
        %v1581 = vld [vmem:[%s1565 + $0x110] sm:$0xff]
        %v1582 = vld [vmem:[%s1565 + $0x140] sm:$0xff]
        %v1583 = vld [vmem:[%s1565 + $0x150] sm:$0xff]
        %v1584 = vld [vmem:[%s1565 + $0x160] sm:$0xff]
        %v1585 = vld [vmem:[%s1565 + $0x170] sm:$0xff]
        %v1586 = vld [vmem:[%s1565 + $0x180] sm:$0xff]
        %v1587 = vld [vmem:[%s1565 + $0x190] sm:$0xff]
        %v1588 = vld [vmem:[%s1565 + $0x1a0] sm:$0xff]
        %v1589 = vld [vmem:[%s1565 + $0x1b0] sm:$0xff]
        %v1590 = vld [vmem:[%s1565 + $0x1e0] sm:$0xff]
        %v1591 = vld [vmem:[%s1565 + $0x1f0] sm:$0xff]
        %v1592 = vld [vmem:[%s1565 + $0x200] sm:$0xff]
        %v1593 = vld [vmem:[%s1565 + $0x210] sm:$0xff]
        %v1594 = vld [vmem:[%s1565 + $0x220] sm:$0xff]
        %v1595 = vld [vmem:[%s1565 + $0x230] sm:$0xff]
        %v1596 = vld [vmem:[%s1565 + $0x240] sm:$0xff]
        %v1597 = vld [vmem:[%s1565 + $0x250] sm:$0xff]
        %1630 = vrot.lane.b32.xlu0 %v1566, 96
        %v1631 = vpop.permute.xlu0 %1630
        %1632 = vrot.lane.b32.xlu0 %v1567, 96
        %v1633 = vpop.permute.xlu0 %1632
        %1634 = vrot.lane.b32.xlu0 %v1568, 96
        %v1635 = vpop.permute.xlu0 %1634
        %1636 = vrot.lane.b32.xlu0 %v1569, 96
        %v1637 = vpop.permute.xlu0 %1636
        %1638 = vrot.lane.b32.xlu0 %v1570, 96
        %v1639 = vpop.permute.xlu0 %1638
        %1640 = vrot.lane.b32.xlu0 %v1571, 96
        %v1641 = vpop.permute.xlu0 %1640
        %1642 = vrot.lane.b32.xlu0 %v1572, 96
        %v1643 = vpop.permute.xlu0 %1642
        %1644 = vrot.lane.b32.xlu0 %v1573, 96
        %v1645 = vpop.permute.xlu0 %1644
        %1646 = vrot.lane.b32.xlu0 %v1574, 96
        %v1647 = vpop.permute.xlu0 %1646
        %1648 = vrot.lane.b32.xlu0 %v1575, 96
        %v1649 = vpop.permute.xlu0 %1648
        %1650 = vrot.lane.b32.xlu0 %v1576, 96
        %v1651 = vpop.permute.xlu0 %1650
        %1652 = vrot.lane.b32.xlu0 %v1577, 96
        %v1653 = vpop.permute.xlu0 %1652
        %1654 = vrot.lane.b32.xlu0 %v1578, 96
        %v1655 = vpop.permute.xlu0 %1654
        %1656 = vrot.lane.b32.xlu0 %v1579, 96
        %v1657 = vpop.permute.xlu0 %1656
        %1658 = vrot.lane.b32.xlu0 %v1580, 96
        %v1659 = vpop.permute.xlu0 %1658
        %1660 = vrot.lane.b32.xlu0 %v1581, 96
        %v1661 = vpop.permute.xlu0 %1660
        %1662 = vrot.lane.b32.xlu0 %v1582, 96
        %v1663 = vpop.permute.xlu0 %1662
        %1664 = vrot.lane.b32.xlu0 %v1583, 96
        %v1665 = vpop.permute.xlu0 %1664
        %1666 = vrot.lane.b32.xlu0 %v1584, 96
        %v1667 = vpop.permute.xlu0 %1666
        %1668 = vrot.lane.b32.xlu0 %v1585, 96
        %v1669 = vpop.permute.xlu0 %1668
        %1670 = vrot.lane.b32.xlu0 %v1586, 96
        %v1671 = vpop.permute.xlu0 %1670
        %1672 = vrot.lane.b32.xlu0 %v1587, 96
        %v1673 = vpop.permute.xlu0 %1672
        %1674 = vrot.lane.b32.xlu0 %v1588, 96
        %v1675 = vpop.permute.xlu0 %1674
        %1676 = vrot.lane.b32.xlu0 %v1589, 96
        %v1677 = vpop.permute.xlu0 %1676
        %1678 = vrot.lane.b32.xlu0 %v1590, 96
        %v1679 = vpop.permute.xlu0 %1678
        %1680 = vrot.lane.b32.xlu0 %v1591, 96
        %v1681 = vpop.permute.xlu0 %1680
        %1682 = vrot.lane.b32.xlu0 %v1592, 96
        %v1683 = vpop.permute.xlu0 %1682
        %1684 = vrot.lane.b32.xlu0 %v1593, 96
        %v1685 = vpop.permute.xlu0 %1684
        %1686 = vrot.lane.b32.xlu0 %v1594, 96
        %v1687 = vpop.permute.xlu0 %1686
        %1688 = vrot.lane.b32.xlu0 %v1595, 96
        %v1689 = vpop.permute.xlu0 %1688
        %1690 = vrot.lane.b32.xlu0 %v1596, 96
        %v1691 = vpop.permute.xlu0 %1690
        %1692 = vrot.lane.b32.xlu0 %v1597, 96
        %v1693 = vpop.permute.xlu0 %1692
        %vm1726 = vcmask 1048320
        %1727 = vst.msk [vmem:[#allocation3] sm:$0xff] %vm1726, %v1631
        %1728 = vst.msk [vmem:[#allocation3 + $0x18] sm:$0xff] %vm1726, %v1633
        %1729 = vst.msk [vmem:[#allocation3 + $0x30] sm:$0xff] %vm1726, %v1635
        %1730 = vst.msk [vmem:[#allocation3 + $0x48] sm:$0xff] %vm1726, %v1637
        %1731 = vst.msk [vmem:[#allocation3 + $0x60] sm:$0xff] %vm1726, %v1639
        %1732 = vst.msk [vmem:[#allocation3 + $0x78] sm:$0xff] %vm1726, %v1641
        %1733 = vst.msk [vmem:[#allocation3 + $0x90] sm:$0xff] %vm1726, %v1643
        %1734 = vst.msk [vmem:[#allocation3 + $0xa8] sm:$0xff] %vm1726, %v1645
        %1735 = vst.msk [vmem:[#allocation3 + $0xc0] sm:$0xff] %vm1726, %v1647
        %1736 = vst.msk [vmem:[#allocation3 + $0xd8] sm:$0xff] %vm1726, %v1649
        %1737 = vst.msk [vmem:[#allocation3 + $0xf0] sm:$0xff] %vm1726, %v1651
        %1738 = vst.msk [vmem:[#allocation3 + $0x108] sm:$0xff] %vm1726, %v1653
        %1739 = vst.msk [vmem:[#allocation3 + $0x120] sm:$0xff] %vm1726, %v1655
        %1740 = vst.msk [vmem:[#allocation3 + $0x138] sm:$0xff] %vm1726, %v1657
        %1741 = vst.msk [vmem:[#allocation3 + $0x150] sm:$0xff] %vm1726, %v1659
        %1742 = vst.msk [vmem:[#allocation3 + $0x168] sm:$0xff] %vm1726, %v1661
        %1743 = vst.msk [vmem:[#allocation3 + $0x180] sm:$0xff] %vm1726, %v1663
        %1744 = vst.msk [vmem:[#allocation3 + $0x198] sm:$0xff] %vm1726, %v1665
        %1745 = vst.msk [vmem:[#allocation3 + $0x1b0] sm:$0xff] %vm1726, %v1667
        %1746 = vst.msk [vmem:[#allocation3 + $0x1c8] sm:$0xff] %vm1726, %v1669
        %1747 = vst.msk [vmem:[#allocation3 + $0x1e0] sm:$0xff] %vm1726, %v1671
        %1748 = vst.msk [vmem:[#allocation3 + $0x1f8] sm:$0xff] %vm1726, %v1673
        %1749 = vst.msk [vmem:[#allocation3 + $0x210] sm:$0xff] %vm1726, %v1675
        %1750 = vst.msk [vmem:[#allocation3 + $0x228] sm:$0xff] %vm1726, %v1677
        %1751 = vst.msk [vmem:[#allocation3 + $0x240] sm:$0xff] %vm1726, %v1679
        %1752 = vst.msk [vmem:[#allocation3 + $0x258] sm:$0xff] %vm1726, %v1681
        %1753 = vst.msk [vmem:[#allocation3 + $0x270] sm:$0xff] %vm1726, %v1683
        %1754 = vst.msk [vmem:[#allocation3 + $0x288] sm:$0xff] %vm1726, %v1685
        %1755 = vst.msk [vmem:[#allocation3 + $0x2a0] sm:$0xff] %vm1726, %v1687
        %1756 = vst.msk [vmem:[#allocation3 + $0x2b8] sm:$0xff] %vm1726, %v1689
        %1757 = vst.msk [vmem:[#allocation3 + $0x2d0] sm:$0xff] %vm1726, %v1691
        %1758 = vst.msk [vmem:[#allocation3 + $0x2e8] sm:$0xff] %vm1726, %v1693
        %v1759 = vld [vmem:[%s1565 + $0x1] sm:$0xff]
        %v1760 = vld [vmem:[%s1565 + $0x11] sm:$0xff]
        %v1761 = vld [vmem:[%s1565 + $0x21] sm:$0xff]
        %v1762 = vld [vmem:[%s1565 + $0x31] sm:$0xff]
        %v1763 = vld [vmem:[%s1565 + $0x41] sm:$0xff]
        %v1764 = vld [vmem:[%s1565 + $0x51] sm:$0xff]
        %v1765 = vld [vmem:[%s1565 + $0x61] sm:$0xff]
        %v1766 = vld [vmem:[%s1565 + $0x71] sm:$0xff]
        %v1767 = vld [vmem:[%s1565 + $0xa1] sm:$0xff]
        %v1768 = vld [vmem:[%s1565 + $0xb1] sm:$0xff]
        %v1769 = vld [vmem:[%s1565 + $0xc1] sm:$0xff]
        %v1770 = vld [vmem:[%s1565 + $0xd1] sm:$0xff]
        %v1771 = vld [vmem:[%s1565 + $0xe1] sm:$0xff]
        %v1772 = vld [vmem:[%s1565 + $0xf1] sm:$0xff]
        %v1773 = vld [vmem:[%s1565 + $0x101] sm:$0xff]
        %v1774 = vld [vmem:[%s1565 + $0x111] sm:$0xff]
        %v1775 = vld [vmem:[%s1565 + $0x141] sm:$0xff]
        %v1776 = vld [vmem:[%s1565 + $0x151] sm:$0xff]
        %v1777 = vld [vmem:[%s1565 + $0x161] sm:$0xff]
        %v1778 = vld [vmem:[%s1565 + $0x171] sm:$0xff]
        %v1779 = vld [vmem:[%s1565 + $0x181] sm:$0xff]
        %v1780 = vld [vmem:[%s1565 + $0x191] sm:$0xff]
        %v1781 = vld [vmem:[%s1565 + $0x1a1] sm:$0xff]
        %v1782 = vld [vmem:[%s1565 + $0x1b1] sm:$0xff]
        %v1783 = vld [vmem:[%s1565 + $0x1e1] sm:$0xff]
        %v1784 = vld [vmem:[%s1565 + $0x1f1] sm:$0xff]
        %v1785 = vld [vmem:[%s1565 + $0x201] sm:$0xff]
        %v1786 = vld [vmem:[%s1565 + $0x211] sm:$0xff]
        %v1787 = vld [vmem:[%s1565 + $0x221] sm:$0xff]
        %v1788 = vld [vmem:[%s1565 + $0x231] sm:$0xff]
        %v1789 = vld [vmem:[%s1565 + $0x241] sm:$0xff]
        %v1790 = vld [vmem:[%s1565 + $0x251] sm:$0xff]
        %1791 = vst.msk [vmem:[#allocation3 + $0x8] sm:$0xff] %vm504, %v1759
        %1792 = vst.msk [vmem:[#allocation3 + $0x20] sm:$0xff] %vm504, %v1760
        %1793 = vst.msk [vmem:[#allocation3 + $0x38] sm:$0xff] %vm504, %v1761
        %1794 = vst.msk [vmem:[#allocation3 + $0x50] sm:$0xff] %vm504, %v1762
        %1795 = vst.msk [vmem:[#allocation3 + $0x68] sm:$0xff] %vm504, %v1763
        %1796 = vst.msk [vmem:[#allocation3 + $0x80] sm:$0xff] %vm504, %v1764
        %1797 = vst.msk [vmem:[#allocation3 + $0x98] sm:$0xff] %vm504, %v1765
        %1798 = vst.msk [vmem:[#allocation3 + $0xb0] sm:$0xff] %vm504, %v1766
        %1799 = vst.msk [vmem:[#allocation3 + $0xc8] sm:$0xff] %vm504, %v1767
        %1800 = vst.msk [vmem:[#allocation3 + $0xe0] sm:$0xff] %vm504, %v1768
        %1801 = vst.msk [vmem:[#allocation3 + $0xf8] sm:$0xff] %vm504, %v1769
        %1802 = vst.msk [vmem:[#allocation3 + $0x110] sm:$0xff] %vm504, %v1770
        %1803 = vst.msk [vmem:[#allocation3 + $0x128] sm:$0xff] %vm504, %v1771
        %1804 = vst.msk [vmem:[#allocation3 + $0x140] sm:$0xff] %vm504, %v1772
        %1805 = vst.msk [vmem:[#allocation3 + $0x158] sm:$0xff] %vm504, %v1773
        %1806 = vst.msk [vmem:[#allocation3 + $0x170] sm:$0xff] %vm504, %v1774
        %1807 = vst.msk [vmem:[#allocation3 + $0x188] sm:$0xff] %vm504, %v1775
        %1808 = vst.msk [vmem:[#allocation3 + $0x1a0] sm:$0xff] %vm504, %v1776
        %1809 = vst.msk [vmem:[#allocation3 + $0x1b8] sm:$0xff] %vm504, %v1777
        %1810 = vst.msk [vmem:[#allocation3 + $0x1d0] sm:$0xff] %vm504, %v1778
        %1811 = vst.msk [vmem:[#allocation3 + $0x1e8] sm:$0xff] %vm504, %v1779
        %1812 = vst.msk [vmem:[#allocation3 + $0x200] sm:$0xff] %vm504, %v1780
        %1813 = vst.msk [vmem:[#allocation3 + $0x218] sm:$0xff] %vm504, %v1781
        %1814 = vst.msk [vmem:[#allocation3 + $0x230] sm:$0xff] %vm504, %v1782
        %1815 = vst.msk [vmem:[#allocation3 + $0x248] sm:$0xff] %vm504, %v1783
        %1816 = vst.msk [vmem:[#allocation3 + $0x260] sm:$0xff] %vm504, %v1784
        %1817 = vst.msk [vmem:[#allocation3 + $0x278] sm:$0xff] %vm504, %v1785
        %1818 = vst.msk [vmem:[#allocation3 + $0x290] sm:$0xff] %vm504, %v1786
        %1819 = vst.msk [vmem:[#allocation3 + $0x2a8] sm:$0xff] %vm504, %v1787
        %1820 = vst.msk [vmem:[#allocation3 + $0x2c0] sm:$0xff] %vm504, %v1788
        %1821 = vst.msk [vmem:[#allocation3 + $0x2d8] sm:$0xff] %vm504, %v1789
        %1822 = vst.msk [vmem:[#allocation3 + $0x2f0] sm:$0xff] %vm504, %v1790
        %v1823 = vld [vmem:[%s1565 + $0x2] sm:$0xff]
        %v1824 = vld [vmem:[%s1565 + $0x12] sm:$0xff]
        %v1825 = vld [vmem:[%s1565 + $0x22] sm:$0xff]
        %v1826 = vld [vmem:[%s1565 + $0x32] sm:$0xff]
        %v1827 = vld [vmem:[%s1565 + $0x42] sm:$0xff]
        %v1828 = vld [vmem:[%s1565 + $0x52] sm:$0xff]
        %v1829 = vld [vmem:[%s1565 + $0x62] sm:$0xff]
        %v1830 = vld [vmem:[%s1565 + $0x72] sm:$0xff]
        %v1831 = vld [vmem:[%s1565 + $0xa2] sm:$0xff]
        %v1832 = vld [vmem:[%s1565 + $0xb2] sm:$0xff]
        %v1833 = vld [vmem:[%s1565 + $0xc2] sm:$0xff]
        %v1834 = vld [vmem:[%s1565 + $0xd2] sm:$0xff]
        %v1835 = vld [vmem:[%s1565 + $0xe2] sm:$0xff]
        %v1836 = vld [vmem:[%s1565 + $0xf2] sm:$0xff]
        %v1837 = vld [vmem:[%s1565 + $0x102] sm:$0xff]
        %v1838 = vld [vmem:[%s1565 + $0x112] sm:$0xff]
        %v1839 = vld [vmem:[%s1565 + $0x142] sm:$0xff]
        %v1840 = vld [vmem:[%s1565 + $0x152] sm:$0xff]
        %v1841 = vld [vmem:[%s1565 + $0x162] sm:$0xff]
        %v1842 = vld [vmem:[%s1565 + $0x172] sm:$0xff]
        %v1843 = vld [vmem:[%s1565 + $0x182] sm:$0xff]
        %v1844 = vld [vmem:[%s1565 + $0x192] sm:$0xff]
        %v1845 = vld [vmem:[%s1565 + $0x1a2] sm:$0xff]
        %v1846 = vld [vmem:[%s1565 + $0x1b2] sm:$0xff]
        %v1847 = vld [vmem:[%s1565 + $0x1e2] sm:$0xff]
        %v1848 = vld [vmem:[%s1565 + $0x1f2] sm:$0xff]
        %v1849 = vld [vmem:[%s1565 + $0x202] sm:$0xff]
        %v1850 = vld [vmem:[%s1565 + $0x212] sm:$0xff]
        %v1851 = vld [vmem:[%s1565 + $0x222] sm:$0xff]
        %v1852 = vld [vmem:[%s1565 + $0x232] sm:$0xff]
        %v1853 = vld [vmem:[%s1565 + $0x242] sm:$0xff]
        %v1854 = vld [vmem:[%s1565 + $0x252] sm:$0xff]
        %1887 = vrot.lane.b32.xlu0 %v1823, 32
        %v1888 = vpop.permute.xlu0 %1887
        %1889 = vrot.lane.b32.xlu0 %v1824, 32
        %v1890 = vpop.permute.xlu0 %1889
        %1891 = vrot.lane.b32.xlu0 %v1825, 32
        %v1892 = vpop.permute.xlu0 %1891
        %1893 = vrot.lane.b32.xlu0 %v1826, 32
        %v1894 = vpop.permute.xlu0 %1893
        %1895 = vrot.lane.b32.xlu0 %v1827, 32
        %v1896 = vpop.permute.xlu0 %1895
        %1897 = vrot.lane.b32.xlu0 %v1828, 32
        %v1898 = vpop.permute.xlu0 %1897
        %1899 = vrot.lane.b32.xlu0 %v1829, 32
        %v1900 = vpop.permute.xlu0 %1899
        %1901 = vrot.lane.b32.xlu0 %v1830, 32
        %v1902 = vpop.permute.xlu0 %1901
        %1903 = vrot.lane.b32.xlu0 %v1831, 32
        %v1904 = vpop.permute.xlu0 %1903
        %1905 = vrot.lane.b32.xlu0 %v1832, 32
        %v1906 = vpop.permute.xlu0 %1905
        %1907 = vrot.lane.b32.xlu0 %v1833, 32
        %v1908 = vpop.permute.xlu0 %1907
        %1909 = vrot.lane.b32.xlu0 %v1834, 32
        %v1910 = vpop.permute.xlu0 %1909
        %1911 = vrot.lane.b32.xlu0 %v1835, 32
        %v1912 = vpop.permute.xlu0 %1911
        %1913 = vrot.lane.b32.xlu0 %v1836, 32
        %v1914 = vpop.permute.xlu0 %1913
        %1915 = vrot.lane.b32.xlu0 %v1837, 32
        %v1916 = vpop.permute.xlu0 %1915
        %1917 = vrot.lane.b32.xlu0 %v1838, 32
        %v1918 = vpop.permute.xlu0 %1917
        %1919 = vrot.lane.b32.xlu0 %v1839, 32
        %v1920 = vpop.permute.xlu0 %1919
        %1921 = vrot.lane.b32.xlu0 %v1840, 32
        %v1922 = vpop.permute.xlu0 %1921
        %1923 = vrot.lane.b32.xlu0 %v1841, 32
        %v1924 = vpop.permute.xlu0 %1923
        %1925 = vrot.lane.b32.xlu0 %v1842, 32
        %v1926 = vpop.permute.xlu0 %1925
        %1927 = vrot.lane.b32.xlu0 %v1843, 32
        %v1928 = vpop.permute.xlu0 %1927
        %1929 = vrot.lane.b32.xlu0 %v1844, 32
        %v1930 = vpop.permute.xlu0 %1929
        %1931 = vrot.lane.b32.xlu0 %v1845, 32
        %v1932 = vpop.permute.xlu0 %1931
        %1933 = vrot.lane.b32.xlu0 %v1846, 32
        %v1934 = vpop.permute.xlu0 %1933
        %1935 = vrot.lane.b32.xlu0 %v1847, 32
        %v1936 = vpop.permute.xlu0 %1935
        %1937 = vrot.lane.b32.xlu0 %v1848, 32
        %v1938 = vpop.permute.xlu0 %1937
        %1939 = vrot.lane.b32.xlu0 %v1849, 32
        %v1940 = vpop.permute.xlu0 %1939
        %1941 = vrot.lane.b32.xlu0 %v1850, 32
        %v1942 = vpop.permute.xlu0 %1941
        %1943 = vrot.lane.b32.xlu0 %v1851, 32
        %v1944 = vpop.permute.xlu0 %1943
        %1945 = vrot.lane.b32.xlu0 %v1852, 32
        %v1946 = vpop.permute.xlu0 %1945
        %1947 = vrot.lane.b32.xlu0 %v1853, 32
        %v1948 = vpop.permute.xlu0 %1947
        %1949 = vrot.lane.b32.xlu0 %v1854, 32
        %v1950 = vpop.permute.xlu0 %1949
        %1983 = vst.msk [vmem:[#allocation3 + $0x8] sm:$0xff] %vm1339, %v1888
        %1984 = vst.msk [vmem:[#allocation3 + $0x20] sm:$0xff] %vm1339, %v1890
        %1985 = vst.msk [vmem:[#allocation3 + $0x38] sm:$0xff] %vm1339, %v1892
        %1986 = vst.msk [vmem:[#allocation3 + $0x50] sm:$0xff] %vm1339, %v1894
        %1987 = vst.msk [vmem:[#allocation3 + $0x68] sm:$0xff] %vm1339, %v1896
        %1988 = vst.msk [vmem:[#allocation3 + $0x80] sm:$0xff] %vm1339, %v1898
        %1989 = vst.msk [vmem:[#allocation3 + $0x98] sm:$0xff] %vm1339, %v1900
        %1990 = vst.msk [vmem:[#allocation3 + $0xb0] sm:$0xff] %vm1339, %v1902
        %1991 = vst.msk [vmem:[#allocation3 + $0xc8] sm:$0xff] %vm1339, %v1904
        %1992 = vst.msk [vmem:[#allocation3 + $0xe0] sm:$0xff] %vm1339, %v1906
        %1993 = vst.msk [vmem:[#allocation3 + $0xf8] sm:$0xff] %vm1339, %v1908
        %1994 = vst.msk [vmem:[#allocation3 + $0x110] sm:$0xff] %vm1339, %v1910
        %1995 = vst.msk [vmem:[#allocation3 + $0x128] sm:$0xff] %vm1339, %v1912
        %1996 = vst.msk [vmem:[#allocation3 + $0x140] sm:$0xff] %vm1339, %v1914
        %1997 = vst.msk [vmem:[#allocation3 + $0x158] sm:$0xff] %vm1339, %v1916
        %1998 = vst.msk [vmem:[#allocation3 + $0x170] sm:$0xff] %vm1339, %v1918
        %1999 = vst.msk [vmem:[#allocation3 + $0x188] sm:$0xff] %vm1339, %v1920
        %2000 = vst.msk [vmem:[#allocation3 + $0x1a0] sm:$0xff] %vm1339, %v1922
        %2001 = vst.msk [vmem:[#allocation3 + $0x1b8] sm:$0xff] %vm1339, %v1924
        %2002 = vst.msk [vmem:[#allocation3 + $0x1d0] sm:$0xff] %vm1339, %v1926
        %2003 = vst.msk [vmem:[#allocation3 + $0x1e8] sm:$0xff] %vm1339, %v1928
        %2004 = vst.msk [vmem:[#allocation3 + $0x200] sm:$0xff] %vm1339, %v1930
        %2005 = vst.msk [vmem:[#allocation3 + $0x218] sm:$0xff] %vm1339, %v1932
        %2006 = vst.msk [vmem:[#allocation3 + $0x230] sm:$0xff] %vm1339, %v1934
        %2007 = vst.msk [vmem:[#allocation3 + $0x248] sm:$0xff] %vm1339, %v1936
        %2008 = vst.msk [vmem:[#allocation3 + $0x260] sm:$0xff] %vm1339, %v1938
        %2009 = vst.msk [vmem:[#allocation3 + $0x278] sm:$0xff] %vm1339, %v1940
        %2010 = vst.msk [vmem:[#allocation3 + $0x290] sm:$0xff] %vm1339, %v1942
        %2011 = vst.msk [vmem:[#allocation3 + $0x2a8] sm:$0xff] %vm1339, %v1944
        %2012 = vst.msk [vmem:[#allocation3 + $0x2c0] sm:$0xff] %vm1339, %v1946
        %2013 = vst.msk [vmem:[#allocation3 + $0x2d8] sm:$0xff] %vm1339, %v1948
        %2014 = vst.msk [vmem:[#allocation3 + $0x2f0] sm:$0xff] %vm1339, %v1950
        %s2015 = scalar_lea.vmem [#allocation2], 32
        %v2016 = vld [vmem:[%s2015] sm:$0xff]
        %v2017 = vld [vmem:[%s2015 + $0x10] sm:$0xff]
        %v2018 = vld [vmem:[%s2015 + $0x20] sm:$0xff]
        %v2019 = vld [vmem:[%s2015 + $0x30] sm:$0xff]
        %v2020 = vld [vmem:[%s2015 + $0x40] sm:$0xff]
        %v2021 = vld [vmem:[%s2015 + $0x50] sm:$0xff]
        %v2022 = vld [vmem:[%s2015 + $0x60] sm:$0xff]
        %v2023 = vld [vmem:[%s2015 + $0x70] sm:$0xff]
        %v2024 = vld [vmem:[%s2015 + $0xa0] sm:$0xff]
        %v2025 = vld [vmem:[%s2015 + $0xb0] sm:$0xff]
        %v2026 = vld [vmem:[%s2015 + $0xc0] sm:$0xff]
        %v2027 = vld [vmem:[%s2015 + $0xd0] sm:$0xff]
        %v2028 = vld [vmem:[%s2015 + $0xe0] sm:$0xff]
        %v2029 = vld [vmem:[%s2015 + $0xf0] sm:$0xff]
        %v2030 = vld [vmem:[%s2015 + $0x100] sm:$0xff]
        %v2031 = vld [vmem:[%s2015 + $0x110] sm:$0xff]
        %v2032 = vld [vmem:[%s2015 + $0x140] sm:$0xff]
        %v2033 = vld [vmem:[%s2015 + $0x150] sm:$0xff]
        %v2034 = vld [vmem:[%s2015 + $0x160] sm:$0xff]
        %v2035 = vld [vmem:[%s2015 + $0x170] sm:$0xff]
        %v2036 = vld [vmem:[%s2015 + $0x180] sm:$0xff]
        %v2037 = vld [vmem:[%s2015 + $0x190] sm:$0xff]
        %v2038 = vld [vmem:[%s2015 + $0x1a0] sm:$0xff]
        %v2039 = vld [vmem:[%s2015 + $0x1b0] sm:$0xff]
        %v2040 = vld [vmem:[%s2015 + $0x1e0] sm:$0xff]
        %v2041 = vld [vmem:[%s2015 + $0x1f0] sm:$0xff]
        %v2042 = vld [vmem:[%s2015 + $0x200] sm:$0xff]
        %v2043 = vld [vmem:[%s2015 + $0x210] sm:$0xff]
        %v2044 = vld [vmem:[%s2015 + $0x220] sm:$0xff]
        %v2045 = vld [vmem:[%s2015 + $0x230] sm:$0xff]
        %v2046 = vld [vmem:[%s2015 + $0x240] sm:$0xff]
        %v2047 = vld [vmem:[%s2015 + $0x250] sm:$0xff]
        %2080 = vrot.lane.b32.xlu0 %v2016, 64
        %v2081 = vpop.permute.xlu0 %2080
        %2082 = vrot.lane.b32.xlu0 %v2017, 64
        %v2083 = vpop.permute.xlu0 %2082
        %2084 = vrot.lane.b32.xlu0 %v2018, 64
        %v2085 = vpop.permute.xlu0 %2084
        %2086 = vrot.lane.b32.xlu0 %v2019, 64
        %v2087 = vpop.permute.xlu0 %2086
        %2088 = vrot.lane.b32.xlu0 %v2020, 64
        %v2089 = vpop.permute.xlu0 %2088
        %2090 = vrot.lane.b32.xlu0 %v2021, 64
        %v2091 = vpop.permute.xlu0 %2090
        %2092 = vrot.lane.b32.xlu0 %v2022, 64
        %v2093 = vpop.permute.xlu0 %2092
        %2094 = vrot.lane.b32.xlu0 %v2023, 64
        %v2095 = vpop.permute.xlu0 %2094
        %2096 = vrot.lane.b32.xlu0 %v2024, 64
        %v2097 = vpop.permute.xlu0 %2096
        %2098 = vrot.lane.b32.xlu0 %v2025, 64
        %v2099 = vpop.permute.xlu0 %2098
        %2100 = vrot.lane.b32.xlu0 %v2026, 64
        %v2101 = vpop.permute.xlu0 %2100
        %2102 = vrot.lane.b32.xlu0 %v2027, 64
        %v2103 = vpop.permute.xlu0 %2102
        %2104 = vrot.lane.b32.xlu0 %v2028, 64
        %v2105 = vpop.permute.xlu0 %2104
        %2106 = vrot.lane.b32.xlu0 %v2029, 64
        %v2107 = vpop.permute.xlu0 %2106
        %2108 = vrot.lane.b32.xlu0 %v2030, 64
        %v2109 = vpop.permute.xlu0 %2108
        %2110 = vrot.lane.b32.xlu0 %v2031, 64
        %v2111 = vpop.permute.xlu0 %2110
        %2112 = vrot.lane.b32.xlu0 %v2032, 64
        %v2113 = vpop.permute.xlu0 %2112
        %2114 = vrot.lane.b32.xlu0 %v2033, 64
        %v2115 = vpop.permute.xlu0 %2114
        %2116 = vrot.lane.b32.xlu0 %v2034, 64
        %v2117 = vpop.permute.xlu0 %2116
        %2118 = vrot.lane.b32.xlu0 %v2035, 64
        %v2119 = vpop.permute.xlu0 %2118
        %2120 = vrot.lane.b32.xlu0 %v2036, 64
        %v2121 = vpop.permute.xlu0 %2120
        %2122 = vrot.lane.b32.xlu0 %v2037, 64
        %v2123 = vpop.permute.xlu0 %2122
        %2124 = vrot.lane.b32.xlu0 %v2038, 64
        %v2125 = vpop.permute.xlu0 %2124
        %2126 = vrot.lane.b32.xlu0 %v2039, 64
        %v2127 = vpop.permute.xlu0 %2126
        %2128 = vrot.lane.b32.xlu0 %v2040, 64
        %v2129 = vpop.permute.xlu0 %2128
        %2130 = vrot.lane.b32.xlu0 %v2041, 64
        %v2131 = vpop.permute.xlu0 %2130
        %2132 = vrot.lane.b32.xlu0 %v2042, 64
        %v2133 = vpop.permute.xlu0 %2132
        %2134 = vrot.lane.b32.xlu0 %v2043, 64
        %v2135 = vpop.permute.xlu0 %2134
        %2136 = vrot.lane.b32.xlu0 %v2044, 64
        %v2137 = vpop.permute.xlu0 %2136
        %2138 = vrot.lane.b32.xlu0 %v2045, 64
        %v2139 = vpop.permute.xlu0 %2138
        %2140 = vrot.lane.b32.xlu0 %v2046, 64
        %v2141 = vpop.permute.xlu0 %2140
        %2142 = vrot.lane.b32.xlu0 %v2047, 64
        %v2143 = vpop.permute.xlu0 %2142
        %2176 = vst.msk [vmem:[#allocation3 + $0x8] sm:$0xff] %vm1532, %v2081
        %2177 = vst.msk [vmem:[#allocation3 + $0x20] sm:$0xff] %vm1532, %v2083
        %2178 = vst.msk [vmem:[#allocation3 + $0x38] sm:$0xff] %vm1532, %v2085
        %2179 = vst.msk [vmem:[#allocation3 + $0x50] sm:$0xff] %vm1532, %v2087
        %2180 = vst.msk [vmem:[#allocation3 + $0x68] sm:$0xff] %vm1532, %v2089
        %2181 = vst.msk [vmem:[#allocation3 + $0x80] sm:$0xff] %vm1532, %v2091
        %2182 = vst.msk [vmem:[#allocation3 + $0x98] sm:$0xff] %vm1532, %v2093
        %2183 = vst.msk [vmem:[#allocation3 + $0xb0] sm:$0xff] %vm1532, %v2095
        %2184 = vst.msk [vmem:[#allocation3 + $0xc8] sm:$0xff] %vm1532, %v2097
        %2185 = vst.msk [vmem:[#allocation3 + $0xe0] sm:$0xff] %vm1532, %v2099
        %2186 = vst.msk [vmem:[#allocation3 + $0xf8] sm:$0xff] %vm1532, %v2101
        %2187 = vst.msk [vmem:[#allocation3 + $0x110] sm:$0xff] %vm1532, %v2103
        %2188 = vst.msk [vmem:[#allocation3 + $0x128] sm:$0xff] %vm1532, %v2105
        %2189 = vst.msk [vmem:[#allocation3 + $0x140] sm:$0xff] %vm1532, %v2107
        %2190 = vst.msk [vmem:[#allocation3 + $0x158] sm:$0xff] %vm1532, %v2109
        %2191 = vst.msk [vmem:[#allocation3 + $0x170] sm:$0xff] %vm1532, %v2111
        %2192 = vst.msk [vmem:[#allocation3 + $0x188] sm:$0xff] %vm1532, %v2113
        %2193 = vst.msk [vmem:[#allocation3 + $0x1a0] sm:$0xff] %vm1532, %v2115
        %2194 = vst.msk [vmem:[#allocation3 + $0x1b8] sm:$0xff] %vm1532, %v2117
        %2195 = vst.msk [vmem:[#allocation3 + $0x1d0] sm:$0xff] %vm1532, %v2119
        %2196 = vst.msk [vmem:[#allocation3 + $0x1e8] sm:$0xff] %vm1532, %v2121
        %2197 = vst.msk [vmem:[#allocation3 + $0x200] sm:$0xff] %vm1532, %v2123
        %2198 = vst.msk [vmem:[#allocation3 + $0x218] sm:$0xff] %vm1532, %v2125
        %2199 = vst.msk [vmem:[#allocation3 + $0x230] sm:$0xff] %vm1532, %v2127
        %2200 = vst.msk [vmem:[#allocation3 + $0x248] sm:$0xff] %vm1532, %v2129
        %2201 = vst.msk [vmem:[#allocation3 + $0x260] sm:$0xff] %vm1532, %v2131
        %2202 = vst.msk [vmem:[#allocation3 + $0x278] sm:$0xff] %vm1532, %v2133
        %2203 = vst.msk [vmem:[#allocation3 + $0x290] sm:$0xff] %vm1532, %v2135
        %2204 = vst.msk [vmem:[#allocation3 + $0x2a8] sm:$0xff] %vm1532, %v2137
        %2205 = vst.msk [vmem:[#allocation3 + $0x2c0] sm:$0xff] %vm1532, %v2139
        %2206 = vst.msk [vmem:[#allocation3 + $0x2d8] sm:$0xff] %vm1532, %v2141
        %2207 = vst.msk [vmem:[#allocation3 + $0x2f0] sm:$0xff] %vm1532, %v2143
        %v2208 = vld [vmem:[%s2015 + $0x1] sm:$0xff]
        %v2209 = vld [vmem:[%s2015 + $0x11] sm:$0xff]
        %v2210 = vld [vmem:[%s2015 + $0x21] sm:$0xff]
        %v2211 = vld [vmem:[%s2015 + $0x31] sm:$0xff]
        %v2212 = vld [vmem:[%s2015 + $0x41] sm:$0xff]
        %v2213 = vld [vmem:[%s2015 + $0x51] sm:$0xff]
        %v2214 = vld [vmem:[%s2015 + $0x61] sm:$0xff]
        %v2215 = vld [vmem:[%s2015 + $0x71] sm:$0xff]
        %v2216 = vld [vmem:[%s2015 + $0xa1] sm:$0xff]
        %v2217 = vld [vmem:[%s2015 + $0xb1] sm:$0xff]
        %v2218 = vld [vmem:[%s2015 + $0xc1] sm:$0xff]
        %v2219 = vld [vmem:[%s2015 + $0xd1] sm:$0xff]
        %v2220 = vld [vmem:[%s2015 + $0xe1] sm:$0xff]
        %v2221 = vld [vmem:[%s2015 + $0xf1] sm:$0xff]
        %v2222 = vld [vmem:[%s2015 + $0x101] sm:$0xff]
        %v2223 = vld [vmem:[%s2015 + $0x111] sm:$0xff]
        %v2224 = vld [vmem:[%s2015 + $0x141] sm:$0xff]
        %v2225 = vld [vmem:[%s2015 + $0x151] sm:$0xff]
        %v2226 = vld [vmem:[%s2015 + $0x161] sm:$0xff]
        %v2227 = vld [vmem:[%s2015 + $0x171] sm:$0xff]
        %v2228 = vld [vmem:[%s2015 + $0x181] sm:$0xff]
        %v2229 = vld [vmem:[%s2015 + $0x191] sm:$0xff]
        %v2230 = vld [vmem:[%s2015 + $0x1a1] sm:$0xff]
        %v2231 = vld [vmem:[%s2015 + $0x1b1] sm:$0xff]
        %v2232 = vld [vmem:[%s2015 + $0x1e1] sm:$0xff]
        %v2233 = vld [vmem:[%s2015 + $0x1f1] sm:$0xff]
        %v2234 = vld [vmem:[%s2015 + $0x201] sm:$0xff]
        %v2235 = vld [vmem:[%s2015 + $0x211] sm:$0xff]
        %v2236 = vld [vmem:[%s2015 + $0x221] sm:$0xff]
        %v2237 = vld [vmem:[%s2015 + $0x231] sm:$0xff]
        %v2238 = vld [vmem:[%s2015 + $0x241] sm:$0xff]
        %v2239 = vld [vmem:[%s2015 + $0x251] sm:$0xff]
        %2272 = vrot.lane.b32.xlu0 %v2208, 96
        %v2273 = vpop.permute.xlu0 %2272
        %2274 = vrot.lane.b32.xlu0 %v2209, 96
        %v2275 = vpop.permute.xlu0 %2274
        %2276 = vrot.lane.b32.xlu0 %v2210, 96
        %v2277 = vpop.permute.xlu0 %2276
        %2278 = vrot.lane.b32.xlu0 %v2211, 96
        %v2279 = vpop.permute.xlu0 %2278
        %2280 = vrot.lane.b32.xlu0 %v2212, 96
        %v2281 = vpop.permute.xlu0 %2280
        %2282 = vrot.lane.b32.xlu0 %v2213, 96
        %v2283 = vpop.permute.xlu0 %2282
        %2284 = vrot.lane.b32.xlu0 %v2214, 96
        %v2285 = vpop.permute.xlu0 %2284
        %2286 = vrot.lane.b32.xlu0 %v2215, 96
        %v2287 = vpop.permute.xlu0 %2286
        %2288 = vrot.lane.b32.xlu0 %v2216, 96
        %v2289 = vpop.permute.xlu0 %2288
        %2290 = vrot.lane.b32.xlu0 %v2217, 96
        %v2291 = vpop.permute.xlu0 %2290
        %2292 = vrot.lane.b32.xlu0 %v2218, 96
        %v2293 = vpop.permute.xlu0 %2292
        %2294 = vrot.lane.b32.xlu0 %v2219, 96
        %v2295 = vpop.permute.xlu0 %2294
        %2296 = vrot.lane.b32.xlu0 %v2220, 96
        %v2297 = vpop.permute.xlu0 %2296
        %2298 = vrot.lane.b32.xlu0 %v2221, 96
        %v2299 = vpop.permute.xlu0 %2298
        %2300 = vrot.lane.b32.xlu0 %v2222, 96
        %v2301 = vpop.permute.xlu0 %2300
        %2302 = vrot.lane.b32.xlu0 %v2223, 96
        %v2303 = vpop.permute.xlu0 %2302
        %2304 = vrot.lane.b32.xlu0 %v2224, 96
        %v2305 = vpop.permute.xlu0 %2304
        %2306 = vrot.lane.b32.xlu0 %v2225, 96
        %v2307 = vpop.permute.xlu0 %2306
        %2308 = vrot.lane.b32.xlu0 %v2226, 96
        %v2309 = vpop.permute.xlu0 %2308
        %2310 = vrot.lane.b32.xlu0 %v2227, 96
        %v2311 = vpop.permute.xlu0 %2310
        %2312 = vrot.lane.b32.xlu0 %v2228, 96
        %v2313 = vpop.permute.xlu0 %2312
        %2314 = vrot.lane.b32.xlu0 %v2229, 96
        %v2315 = vpop.permute.xlu0 %2314
        %2316 = vrot.lane.b32.xlu0 %v2230, 96
        %v2317 = vpop.permute.xlu0 %2316
        %2318 = vrot.lane.b32.xlu0 %v2231, 96
        %v2319 = vpop.permute.xlu0 %2318
        %2320 = vrot.lane.b32.xlu0 %v2232, 96
        %v2321 = vpop.permute.xlu0 %2320
        %2322 = vrot.lane.b32.xlu0 %v2233, 96
        %v2323 = vpop.permute.xlu0 %2322
        %2324 = vrot.lane.b32.xlu0 %v2234, 96
        %v2325 = vpop.permute.xlu0 %2324
        %2326 = vrot.lane.b32.xlu0 %v2235, 96
        %v2327 = vpop.permute.xlu0 %2326
        %2328 = vrot.lane.b32.xlu0 %v2236, 96
        %v2329 = vpop.permute.xlu0 %2328
        %2330 = vrot.lane.b32.xlu0 %v2237, 96
        %v2331 = vpop.permute.xlu0 %2330
        %2332 = vrot.lane.b32.xlu0 %v2238, 96
        %v2333 = vpop.permute.xlu0 %2332
        %2334 = vrot.lane.b32.xlu0 %v2239, 96
        %v2335 = vpop.permute.xlu0 %2334
        %2368 = vst.msk [vmem:[#allocation3 + $0x8] sm:$0xff] %vm1726, %v2273
        %2369 = vst.msk [vmem:[#allocation3 + $0x20] sm:$0xff] %vm1726, %v2275
        %2370 = vst.msk [vmem:[#allocation3 + $0x38] sm:$0xff] %vm1726, %v2277
        %2371 = vst.msk [vmem:[#allocation3 + $0x50] sm:$0xff] %vm1726, %v2279
        %2372 = vst.msk [vmem:[#allocation3 + $0x68] sm:$0xff] %vm1726, %v2281
        %2373 = vst.msk [vmem:[#allocation3 + $0x80] sm:$0xff] %vm1726, %v2283
        %2374 = vst.msk [vmem:[#allocation3 + $0x98] sm:$0xff] %vm1726, %v2285
        %2375 = vst.msk [vmem:[#allocation3 + $0xb0] sm:$0xff] %vm1726, %v2287
        %2376 = vst.msk [vmem:[#allocation3 + $0xc8] sm:$0xff] %vm1726, %v2289
        %2377 = vst.msk [vmem:[#allocation3 + $0xe0] sm:$0xff] %vm1726, %v2291
        %2378 = vst.msk [vmem:[#allocation3 + $0xf8] sm:$0xff] %vm1726, %v2293
        %2379 = vst.msk [vmem:[#allocation3 + $0x110] sm:$0xff] %vm1726, %v2295
        %2380 = vst.msk [vmem:[#allocation3 + $0x128] sm:$0xff] %vm1726, %v2297
        %2381 = vst.msk [vmem:[#allocation3 + $0x140] sm:$0xff] %vm1726, %v2299
        %2382 = vst.msk [vmem:[#allocation3 + $0x158] sm:$0xff] %vm1726, %v2301
        %2383 = vst.msk [vmem:[#allocation3 + $0x170] sm:$0xff] %vm1726, %v2303
        %2384 = vst.msk [vmem:[#allocation3 + $0x188] sm:$0xff] %vm1726, %v2305
        %2385 = vst.msk [vmem:[#allocation3 + $0x1a0] sm:$0xff] %vm1726, %v2307
        %2386 = vst.msk [vmem:[#allocation3 + $0x1b8] sm:$0xff] %vm1726, %v2309
        %2387 = vst.msk [vmem:[#allocation3 + $0x1d0] sm:$0xff] %vm1726, %v2311
        %2388 = vst.msk [vmem:[#allocation3 + $0x1e8] sm:$0xff] %vm1726, %v2313
        %2389 = vst.msk [vmem:[#allocation3 + $0x200] sm:$0xff] %vm1726, %v2315
        %2390 = vst.msk [vmem:[#allocation3 + $0x218] sm:$0xff] %vm1726, %v2317
        %2391 = vst.msk [vmem:[#allocation3 + $0x230] sm:$0xff] %vm1726, %v2319
        %2392 = vst.msk [vmem:[#allocation3 + $0x248] sm:$0xff] %vm1726, %v2321
        %2393 = vst.msk [vmem:[#allocation3 + $0x260] sm:$0xff] %vm1726, %v2323
        %2394 = vst.msk [vmem:[#allocation3 + $0x278] sm:$0xff] %vm1726, %v2325
        %2395 = vst.msk [vmem:[#allocation3 + $0x290] sm:$0xff] %vm1726, %v2327
        %2396 = vst.msk [vmem:[#allocation3 + $0x2a8] sm:$0xff] %vm1726, %v2329
        %2397 = vst.msk [vmem:[#allocation3 + $0x2c0] sm:$0xff] %vm1726, %v2331
        %2398 = vst.msk [vmem:[#allocation3 + $0x2d8] sm:$0xff] %vm1726, %v2333
        %2399 = vst.msk [vmem:[#allocation3 + $0x2f0] sm:$0xff] %vm1726, %v2335
        %v2400 = vld [vmem:[%s2015 + $0x2] sm:$0xff]
        %v2401 = vld [vmem:[%s2015 + $0x12] sm:$0xff]
        %v2402 = vld [vmem:[%s2015 + $0x22] sm:$0xff]
        %v2403 = vld [vmem:[%s2015 + $0x32] sm:$0xff]
        %v2404 = vld [vmem:[%s2015 + $0x42] sm:$0xff]
        %v2405 = vld [vmem:[%s2015 + $0x52] sm:$0xff]
        %v2406 = vld [vmem:[%s2015 + $0x62] sm:$0xff]
        %v2407 = vld [vmem:[%s2015 + $0x72] sm:$0xff]
        %v2408 = vld [vmem:[%s2015 + $0xa2] sm:$0xff]
        %v2409 = vld [vmem:[%s2015 + $0xb2] sm:$0xff]
        %v2410 = vld [vmem:[%s2015 + $0xc2] sm:$0xff]
        %v2411 = vld [vmem:[%s2015 + $0xd2] sm:$0xff]
        %v2412 = vld [vmem:[%s2015 + $0xe2] sm:$0xff]
        %v2413 = vld [vmem:[%s2015 + $0xf2] sm:$0xff]
        %v2414 = vld [vmem:[%s2015 + $0x102] sm:$0xff]
        %v2415 = vld [vmem:[%s2015 + $0x112] sm:$0xff]
        %v2416 = vld [vmem:[%s2015 + $0x142] sm:$0xff]
        %v2417 = vld [vmem:[%s2015 + $0x152] sm:$0xff]
        %v2418 = vld [vmem:[%s2015 + $0x162] sm:$0xff]
        %v2419 = vld [vmem:[%s2015 + $0x172] sm:$0xff]
        %v2420 = vld [vmem:[%s2015 + $0x182] sm:$0xff]
        %v2421 = vld [vmem:[%s2015 + $0x192] sm:$0xff]
        %v2422 = vld [vmem:[%s2015 + $0x1a2] sm:$0xff]
        %v2423 = vld [vmem:[%s2015 + $0x1b2] sm:$0xff]
        %v2424 = vld [vmem:[%s2015 + $0x1e2] sm:$0xff]
        %v2425 = vld [vmem:[%s2015 + $0x1f2] sm:$0xff]
        %v2426 = vld [vmem:[%s2015 + $0x202] sm:$0xff]
        %v2427 = vld [vmem:[%s2015 + $0x212] sm:$0xff]
        %v2428 = vld [vmem:[%s2015 + $0x222] sm:$0xff]
        %v2429 = vld [vmem:[%s2015 + $0x232] sm:$0xff]
        %v2430 = vld [vmem:[%s2015 + $0x242] sm:$0xff]
        %v2431 = vld [vmem:[%s2015 + $0x252] sm:$0xff]
        %2432 = vst.msk [vmem:[#allocation3 + $0x10] sm:$0xff] %vm504, %v2400
        %2433 = vst.msk [vmem:[#allocation3 + $0x28] sm:$0xff] %vm504, %v2401
        %2434 = vst.msk [vmem:[#allocation3 + $0x40] sm:$0xff] %vm504, %v2402
        %2435 = vst.msk [vmem:[#allocation3 + $0x58] sm:$0xff] %vm504, %v2403
        %2436 = vst.msk [vmem:[#allocation3 + $0x70] sm:$0xff] %vm504, %v2404
        %2437 = vst.msk [vmem:[#allocation3 + $0x88] sm:$0xff] %vm504, %v2405
        %2438 = vst.msk [vmem:[#allocation3 + $0xa0] sm:$0xff] %vm504, %v2406
        %2439 = vst.msk [vmem:[#allocation3 + $0xb8] sm:$0xff] %vm504, %v2407
        %2440 = vst.msk [vmem:[#allocation3 + $0xd0] sm:$0xff] %vm504, %v2408
        %2441 = vst.msk [vmem:[#allocation3 + $0xe8] sm:$0xff] %vm504, %v2409
        %2442 = vst.msk [vmem:[#allocation3 + $0x100] sm:$0xff] %vm504, %v2410
        %2443 = vst.msk [vmem:[#allocation3 + $0x118] sm:$0xff] %vm504, %v2411
        %2444 = vst.msk [vmem:[#allocation3 + $0x130] sm:$0xff] %vm504, %v2412
        %2445 = vst.msk [vmem:[#allocation3 + $0x148] sm:$0xff] %vm504, %v2413
        %2446 = vst.msk [vmem:[#allocation3 + $0x160] sm:$0xff] %vm504, %v2414
        %2447 = vst.msk [vmem:[#allocation3 + $0x178] sm:$0xff] %vm504, %v2415
        %2448 = vst.msk [vmem:[#allocation3 + $0x190] sm:$0xff] %vm504, %v2416
        %2449 = vst.msk [vmem:[#allocation3 + $0x1a8] sm:$0xff] %vm504, %v2417
        %2450 = vst.msk [vmem:[#allocation3 + $0x1c0] sm:$0xff] %vm504, %v2418
        %2451 = vst.msk [vmem:[#allocation3 + $0x1d8] sm:$0xff] %vm504, %v2419
        %2452 = vst.msk [vmem:[#allocation3 + $0x1f0] sm:$0xff] %vm504, %v2420
        %2453 = vst.msk [vmem:[#allocation3 + $0x208] sm:$0xff] %vm504, %v2421
        %2454 = vst.msk [vmem:[#allocation3 + $0x220] sm:$0xff] %vm504, %v2422
        %2455 = vst.msk [vmem:[#allocation3 + $0x238] sm:$0xff] %vm504, %v2423
        %2456 = vst.msk [vmem:[#allocation3 + $0x250] sm:$0xff] %vm504, %v2424
        %2457 = vst.msk [vmem:[#allocation3 + $0x268] sm:$0xff] %vm504, %v2425
        %2458 = vst.msk [vmem:[#allocation3 + $0x280] sm:$0xff] %vm504, %v2426
        %2459 = vst.msk [vmem:[#allocation3 + $0x298] sm:$0xff] %vm504, %v2427
        %2460 = vst.msk [vmem:[#allocation3 + $0x2b0] sm:$0xff] %vm504, %v2428
        %2461 = vst.msk [vmem:[#allocation3 + $0x2c8] sm:$0xff] %vm504, %v2429
        %2462 = vst.msk [vmem:[#allocation3 + $0x2e0] sm:$0xff] %vm504, %v2430
        %2463 = vst.msk [vmem:[#allocation3 + $0x2f8] sm:$0xff] %vm504, %v2431
        %v2464 = vld [vmem:[#allocation3] sm:$0xff]
        %v2465 = vld [vmem:[#allocation3 + $0x8] sm:$0xff]
        %v2466 = vld [vmem:[#allocation3 + $0x10] sm:$0xff]
        %v2467 = vld [vmem:[#allocation3 + $0x18] sm:$0xff]
        %v2468 = vld [vmem:[#allocation3 + $0x20] sm:$0xff]
        %v2469 = vld [vmem:[#allocation3 + $0x28] sm:$0xff]
        %v2470 = vld [vmem:[#allocation3 + $0x30] sm:$0xff]
        %v2471 = vld [vmem:[#allocation3 + $0x38] sm:$0xff]
        %v2472 = vld [vmem:[#allocation3 + $0x40] sm:$0xff]
        %v2473 = vld [vmem:[#allocation3 + $0x48] sm:$0xff]
        %v2474 = vld [vmem:[#allocation3 + $0x50] sm:$0xff]
        %v2475 = vld [vmem:[#allocation3 + $0x58] sm:$0xff]
        %v2476 = vld [vmem:[#allocation3 + $0x60] sm:$0xff]
        %v2477 = vld [vmem:[#allocation3 + $0x68] sm:$0xff]
        %v2478 = vld [vmem:[#allocation3 + $0x70] sm:$0xff]
        %v2479 = vld [vmem:[#allocation3 + $0x78] sm:$0xff]
        %v2480 = vld [vmem:[#allocation3 + $0x80] sm:$0xff]
        %v2481 = vld [vmem:[#allocation3 + $0x88] sm:$0xff]
        %v2482 = vld [vmem:[#allocation3 + $0x90] sm:$0xff]
        %v2483 = vld [vmem:[#allocation3 + $0x98] sm:$0xff]
        %v2484 = vld [vmem:[#allocation3 + $0xa0] sm:$0xff]
        %v2485 = vld [vmem:[#allocation3 + $0xa8] sm:$0xff]
        %v2486 = vld [vmem:[#allocation3 + $0xb0] sm:$0xff]
        %v2487 = vld [vmem:[#allocation3 + $0xb8] sm:$0xff]
        %v2488 = vld [vmem:[#allocation3 + $0xc0] sm:$0xff]
        %v2489 = vld [vmem:[#allocation3 + $0xc8] sm:$0xff]
        %v2490 = vld [vmem:[#allocation3 + $0xd0] sm:$0xff]
        %v2491 = vld [vmem:[#allocation3 + $0xd8] sm:$0xff]
        %v2492 = vld [vmem:[#allocation3 + $0xe0] sm:$0xff]
        %v2493 = vld [vmem:[#allocation3 + $0xe8] sm:$0xff]
        %v2494 = vld [vmem:[#allocation3 + $0xf0] sm:$0xff]
        %v2495 = vld [vmem:[#allocation3 + $0xf8] sm:$0xff]
        %v2496 = vld [vmem:[#allocation3 + $0x100] sm:$0xff]
        %v2497 = vld [vmem:[#allocation3 + $0x108] sm:$0xff]
        %v2498 = vld [vmem:[#allocation3 + $0x110] sm:$0xff]
        %v2499 = vld [vmem:[#allocation3 + $0x118] sm:$0xff]
        %v2500 = vld [vmem:[#allocation3 + $0x120] sm:$0xff]
        %v2501 = vld [vmem:[#allocation3 + $0x128] sm:$0xff]
        %v2502 = vld [vmem:[#allocation3 + $0x130] sm:$0xff]
        %v2503 = vld [vmem:[#allocation3 + $0x138] sm:$0xff]
        %v2504 = vld [vmem:[#allocation3 + $0x140] sm:$0xff]
        %v2505 = vld [vmem:[#allocation3 + $0x148] sm:$0xff]
        %v2506 = vld [vmem:[#allocation3 + $0x150] sm:$0xff]
        %v2507 = vld [vmem:[#allocation3 + $0x158] sm:$0xff]
        %v2508 = vld [vmem:[#allocation3 + $0x160] sm:$0xff]
        %v2509 = vld [vmem:[#allocation3 + $0x168] sm:$0xff]
        %v2510 = vld [vmem:[#allocation3 + $0x170] sm:$0xff]
        %v2511 = vld [vmem:[#allocation3 + $0x178] sm:$0xff]
        %v2512 = vld [vmem:[#allocation3 + $0x180] sm:$0xff]
        %v2513 = vld [vmem:[#allocation3 + $0x188] sm:$0xff]
        %v2514 = vld [vmem:[#allocation3 + $0x190] sm:$0xff]
        %v2515 = vld [vmem:[#allocation3 + $0x198] sm:$0xff]
        %v2516 = vld [vmem:[#allocation3 + $0x1a0] sm:$0xff]
        %v2517 = vld [vmem:[#allocation3 + $0x1a8] sm:$0xff]
        %v2518 = vld [vmem:[#allocation3 + $0x1b0] sm:$0xff]
        %v2519 = vld [vmem:[#allocation3 + $0x1b8] sm:$0xff]
        %v2520 = vld [vmem:[#allocation3 + $0x1c0] sm:$0xff]
        %v2521 = vld [vmem:[#allocation3 + $0x1c8] sm:$0xff]
        %v2522 = vld [vmem:[#allocation3 + $0x1d0] sm:$0xff]
        %v2523 = vld [vmem:[#allocation3 + $0x1d8] sm:$0xff]
        %v2524 = vld [vmem:[#allocation3 + $0x1e0] sm:$0xff]
        %v2525 = vld [vmem:[#allocation3 + $0x1e8] sm:$0xff]
        %v2526 = vld [vmem:[#allocation3 + $0x1f0] sm:$0xff]
        %v2527 = vld [vmem:[#allocation3 + $0x1f8] sm:$0xff]
        %v2528 = vld [vmem:[#allocation3 + $0x200] sm:$0xff]
        %v2529 = vld [vmem:[#allocation3 + $0x208] sm:$0xff]
        %v2530 = vld [vmem:[#allocation3 + $0x210] sm:$0xff]
        %v2531 = vld [vmem:[#allocation3 + $0x218] sm:$0xff]
        %v2532 = vld [vmem:[#allocation3 + $0x220] sm:$0xff]
        %v2533 = vld [vmem:[#allocation3 + $0x228] sm:$0xff]
        %v2534 = vld [vmem:[#allocation3 + $0x230] sm:$0xff]
        %v2535 = vld [vmem:[#allocation3 + $0x238] sm:$0xff]
        %v2536 = vld [vmem:[#allocation3 + $0x240] sm:$0xff]
        %v2537 = vld [vmem:[#allocation3 + $0x248] sm:$0xff]
        %v2538 = vld [vmem:[#allocation3 + $0x250] sm:$0xff]
        %v2539 = vld [vmem:[#allocation3 + $0x258] sm:$0xff]
        %v2540 = vld [vmem:[#allocation3 + $0x260] sm:$0xff]
        %v2541 = vld [vmem:[#allocation3 + $0x268] sm:$0xff]
        %v2542 = vld [vmem:[#allocation3 + $0x270] sm:$0xff]
        %v2543 = vld [vmem:[#allocation3 + $0x278] sm:$0xff]
        %v2544 = vld [vmem:[#allocation3 + $0x280] sm:$0xff]
        %v2545 = vld [vmem:[#allocation3 + $0x288] sm:$0xff]
        %v2546 = vld [vmem:[#allocation3 + $0x290] sm:$0xff]
        %v2547 = vld [vmem:[#allocation3 + $0x298] sm:$0xff]
        %v2548 = vld [vmem:[#allocation3 + $0x2a0] sm:$0xff]
        %v2549 = vld [vmem:[#allocation3 + $0x2a8] sm:$0xff]
        %v2550 = vld [vmem:[#allocation3 + $0x2b0] sm:$0xff]
        %v2551 = vld [vmem:[#allocation3 + $0x2b8] sm:$0xff]
        %v2552 = vld [vmem:[#allocation3 + $0x2c0] sm:$0xff]
        %v2553 = vld [vmem:[#allocation3 + $0x2c8] sm:$0xff]
        %v2554 = vld [vmem:[#allocation3 + $0x2d0] sm:$0xff]
        %v2555 = vld [vmem:[#allocation3 + $0x2d8] sm:$0xff]
        %v2556 = vld [vmem:[#allocation3 + $0x2e0] sm:$0xff]
        %v2557 = vld [vmem:[#allocation3 + $0x2e8] sm:$0xff]
        %v2558 = vld [vmem:[#allocation3 + $0x2f0] sm:$0xff]
        %v2559 = vld [vmem:[#allocation3 + $0x2f8] sm:$0xff]
        %v2560 = vld [vmem:[#allocation11] sm:$0xff]
        %v2561 = vld [vmem:[#allocation11 + $0x8] sm:$0xff]
        %v2562 = vld [vmem:[#allocation11 + $0x10] sm:$0xff]
        %v2563 = vld [vmem:[#allocation11 + $0x18] sm:$0xff]
        %v2564 = vld [vmem:[#allocation11 + $0x20] sm:$0xff]
        %v2565 = vld [vmem:[#allocation11 + $0x28] sm:$0xff]
        %v2566 = vld [vmem:[#allocation11 + $0x30] sm:$0xff]
        %v2567 = vld [vmem:[#allocation11 + $0x38] sm:$0xff]
        %v2568 = vld [vmem:[#allocation11 + $0x40] sm:$0xff]
        %v2569 = vld [vmem:[#allocation11 + $0x48] sm:$0xff]
        %v2570 = vld [vmem:[#allocation11 + $0x50] sm:$0xff]
        %v2571 = vld [vmem:[#allocation11 + $0x58] sm:$0xff]
        %v2572 = vld [vmem:[#allocation11 + $0x60] sm:$0xff]
        %v2573 = vld [vmem:[#allocation11 + $0x68] sm:$0xff]
        %v2574 = vld [vmem:[#allocation11 + $0x70] sm:$0xff]
        %v2575 = vld [vmem:[#allocation11 + $0x78] sm:$0xff]
        %v2576 = vld [vmem:[#allocation11 + $0x80] sm:$0xff]
        %v2577 = vld [vmem:[#allocation11 + $0x88] sm:$0xff]
        %v2578 = vld [vmem:[#allocation11 + $0x90] sm:$0xff]
        %v2579 = vld [vmem:[#allocation11 + $0x98] sm:$0xff]
        %v2580 = vld [vmem:[#allocation11 + $0xa0] sm:$0xff]
        %v2581 = vld [vmem:[#allocation11 + $0xa8] sm:$0xff]
        %v2582 = vld [vmem:[#allocation11 + $0xb0] sm:$0xff]
        %v2583 = vld [vmem:[#allocation11 + $0xb8] sm:$0xff]
        %v2584 = vld [vmem:[#allocation11 + $0xc0] sm:$0xff]
        %v2585 = vld [vmem:[#allocation11 + $0xc8] sm:$0xff]
        %v2586 = vld [vmem:[#allocation11 + $0xd0] sm:$0xff]
        %v2587 = vld [vmem:[#allocation11 + $0xd8] sm:$0xff]
        %v2588 = vld [vmem:[#allocation11 + $0xe0] sm:$0xff]
        %v2589 = vld [vmem:[#allocation11 + $0xe8] sm:$0xff]
        %v2590 = vld [vmem:[#allocation11 + $0xf0] sm:$0xff]
        %v2591 = vld [vmem:[#allocation11 + $0xf8] sm:$0xff]
        %v2592 = vld [vmem:[#allocation11 + $0x100] sm:$0xff]
        %v2593 = vld [vmem:[#allocation11 + $0x108] sm:$0xff]
        %v2594 = vld [vmem:[#allocation11 + $0x110] sm:$0xff]
        %v2595 = vld [vmem:[#allocation11 + $0x118] sm:$0xff]
        %v2597 = vsel %vm504, %v2466, 0
        %v2600 = vsel %vm504, %v2469, 0
        %v2603 = vsel %vm504, %v2472, 0
        %v2606 = vsel %vm504, %v2475, 0
        %v2609 = vsel %vm504, %v2478, 0
        %v2612 = vsel %vm504, %v2481, 0
        %v2615 = vsel %vm504, %v2484, 0
        %v2618 = vsel %vm504, %v2487, 0
        %v2621 = vsel %vm504, %v2490, 0
        %v2624 = vsel %vm504, %v2493, 0
        %v2627 = vsel %vm504, %v2496, 0
        %v2630 = vsel %vm504, %v2499, 0
        %v2633 = vsel %vm504, %v2502, 0
        %v2636 = vsel %vm504, %v2505, 0
        %v2639 = vsel %vm504, %v2508, 0
        %v2642 = vsel %vm504, %v2511, 0
        %v2645 = vsel %vm504, %v2514, 0
        %v2648 = vsel %vm504, %v2517, 0
        %v2651 = vsel %vm504, %v2520, 0
        %v2654 = vsel %vm504, %v2523, 0
        %v2657 = vsel %vm504, %v2526, 0
        %v2660 = vsel %vm504, %v2529, 0
        %v2663 = vsel %vm504, %v2532, 0
        %v2666 = vsel %vm504, %v2535, 0
        %v2669 = vsel %vm504, %v2538, 0
        %v2672 = vsel %vm504, %v2541, 0
        %v2675 = vsel %vm504, %v2544, 0
        %v2678 = vsel %vm504, %v2547, 0
        %v2681 = vsel %vm504, %v2550, 0
        %v2684 = vsel %vm504, %v2553, 0
        %v2687 = vsel %vm504, %v2556, 0
        %v2690 = vsel %vm504, %v2559, 0
        %2692 = vmatprep.subr.mxu0 0.0
        %2693 = vmatpush1.msra.mxu0 %v2575
        %2694 = vmatprep.subr.mxu0 0.0
        %2695 = vmatpush1.msra.mxu0 %v2574
        %2696 = vmatprep.subr.mxu0 0.0
        %2697 = vmatpush1.msra.mxu0 %v2573
        %2698 = vmatprep.subr.mxu0 0.0
        %2699 = vmatpush1.msra.mxu0 %v2572
        %2700 = vmatprep.subr.mxu0 0.0
        %2701 = vmatpush1.msra.mxu0 %v2571
        %2702 = vmatprep.subr.mxu0 0.0
        %2703 = vmatpush1.msra.mxu0 %v2570
        %2704 = vmatprep.subr.mxu0 0.0
        %2705 = vmatpush1.msra.mxu0 %v2569
        %2706 = vmatprep.subr.mxu0 0.0
        %2707 = vmatpush1.msra.mxu0 %v2568
        %2708 = vmatprep.subr.mxu0 0.0
        %2709 = vmatpush1.msra.mxu0 %v2567
        %2710 = vmatprep.subr.mxu0 0.0
        %2711 = vmatpush1.msra.mxu0 %v2566
        %2712 = vmatprep.subr.mxu0 0.0
        %2713 = vmatpush1.msra.mxu0 %v2565
        %2714 = vmatprep.subr.mxu0 0.0
        %2715 = vmatpush1.msra.mxu0 %v2564
        %2716 = vmatprep.subr.mxu0 0.0
        %2717 = vmatpush1.msra.mxu0 %v2563
        %2718 = vmatprep.subr.mxu0 0.0
        %2719 = vmatpush1.msra.mxu0 %v2562
        %2720 = vmatprep.subr.mxu0 0.0
        %2721 = vmatpush1.msra.mxu0 %v2561
        %2722 = vmatprep.subr.mxu0 0.0
        %2723 = vmatpush1.msra.mxu0 %v2560
        %2724 = vmatprep.subr.mxu0 0.0
        %2725 = vmatpush2.msra.mxu0 %v2591
        %2726 = vmatprep.subr.mxu0 0.0
        %2727 = vmatpush2.msra.mxu0 %v2590
        %2728 = vmatprep.subr.mxu0 0.0
        %2729 = vmatpush2.msra.mxu0 %v2589
        %2730 = vmatprep.subr.mxu0 0.0
        %2731 = vmatpush2.msra.mxu0 %v2588
        %2732 = vmatprep.subr.mxu0 0.0
        %2733 = vmatpush2.msra.mxu0 %v2587
        %2734 = vmatprep.subr.mxu0 0.0
        %2735 = vmatpush2.msra.mxu0 %v2586
        %2736 = vmatprep.subr.mxu0 0.0
        %2737 = vmatpush2.msra.mxu0 %v2585
        %2738 = vmatprep.subr.mxu0 0.0
        %2739 = vmatpush2.msra.mxu0 %v2584
        %2740 = vmatprep.subr.mxu0 0.0
        %2741 = vmatpush2.msra.mxu0 %v2583
        %2742 = vmatprep.subr.mxu0 0.0
        %2743 = vmatpush2.msra.mxu0 %v2582
        %2744 = vmatprep.subr.mxu0 0.0
        %2745 = vmatpush2.msra.mxu0 %v2581
        %2746 = vmatprep.subr.mxu0 0.0
        %2747 = vmatpush2.msra.mxu0 %v2580
        %2748 = vmatprep.subr.mxu0 0.0
        %2749 = vmatpush2.msra.mxu0 %v2579
        %2750 = vmatprep.subr.mxu0 0.0
        %2751 = vmatpush2.msra.mxu0 %v2578
        %2752 = vmatprep.subr.mxu0 0.0
        %2753 = vmatpush2.msra.mxu0 %v2577
        %2754 = vmatprep.subr.mxu0 0.0
        %2755 = vmatpush2.msra.mxu0 %v2576
        %2756 = vmatprep.mubr.f32.mxu0 %v2465
        %2757 = vmatmul.mubr.f32.gmra.mxu0 %v2464
        %v2758 = vpop.f32.mrf.mxu0
        %v2759 = vadd.f32 0.0, %v2758
        %v2760 = vpop.f32.mrf.mxu0
        %2761 = vmatprep.mubr.f32.mxu0 %v2468
        %2762 = vmatmul.mubr.f32.gmra.mxu0 %v2467
        %v2763 = vpop.f32.mrf.mxu0
        %v2764 = vadd.f32 0.0, %v2763
        %v2765 = vpop.f32.mrf.mxu0
        %2766 = vmatprep.mubr.f32.mxu0 %v2471
        %2767 = vmatmul.mubr.f32.gmra.mxu0 %v2470
        %v2768 = vpop.f32.mrf.mxu0
        %v2769 = vadd.f32 0.0, %v2768
        %v2770 = vpop.f32.mrf.mxu0
        %2771 = vmatprep.mubr.f32.mxu0 %v2474
        %2772 = vmatmul.mubr.f32.gmra.mxu0 %v2473
        %v2773 = vpop.f32.mrf.mxu0
        %v2774 = vadd.f32 0.0, %v2773
        %v2775 = vpop.f32.mrf.mxu0
        %2776 = vmatprep.mubr.f32.mxu0 %v2477
        %2777 = vmatmul.mubr.f32.gmra.mxu0 %v2476
        %v2778 = vpop.f32.mrf.mxu0
        %v2779 = vadd.f32 0.0, %v2778
        %v2780 = vpop.f32.mrf.mxu0
        %2781 = vmatprep.mubr.f32.mxu0 %v2480
        %2782 = vmatmul.mubr.f32.gmra.mxu0 %v2479
        %v2783 = vpop.f32.mrf.mxu0
        %v2784 = vadd.f32 0.0, %v2783
        %v2785 = vpop.f32.mrf.mxu0
        %2786 = vmatprep.mubr.f32.mxu0 %v2483
        %2787 = vmatmul.mubr.f32.gmra.mxu0 %v2482
        %v2788 = vpop.f32.mrf.mxu0
        %v2789 = vadd.f32 0.0, %v2788
        %v2790 = vpop.f32.mrf.mxu0
        %2791 = vmatprep.mubr.f32.mxu0 %v2486
        %2792 = vmatmul.mubr.f32.gmra.mxu0 %v2485
        %v2793 = vpop.f32.mrf.mxu0
        %v2794 = vadd.f32 0.0, %v2793
        %v2795 = vpop.f32.mrf.mxu0
        %2796 = vmatprep.mubr.f32.mxu0 %v2489
        %2797 = vmatmul.mubr.f32.gmra.mxu0 %v2488
        %v2798 = vpop.f32.mrf.mxu0
        %v2799 = vadd.f32 0.0, %v2798
        %v2800 = vpop.f32.mrf.mxu0
        %2801 = vmatprep.mubr.f32.mxu0 %v2492
        %2802 = vmatmul.mubr.f32.gmra.mxu0 %v2491
        %v2803 = vpop.f32.mrf.mxu0
        %v2804 = vadd.f32 0.0, %v2803
        %v2805 = vpop.f32.mrf.mxu0
        %2806 = vmatprep.mubr.f32.mxu0 %v2495
        %2807 = vmatmul.mubr.f32.gmra.mxu0 %v2494
        %v2808 = vpop.f32.mrf.mxu0
        %v2809 = vadd.f32 0.0, %v2808
        %v2810 = vpop.f32.mrf.mxu0
        %2811 = vmatprep.mubr.f32.mxu0 %v2498
        %2812 = vmatmul.mubr.f32.gmra.mxu0 %v2497
        %v2813 = vpop.f32.mrf.mxu0
        %v2814 = vadd.f32 0.0, %v2813
        %v2815 = vpop.f32.mrf.mxu0
        %2816 = vmatprep.mubr.f32.mxu0 %v2501
        %2817 = vmatmul.mubr.f32.gmra.mxu0 %v2500
        %v2818 = vpop.f32.mrf.mxu0
        %v2819 = vadd.f32 0.0, %v2818
        %v2820 = vpop.f32.mrf.mxu0
        %2821 = vmatprep.mubr.f32.mxu0 %v2504
        %2822 = vmatmul.mubr.f32.gmra.mxu0 %v2503
        %v2823 = vpop.f32.mrf.mxu0
        %v2824 = vadd.f32 0.0, %v2823
        %v2825 = vpop.f32.mrf.mxu0
        %2826 = vmatprep.mubr.f32.mxu0 %v2507
        %2827 = vmatmul.mubr.f32.gmra.mxu0 %v2506
        %v2828 = vpop.f32.mrf.mxu0
        %v2829 = vadd.f32 0.0, %v2828
        %v2830 = vpop.f32.mrf.mxu0
        %2831 = vmatprep.mubr.f32.mxu0 %v2510
        %2832 = vmatmul.mubr.f32.gmra.mxu0 %v2509
        %v2833 = vpop.f32.mrf.mxu0
        %v2834 = vadd.f32 0.0, %v2833
        %v2835 = vpop.f32.mrf.mxu0
        %2836 = vmatprep.mubr.f32.mxu0 %v2513
        %2837 = vmatmul.mubr.f32.gmra.mxu0 %v2512
        %v2838 = vpop.f32.mrf.mxu0
        %v2839 = vadd.f32 0.0, %v2838
        %v2840 = vpop.f32.mrf.mxu0
        %2841 = vmatprep.mubr.f32.mxu0 %v2516
        %2842 = vmatmul.mubr.f32.gmra.mxu0 %v2515
        %v2843 = vpop.f32.mrf.mxu0
        %v2844 = vadd.f32 0.0, %v2843
        %v2845 = vpop.f32.mrf.mxu0
        %2846 = vmatprep.mubr.f32.mxu0 %v2519
        %2847 = vmatmul.mubr.f32.gmra.mxu0 %v2518
        %v2848 = vpop.f32.mrf.mxu0
        %v2849 = vadd.f32 0.0, %v2848
        %v2850 = vpop.f32.mrf.mxu0
        %2851 = vmatprep.mubr.f32.mxu0 %v2522
        %2852 = vmatmul.mubr.f32.gmra.mxu0 %v2521
        %v2853 = vpop.f32.mrf.mxu0
        %v2854 = vadd.f32 0.0, %v2853
        %v2855 = vpop.f32.mrf.mxu0
        %2856 = vmatprep.mubr.f32.mxu0 %v2525
        %2857 = vmatmul.mubr.f32.gmra.mxu0 %v2524
        %v2858 = vpop.f32.mrf.mxu0
        %v2859 = vadd.f32 0.0, %v2858
        %v2860 = vpop.f32.mrf.mxu0
        %2861 = vmatprep.mubr.f32.mxu0 %v2528
        %2862 = vmatmul.mubr.f32.gmra.mxu0 %v2527
        %v2863 = vpop.f32.mrf.mxu0
        %v2864 = vadd.f32 0.0, %v2863
        %v2865 = vpop.f32.mrf.mxu0
        %2866 = vmatprep.mubr.f32.mxu0 %v2531
        %2867 = vmatmul.mubr.f32.gmra.mxu0 %v2530
        %v2868 = vpop.f32.mrf.mxu0
        %v2869 = vadd.f32 0.0, %v2868
        %v2870 = vpop.f32.mrf.mxu0
        %2871 = vmatprep.mubr.f32.mxu0 %v2534
        %2872 = vmatmul.mubr.f32.gmra.mxu0 %v2533
        %v2873 = vpop.f32.mrf.mxu0
        %v2874 = vadd.f32 0.0, %v2873
        %v2875 = vpop.f32.mrf.mxu0
        %2876 = vmatprep.mubr.f32.mxu0 %v2537
        %2877 = vmatmul.mubr.f32.gmra.mxu0 %v2536
        %v2878 = vpop.f32.mrf.mxu0
        %v2879 = vadd.f32 0.0, %v2878
        %v2880 = vpop.f32.mrf.mxu0
        %2881 = vmatprep.mubr.f32.mxu0 %v2540
        %2882 = vmatmul.mubr.f32.gmra.mxu0 %v2539
        %v2883 = vpop.f32.mrf.mxu0
        %v2884 = vadd.f32 0.0, %v2883
        %v2885 = vpop.f32.mrf.mxu0
        %2886 = vmatprep.mubr.f32.mxu0 %v2543
        %2887 = vmatmul.mubr.f32.gmra.mxu0 %v2542
        %v2888 = vpop.f32.mrf.mxu0
        %v2889 = vadd.f32 0.0, %v2888
        %v2890 = vpop.f32.mrf.mxu0
        %2891 = vmatprep.mubr.f32.mxu0 %v2546
        %2892 = vmatmul.mubr.f32.gmra.mxu0 %v2545
        %v2893 = vpop.f32.mrf.mxu0
        %v2894 = vadd.f32 0.0, %v2893
        %v2895 = vpop.f32.mrf.mxu0
        %2896 = vmatprep.mubr.f32.mxu0 %v2549
        %2897 = vmatmul.mubr.f32.gmra.mxu0 %v2548
        %v2898 = vpop.f32.mrf.mxu0
        %v2899 = vadd.f32 0.0, %v2898
        %v2900 = vpop.f32.mrf.mxu0
        %2901 = vmatprep.mubr.f32.mxu0 %v2552
        %2902 = vmatmul.mubr.f32.gmra.mxu0 %v2551
        %v2903 = vpop.f32.mrf.mxu0
        %v2904 = vadd.f32 0.0, %v2903
        %v2905 = vpop.f32.mrf.mxu0
        %2906 = vmatprep.mubr.f32.mxu0 %v2555
        %2907 = vmatmul.mubr.f32.gmra.mxu0 %v2554
        %v2908 = vpop.f32.mrf.mxu0
        %v2909 = vadd.f32 0.0, %v2908
        %v2910 = vpop.f32.mrf.mxu0
        %2911 = vmatprep.mubr.f32.mxu0 %v2558
        %2912 = vmatmul.mubr.f32.gmra.mxu0 %v2557
        %v2913 = vpop.f32.mrf.mxu0
        %v2914 = vadd.f32 0.0, %v2913
        %v2915 = vpop.f32.mrf.mxu0
        %2916 = vdwg.mxu0
        %2917 = vmatprep.subr.mxu0 0.0
        %2918 = vmatpush1.msra.mxu0 0.0
        %2919 = vmatprep.subr.mxu0 0.0
        %2920 = vmatpush1.msra.mxu0 0.0
        %2921 = vmatprep.subr.mxu0 0.0
        %2922 = vmatpush1.msra.mxu0 0.0
        %2923 = vmatprep.subr.mxu0 0.0
        %2924 = vmatpush1.msra.mxu0 0.0
        %2925 = vmatprep.subr.mxu0 0.0
        %2926 = vmatpush1.msra.mxu0 0.0
        %2927 = vmatprep.subr.mxu0 0.0
        %2928 = vmatpush1.msra.mxu0 0.0
        %2929 = vmatprep.subr.mxu0 0.0
        %2930 = vmatpush1.msra.mxu0 0.0
        %2931 = vmatprep.subr.mxu0 0.0
        %2932 = vmatpush1.msra.mxu0 0.0
        %2933 = vmatprep.subr.mxu0 0.0
        %2934 = vmatpush1.msra.mxu0 0.0
        %2935 = vmatprep.subr.mxu0 0.0
        %2936 = vmatpush1.msra.mxu0 0.0
        %2937 = vmatprep.subr.mxu0 0.0
        %2938 = vmatpush1.msra.mxu0 0.0
        %2939 = vmatprep.subr.mxu0 0.0
        %2940 = vmatpush1.msra.mxu0 0.0
        %2941 = vmatprep.subr.mxu0 0.0
        %2942 = vmatpush1.msra.mxu0 %v2595
        %2943 = vmatprep.subr.mxu0 0.0
        %2944 = vmatpush1.msra.mxu0 %v2594
        %2945 = vmatprep.subr.mxu0 0.0
        %2946 = vmatpush1.msra.mxu0 %v2593
        %2947 = vmatprep.subr.mxu0 0.0
        %2948 = vmatpush1.msra.mxu0 %v2592
        %2949 = vmatprep.subr.mxu0 0.0
        %2950 = vmatpush2.msra.mxu0 0.0
        %2951 = vmatprep.subr.mxu0 0.0
        %2952 = vmatpush2.msra.mxu0 0.0
        %2953 = vmatprep.subr.mxu0 0.0
        %2954 = vmatpush2.msra.mxu0 0.0
        %2955 = vmatprep.subr.mxu0 0.0
        %2956 = vmatpush2.msra.mxu0 0.0
        %2957 = vmatprep.subr.mxu0 0.0
        %2958 = vmatpush2.msra.mxu0 0.0
        %2959 = vmatprep.subr.mxu0 0.0
        %2960 = vmatpush2.msra.mxu0 0.0
        %2961 = vmatprep.subr.mxu0 0.0
        %2962 = vmatpush2.msra.mxu0 0.0
        %2963 = vmatprep.subr.mxu0 0.0
        %2964 = vmatpush2.msra.mxu0 0.0
        %2965 = vmatprep.subr.mxu0 0.0
        %2966 = vmatpush2.msra.mxu0 0.0
        %2967 = vmatprep.subr.mxu0 0.0
        %2968 = vmatpush2.msra.mxu0 0.0
        %2969 = vmatprep.subr.mxu0 0.0
        %2970 = vmatpush2.msra.mxu0 0.0
        %2971 = vmatprep.subr.mxu0 0.0
        %2972 = vmatpush2.msra.mxu0 0.0
        %2973 = vmatprep.subr.mxu0 0.0
        %2974 = vmatpush2.msra.mxu0 0.0
        %2975 = vmatprep.subr.mxu0 0.0
        %2976 = vmatpush2.msra.mxu0 0.0
        %2977 = vmatprep.subr.mxu0 0.0
        %2978 = vmatpush2.msra.mxu0 0.0
        %2979 = vmatprep.subr.mxu0 0.0
        %2980 = vmatpush2.msra.mxu0 0.0
        %2981 = vmatprep.mubr.f32.mxu0 0.0
        %2982 = vmatmul.mubr.f32.gmra.mxu0 %v2597
        %v2983 = vpop.f32.mrf.mxu0
        %v2984 = vadd.f32 %v2759, %v2983
        %v2985 = vpop.f32.mrf.mxu0
        %2986 = vmatprep.mubr.f32.mxu0 0.0
        %2987 = vmatmul.mubr.f32.gmra.mxu0 %v2600
        %v2988 = vpop.f32.mrf.mxu0
        %v2989 = vadd.f32 %v2764, %v2988
        %v2990 = vpop.f32.mrf.mxu0
        %2991 = vmatprep.mubr.f32.mxu0 0.0
        %2992 = vmatmul.mubr.f32.gmra.mxu0 %v2603
        %v2993 = vpop.f32.mrf.mxu0
        %v2994 = vadd.f32 %v2769, %v2993
        %v2995 = vpop.f32.mrf.mxu0
        %2996 = vmatprep.mubr.f32.mxu0 0.0
        %2997 = vmatmul.mubr.f32.gmra.mxu0 %v2606
        %v2998 = vpop.f32.mrf.mxu0
        %v2999 = vadd.f32 %v2774, %v2998
        %v3000 = vpop.f32.mrf.mxu0
        %3001 = vmatprep.mubr.f32.mxu0 0.0
        %3002 = vmatmul.mubr.f32.gmra.mxu0 %v2609
        %v3003 = vpop.f32.mrf.mxu0
        %v3004 = vadd.f32 %v2779, %v3003
        %v3005 = vpop.f32.mrf.mxu0
        %3006 = vmatprep.mubr.f32.mxu0 0.0
        %3007 = vmatmul.mubr.f32.gmra.mxu0 %v2612
        %v3008 = vpop.f32.mrf.mxu0
        %v3009 = vadd.f32 %v2784, %v3008
        %v3010 = vpop.f32.mrf.mxu0
        %3011 = vmatprep.mubr.f32.mxu0 0.0
        %3012 = vmatmul.mubr.f32.gmra.mxu0 %v2615
        %v3013 = vpop.f32.mrf.mxu0
        %v3014 = vadd.f32 %v2789, %v3013
        %v3015 = vpop.f32.mrf.mxu0
        %3016 = vmatprep.mubr.f32.mxu0 0.0
        %3017 = vmatmul.mubr.f32.gmra.mxu0 %v2618
        %v3018 = vpop.f32.mrf.mxu0
        %v3019 = vadd.f32 %v2794, %v3018
        %v3020 = vpop.f32.mrf.mxu0
        %3021 = vmatprep.mubr.f32.mxu0 0.0
        %3022 = vmatmul.mubr.f32.gmra.mxu0 %v2621
        %v3023 = vpop.f32.mrf.mxu0
        %v3024 = vadd.f32 %v2799, %v3023
        %v3025 = vpop.f32.mrf.mxu0
        %3026 = vmatprep.mubr.f32.mxu0 0.0
        %3027 = vmatmul.mubr.f32.gmra.mxu0 %v2624
        %v3028 = vpop.f32.mrf.mxu0
        %v3029 = vadd.f32 %v2804, %v3028
        %v3030 = vpop.f32.mrf.mxu0
        %3031 = vmatprep.mubr.f32.mxu0 0.0
        %3032 = vmatmul.mubr.f32.gmra.mxu0 %v2627
        %v3033 = vpop.f32.mrf.mxu0
        %v3034 = vadd.f32 %v2809, %v3033
        %v3035 = vpop.f32.mrf.mxu0
        %3036 = vmatprep.mubr.f32.mxu0 0.0
        %3037 = vmatmul.mubr.f32.gmra.mxu0 %v2630
        %v3038 = vpop.f32.mrf.mxu0
        %v3039 = vadd.f32 %v2814, %v3038
        %v3040 = vpop.f32.mrf.mxu0
        %3041 = vmatprep.mubr.f32.mxu0 0.0
        %3042 = vmatmul.mubr.f32.gmra.mxu0 %v2633
        %v3043 = vpop.f32.mrf.mxu0
        %v3044 = vadd.f32 %v2819, %v3043
        %v3045 = vpop.f32.mrf.mxu0
        %3046 = vmatprep.mubr.f32.mxu0 0.0
        %3047 = vmatmul.mubr.f32.gmra.mxu0 %v2636
        %v3048 = vpop.f32.mrf.mxu0
        %v3049 = vadd.f32 %v2824, %v3048
        %v3050 = vpop.f32.mrf.mxu0
        %3051 = vmatprep.mubr.f32.mxu0 0.0
        %3052 = vmatmul.mubr.f32.gmra.mxu0 %v2639
        %v3053 = vpop.f32.mrf.mxu0
        %v3054 = vadd.f32 %v2829, %v3053
        %v3055 = vpop.f32.mrf.mxu0
        %3056 = vmatprep.mubr.f32.mxu0 0.0
        %3057 = vmatmul.mubr.f32.gmra.mxu0 %v2642
        %v3058 = vpop.f32.mrf.mxu0
        %v3059 = vadd.f32 %v2834, %v3058
        %v3060 = vpop.f32.mrf.mxu0
        %3061 = vmatprep.mubr.f32.mxu0 0.0
        %3062 = vmatmul.mubr.f32.gmra.mxu0 %v2645
        %v3063 = vpop.f32.mrf.mxu0
        %v3064 = vadd.f32 %v2839, %v3063
        %v3065 = vpop.f32.mrf.mxu0
        %3066 = vmatprep.mubr.f32.mxu0 0.0
        %3067 = vmatmul.mubr.f32.gmra.mxu0 %v2648
        %v3068 = vpop.f32.mrf.mxu0
        %v3069 = vadd.f32 %v2844, %v3068
        %v3070 = vpop.f32.mrf.mxu0
        %3071 = vmatprep.mubr.f32.mxu0 0.0
        %3072 = vmatmul.mubr.f32.gmra.mxu0 %v2651
        %v3073 = vpop.f32.mrf.mxu0
        %v3074 = vadd.f32 %v2849, %v3073
        %v3075 = vpop.f32.mrf.mxu0
        %3076 = vmatprep.mubr.f32.mxu0 0.0
        %3077 = vmatmul.mubr.f32.gmra.mxu0 %v2654
        %v3078 = vpop.f32.mrf.mxu0
        %v3079 = vadd.f32 %v2854, %v3078
        %v3080 = vpop.f32.mrf.mxu0
        %3081 = vmatprep.mubr.f32.mxu0 0.0
        %3082 = vmatmul.mubr.f32.gmra.mxu0 %v2657
        %v3083 = vpop.f32.mrf.mxu0
        %v3084 = vadd.f32 %v2859, %v3083
        %v3085 = vpop.f32.mrf.mxu0
        %3086 = vmatprep.mubr.f32.mxu0 0.0
        %3087 = vmatmul.mubr.f32.gmra.mxu0 %v2660
        %v3088 = vpop.f32.mrf.mxu0
        %v3089 = vadd.f32 %v2864, %v3088
        %v3090 = vpop.f32.mrf.mxu0
        %3091 = vmatprep.mubr.f32.mxu0 0.0
        %3092 = vmatmul.mubr.f32.gmra.mxu0 %v2663
        %v3093 = vpop.f32.mrf.mxu0
        %v3094 = vadd.f32 %v2869, %v3093
        %v3095 = vpop.f32.mrf.mxu0
        %3096 = vmatprep.mubr.f32.mxu0 0.0
        %3097 = vmatmul.mubr.f32.gmra.mxu0 %v2666
        %v3098 = vpop.f32.mrf.mxu0
        %v3099 = vadd.f32 %v2874, %v3098
        %v3100 = vpop.f32.mrf.mxu0
        %3101 = vmatprep.mubr.f32.mxu0 0.0
        %3102 = vmatmul.mubr.f32.gmra.mxu0 %v2669
        %v3103 = vpop.f32.mrf.mxu0
        %v3104 = vadd.f32 %v2879, %v3103
        %v3105 = vpop.f32.mrf.mxu0
        %3106 = vmatprep.mubr.f32.mxu0 0.0
        %3107 = vmatmul.mubr.f32.gmra.mxu0 %v2672
        %v3108 = vpop.f32.mrf.mxu0
        %v3109 = vadd.f32 %v2884, %v3108
        %v3110 = vpop.f32.mrf.mxu0
        %3111 = vmatprep.mubr.f32.mxu0 0.0
        %3112 = vmatmul.mubr.f32.gmra.mxu0 %v2675
        %v3113 = vpop.f32.mrf.mxu0
        %v3114 = vadd.f32 %v2889, %v3113
        %v3115 = vpop.f32.mrf.mxu0
        %3116 = vmatprep.mubr.f32.mxu0 0.0
        %3117 = vmatmul.mubr.f32.gmra.mxu0 %v2678
        %v3118 = vpop.f32.mrf.mxu0
        %v3119 = vadd.f32 %v2894, %v3118
        %v3120 = vpop.f32.mrf.mxu0
        %3121 = vmatprep.mubr.f32.mxu0 0.0
        %3122 = vmatmul.mubr.f32.gmra.mxu0 %v2681
        %v3123 = vpop.f32.mrf.mxu0
        %v3124 = vadd.f32 %v2899, %v3123
        %v3125 = vpop.f32.mrf.mxu0
        %3126 = vmatprep.mubr.f32.mxu0 0.0
        %3127 = vmatmul.mubr.f32.gmra.mxu0 %v2684
        %v3128 = vpop.f32.mrf.mxu0
        %v3129 = vadd.f32 %v2904, %v3128
        %v3130 = vpop.f32.mrf.mxu0
        %3131 = vmatprep.mubr.f32.mxu0 0.0
        %3132 = vmatmul.mubr.f32.gmra.mxu0 %v2687
        %v3133 = vpop.f32.mrf.mxu0
        %v3134 = vadd.f32 %v2909, %v3133
        %v3135 = vpop.f32.mrf.mxu0
        %3136 = vmatprep.mubr.f32.mxu0 0.0
        %3137 = vmatmul.mubr.f32.gmra.mxu0 %v2690
        %v3138 = vpop.f32.mrf.mxu0
        %v3139 = vadd.f32 %v2914, %v3138
        %v3140 = vpop.f32.mrf.mxu0
        %3141 = vdwg.mxu0
        %vm3142 = vcmask 785408
        %3143 = vst.msk [vmem:[#allocation4] sm:$0xff] %vm3142, %v2984
        %3144 = vst.msk [vmem:[#allocation4 + $0x8] sm:$0xff] %vm3142, %v2989
        %3145 = vst.msk [vmem:[#allocation4 + $0x10] sm:$0xff] %vm3142, %v2994
        %3146 = vst.msk [vmem:[#allocation4 + $0x18] sm:$0xff] %vm3142, %v2999
        %3147 = vst.msk [vmem:[#allocation4 + $0x20] sm:$0xff] %vm3142, %v3004
        %3148 = vst.msk [vmem:[#allocation4 + $0x28] sm:$0xff] %vm3142, %v3009
        %3149 = vst.msk [vmem:[#allocation4 + $0x30] sm:$0xff] %vm3142, %v3014
        %3150 = vst.msk [vmem:[#allocation4 + $0x38] sm:$0xff] %vm3142, %v3019
        %3151 = vst.msk [vmem:[#allocation4 + $0x40] sm:$0xff] %vm3142, %v3024
        %3152 = vst.msk [vmem:[#allocation4 + $0x48] sm:$0xff] %vm3142, %v3029
        %3153 = vst.msk [vmem:[#allocation4 + $0x50] sm:$0xff] %vm3142, %v3034
        %3154 = vst.msk [vmem:[#allocation4 + $0x58] sm:$0xff] %vm3142, %v3039
        %3155 = vst.msk [vmem:[#allocation4 + $0x60] sm:$0xff] %vm3142, %v3044
        %3156 = vst.msk [vmem:[#allocation4 + $0x68] sm:$0xff] %vm3142, %v3049
        %3157 = vst.msk [vmem:[#allocation4 + $0x70] sm:$0xff] %vm3142, %v3054
        %3158 = vst.msk [vmem:[#allocation4 + $0x78] sm:$0xff] %vm3142, %v3059
        %3159 = vst.msk [vmem:[#allocation4 + $0x80] sm:$0xff] %vm3142, %v3064
        %3160 = vst.msk [vmem:[#allocation4 + $0x88] sm:$0xff] %vm3142, %v3069
        %3161 = vst.msk [vmem:[#allocation4 + $0x90] sm:$0xff] %vm3142, %v3074
        %3162 = vst.msk [vmem:[#allocation4 + $0x98] sm:$0xff] %vm3142, %v3079
        %3163 = vst.msk [vmem:[#allocation4 + $0xa0] sm:$0xff] %vm3142, %v3084
        %3164 = vst.msk [vmem:[#allocation4 + $0xa8] sm:$0xff] %vm3142, %v3089
        %3165 = vst.msk [vmem:[#allocation4 + $0xb0] sm:$0xff] %vm3142, %v3094
        %3166 = vst.msk [vmem:[#allocation4 + $0xb8] sm:$0xff] %vm3142, %v3099
        %3167 = vst.msk [vmem:[#allocation4 + $0xc0] sm:$0xff] %vm3142, %v3104
        %3168 = vst.msk [vmem:[#allocation4 + $0xc8] sm:$0xff] %vm3142, %v3109
        %3169 = vst.msk [vmem:[#allocation4 + $0xd0] sm:$0xff] %vm3142, %v3114
        %3170 = vst.msk [vmem:[#allocation4 + $0xd8] sm:$0xff] %vm3142, %v3119
        %3171 = vst.msk [vmem:[#allocation4 + $0xe0] sm:$0xff] %vm3142, %v3124
        %3172 = vst.msk [vmem:[#allocation4 + $0xe8] sm:$0xff] %vm3142, %v3129
        %3173 = vst.msk [vmem:[#allocation4 + $0xf0] sm:$0xff] %vm3142, %v3134
        %3174 = vst.msk [vmem:[#allocation4 + $0xf8] sm:$0xff] %vm3142, %v3139
        %v3175 = vld [vmem:[%s7] sm:$0xff]
        %v3176 = vld [vmem:[%s7 + $0x8] sm:$0xff]
        %v3177 = vld [vmem:[%s7 + $0x10] sm:$0xff]
        %v3178 = vld [vmem:[%s7 + $0x18] sm:$0xff]
        %v3179 = vld [vmem:[%s6] sm:$0x1]
        %v3180 = vld [vmem:[%s8] sm:$0x1]
        loop: start=0, step=1, limit=2
        $region89: #{tpu_custom_call.1} parent=55 // loop_pre_header
          _
        $region90: #{tpu_custom_call.1} parent=55 // loop_header
          %s3182 = sphi 0, %s3186
          %p3183 = scmp.ge.s32.totalorder %s3182, 2
        $region91: #{tpu_custom_call.1} parent=55 // loop_header_branch
          %3185 = sbr.rel (%p3183) target = $region95
        $region92: #{tpu_custom_call.1} parent=55 // loop_body
          %s3187 = smul.u32 %s3182, 64
          %s3188 = sadd.s32 %s3182, 1
          %s3189 = smul.u32 %s3188, 64
          %s3190 = sadd.s32 %s3182, 2
          %s3191 = smul.u32 %s3190, 64
          %s3192 = scalar_lea.vmem [#allocation4], %s3187
          %v3193 = vld [vmem:[%s3192] sm:$0xff]
          %v3194 = vld [vmem:[%s3192 + $0x8] sm:$0xff]
          %v3195 = vld [vmem:[%s3192 + $0x10] sm:$0xff]
          %v3196 = vld [vmem:[%s3192 + $0x18] sm:$0xff]
          %v3197 = vld [vmem:[%s3192 + $0x20] sm:$0xff]
          %v3198 = vld [vmem:[%s3192 + $0x28] sm:$0xff]
          %v3199 = vld [vmem:[%s3192 + $0x30] sm:$0xff]
          %v3200 = vld [vmem:[%s3192 + $0x38] sm:$0xff]
          %s3201 = scalar_lea.vmem [#allocation4], %s3189
          %v3202 = vld [vmem:[%s3201] sm:$0xff]
          %v3203 = vld [vmem:[%s3201 + $0x8] sm:$0xff]
          %v3204 = vld [vmem:[%s3201 + $0x10] sm:$0xff]
          %v3205 = vld [vmem:[%s3201 + $0x18] sm:$0xff]
          %v3206 = vld [vmem:[%s3201 + $0x20] sm:$0xff]
          %v3207 = vld [vmem:[%s3201 + $0x28] sm:$0xff]
          %v3208 = vld [vmem:[%s3201 + $0x30] sm:$0xff]
          %v3209 = vld [vmem:[%s3201 + $0x38] sm:$0xff]
          %3218 = vrot.lane.b32.xlu0 %v3202, 96
          %v3219 = vpop.permute.xlu0 %3218
          %3220 = vrot.lane.b32.xlu0 %v3203, 96
          %v3221 = vpop.permute.xlu0 %3220
          %3222 = vrot.lane.b32.xlu0 %v3204, 96
          %v3223 = vpop.permute.xlu0 %3222
          %3224 = vrot.lane.b32.xlu0 %v3205, 96
          %v3225 = vpop.permute.xlu0 %3224
          %3226 = vrot.lane.b32.xlu0 %v3206, 96
          %v3227 = vpop.permute.xlu0 %3226
          %3228 = vrot.lane.b32.xlu0 %v3207, 96
          %v3229 = vpop.permute.xlu0 %3228
          %3230 = vrot.lane.b32.xlu0 %v3208, 96
          %v3231 = vpop.permute.xlu0 %3230
          %3232 = vrot.lane.b32.xlu0 %v3209, 96
          %v3233 = vpop.permute.xlu0 %3232
          %v3242 = vadd.f32 %v3193, %v3219
          %v3243 = vadd.f32 %v3194, %v3221
          %v3244 = vadd.f32 %v3195, %v3223
          %v3245 = vadd.f32 %v3196, %v3225
          %v3246 = vadd.f32 %v3197, %v3227
          %v3247 = vadd.f32 %v3198, %v3229
          %v3248 = vadd.f32 %v3199, %v3231
          %v3249 = vadd.f32 %v3200, %v3233
          %s3250 = scalar_lea.vmem [#allocation4], %s3191
          %v3251 = vld [vmem:[%s3250] sm:$0xff]
          %v3252 = vld [vmem:[%s3250 + $0x8] sm:$0xff]
          %v3253 = vld [vmem:[%s3250 + $0x10] sm:$0xff]
          %v3254 = vld [vmem:[%s3250 + $0x18] sm:$0xff]
          %v3255 = vld [vmem:[%s3250 + $0x20] sm:$0xff]
          %v3256 = vld [vmem:[%s3250 + $0x28] sm:$0xff]
          %v3257 = vld [vmem:[%s3250 + $0x30] sm:$0xff]
          %v3258 = vld [vmem:[%s3250 + $0x38] sm:$0xff]
          %3267 = vrot.lane.b32.xlu0 %v3251, 64
          %v3268 = vpop.permute.xlu0 %3267
          %3269 = vrot.lane.b32.xlu0 %v3252, 64
          %v3270 = vpop.permute.xlu0 %3269
          %3271 = vrot.lane.b32.xlu0 %v3253, 64
          %v3272 = vpop.permute.xlu0 %3271
          %3273 = vrot.lane.b32.xlu0 %v3254, 64
          %v3274 = vpop.permute.xlu0 %3273
          %3275 = vrot.lane.b32.xlu0 %v3255, 64
          %v3276 = vpop.permute.xlu0 %3275
          %3277 = vrot.lane.b32.xlu0 %v3256, 64
          %v3278 = vpop.permute.xlu0 %3277
          %3279 = vrot.lane.b32.xlu0 %v3257, 64
          %v3280 = vpop.permute.xlu0 %3279
          %3281 = vrot.lane.b32.xlu0 %v3258, 64
          %v3282 = vpop.permute.xlu0 %3281
          %v3291 = vadd.f32 %v3242, %v3268
          %v3292 = vadd.f32 %v3243, %v3270
          %v3293 = vadd.f32 %v3244, %v3272
          %v3294 = vadd.f32 %v3245, %v3274
          %v3295 = vadd.f32 %v3246, %v3276
          %v3296 = vadd.f32 %v3247, %v3278
          %v3297 = vadd.f32 %v3248, %v3280
          %v3298 = vadd.f32 %v3249, %v3282
          %v3300 = vlaneseq
          %v3301 = vshrl.u32 %v3300, 7
          %v3302 = vsub.s32 0, %v3301
          %v3303 = vrot.slane %v3179, %v3302
          %v3305 = vadd.f32 %v3291, %v3303
          %v3306 = vadd.f32 %v3292, %v3303
          %v3307 = vadd.f32 %v3293, %v3303
          %v3308 = vadd.f32 %v3294, %v3303
          %v3309 = vadd.f32 %v3295, %v3303
          %v3310 = vadd.f32 %v3296, %v3303
          %v3311 = vadd.f32 %v3297, %v3303
          %v3312 = vadd.f32 %v3298, %v3303
          %v3313 = vmax.f32 %v3305, 0.0
          %v3314 = vmax.f32 %v3306, 0.0
          %v3315 = vmax.f32 %v3307, 0.0
          %v3316 = vmax.f32 %v3308, 0.0
          %v3317 = vmax.f32 %v3309, 0.0
          %v3318 = vmax.f32 %v3310, 0.0
          %v3319 = vmax.f32 %v3311, 0.0
          %v3320 = vmax.f32 %v3312, 0.0
          %v3322 = vlaneseq
          %v3323 = vshrl.u32 %v3322, 7
          %v3324 = vsub.s32 0, %v3323
          %v3325 = vrot.slane %v3180, %v3324
          %v3328 = vsel %vm504, %v3313, 0
          %v3331 = vsel %vm504, %v3314, 0
          %v3334 = vsel %vm504, %v3315, 0
          %v3337 = vsel %vm504, %v3316, 0
          %v3340 = vsel %vm504, %v3317, 0
          %v3343 = vsel %vm504, %v3318, 0
          %v3346 = vsel %vm504, %v3319, 0
          %v3349 = vsel %vm504, %v3320, 0
          %3351 = vmatprep.subr.mxu0 0.0
          %3352 = vmatpush1.msra.mxu0 0.0
          %3353 = vmatprep.subr.mxu0 0.0
          %3354 = vmatpush1.msra.mxu0 0.0
          %3355 = vmatprep.subr.mxu0 0.0
          %3356 = vmatpush1.msra.mxu0 0.0
          %3357 = vmatprep.subr.mxu0 0.0
          %3358 = vmatpush1.msra.mxu0 0.0
          %3359 = vmatprep.subr.mxu0 0.0
          %3360 = vmatpush1.msra.mxu0 0.0
          %3361 = vmatprep.subr.mxu0 0.0
          %3362 = vmatpush1.msra.mxu0 0.0
          %3363 = vmatprep.subr.mxu0 0.0
          %3364 = vmatpush1.msra.mxu0 0.0
          %3365 = vmatprep.subr.mxu0 0.0
          %3366 = vmatpush1.msra.mxu0 0.0
          %3367 = vmatprep.subr.mxu0 0.0
          %3368 = vmatpush1.msra.mxu0 0.0
          %3369 = vmatprep.subr.mxu0 0.0
          %3370 = vmatpush1.msra.mxu0 0.0
          %3371 = vmatprep.subr.mxu0 0.0
          %3372 = vmatpush1.msra.mxu0 0.0
          %3373 = vmatprep.subr.mxu0 0.0
          %3374 = vmatpush1.msra.mxu0 0.0
          %3375 = vmatprep.subr.mxu0 0.0
          %3376 = vmatpush1.msra.mxu0 %v3178
          %3377 = vmatprep.subr.mxu0 0.0
          %3378 = vmatpush1.msra.mxu0 %v3177
          %3379 = vmatprep.subr.mxu0 0.0
          %3380 = vmatpush1.msra.mxu0 %v3176
          %3381 = vmatprep.subr.mxu0 0.0
          %3382 = vmatpush1.msra.mxu0 %v3175
          %3383 = vmatprep.subr.mxu0 0.0
          %3384 = vmatpush2.msra.mxu0 0.0
          %3385 = vmatprep.subr.mxu0 0.0
          %3386 = vmatpush2.msra.mxu0 0.0
          %3387 = vmatprep.subr.mxu0 0.0
          %3388 = vmatpush2.msra.mxu0 0.0
          %3389 = vmatprep.subr.mxu0 0.0
          %3390 = vmatpush2.msra.mxu0 0.0
          %3391 = vmatprep.subr.mxu0 0.0
          %3392 = vmatpush2.msra.mxu0 0.0
          %3393 = vmatprep.subr.mxu0 0.0
          %3394 = vmatpush2.msra.mxu0 0.0
          %3395 = vmatprep.subr.mxu0 0.0
          %3396 = vmatpush2.msra.mxu0 0.0
          %3397 = vmatprep.subr.mxu0 0.0
          %3398 = vmatpush2.msra.mxu0 0.0
          %3399 = vmatprep.subr.mxu0 0.0
          %3400 = vmatpush2.msra.mxu0 0.0
          %3401 = vmatprep.subr.mxu0 0.0
          %3402 = vmatpush2.msra.mxu0 0.0
          %3403 = vmatprep.subr.mxu0 0.0
          %3404 = vmatpush2.msra.mxu0 0.0
          %3405 = vmatprep.subr.mxu0 0.0
          %3406 = vmatpush2.msra.mxu0 0.0
          %3407 = vmatprep.subr.mxu0 0.0
          %3408 = vmatpush2.msra.mxu0 0.0
          %3409 = vmatprep.subr.mxu0 0.0
          %3410 = vmatpush2.msra.mxu0 0.0
          %3411 = vmatprep.subr.mxu0 0.0
          %3412 = vmatpush2.msra.mxu0 0.0
          %3413 = vmatprep.subr.mxu0 0.0
          %3414 = vmatpush2.msra.mxu0 0.0
          %3415 = vmatprep.mubr.f32.mxu0 0.0
          %3416 = vmatmul.mubr.f32.gmra.mxu0 %v3328
          %v3417 = vpop.f32.mrf.mxu0
          %v3418 = vadd.f32 %v3325, %v3417
          %v3419 = vpop.f32.mrf.mxu0
          %3420 = vmatprep.mubr.f32.mxu0 0.0
          %3421 = vmatmul.mubr.f32.gmra.mxu0 %v3331
          %v3422 = vpop.f32.mrf.mxu0
          %v3423 = vadd.f32 %v3325, %v3422
          %v3424 = vpop.f32.mrf.mxu0
          %3425 = vmatprep.mubr.f32.mxu0 0.0
          %3426 = vmatmul.mubr.f32.gmra.mxu0 %v3334
          %v3427 = vpop.f32.mrf.mxu0
          %v3428 = vadd.f32 %v3325, %v3427
          %v3429 = vpop.f32.mrf.mxu0
          %3430 = vmatprep.mubr.f32.mxu0 0.0
          %3431 = vmatmul.mubr.f32.gmra.mxu0 %v3337
          %v3432 = vpop.f32.mrf.mxu0
          %v3433 = vadd.f32 %v3325, %v3432
          %v3434 = vpop.f32.mrf.mxu0
          %3435 = vmatprep.mubr.f32.mxu0 0.0
          %3436 = vmatmul.mubr.f32.gmra.mxu0 %v3340
          %v3437 = vpop.f32.mrf.mxu0
          %v3438 = vadd.f32 %v3325, %v3437
          %v3439 = vpop.f32.mrf.mxu0
          %3440 = vmatprep.mubr.f32.mxu0 0.0
          %3441 = vmatmul.mubr.f32.gmra.mxu0 %v3343
          %v3442 = vpop.f32.mrf.mxu0
          %v3443 = vadd.f32 %v3325, %v3442
          %v3444 = vpop.f32.mrf.mxu0
          %3445 = vmatprep.mubr.f32.mxu0 0.0
          %3446 = vmatmul.mubr.f32.gmra.mxu0 %v3346
          %v3447 = vpop.f32.mrf.mxu0
          %v3448 = vadd.f32 %v3325, %v3447
          %v3449 = vpop.f32.mrf.mxu0
          %3450 = vmatprep.mubr.f32.mxu0 0.0
          %3451 = vmatmul.mubr.f32.gmra.mxu0 %v3349
          %v3452 = vpop.f32.mrf.mxu0
          %v3453 = vadd.f32 %v3325, %v3452
          %v3454 = vpop.f32.mrf.mxu0
          %3455 = vdwg.mxu0
          %s3456 = scalar_lea.vmem %s427, %s3187 [#allocation5]
          %v3457 = vld [vmem:[%s3456] sm:$0xff]
          %v3458 = vld [vmem:[%s3456 + $0x8] sm:$0xff]
          %v3459 = vld [vmem:[%s3456 + $0x10] sm:$0xff]
          %v3460 = vld [vmem:[%s3456 + $0x18] sm:$0xff]
          %v3461 = vld [vmem:[%s3456 + $0x20] sm:$0xff]
          %v3462 = vld [vmem:[%s3456 + $0x28] sm:$0xff]
          %v3463 = vld [vmem:[%s3456 + $0x30] sm:$0xff]
          %v3464 = vld [vmem:[%s3456 + $0x38] sm:$0xff]
          %v3465 = vadd.f32 %v3418, %v3457
          %v3466 = vadd.f32 %v3423, %v3458
          %v3467 = vadd.f32 %v3428, %v3459
          %v3468 = vadd.f32 %v3433, %v3460
          %v3469 = vadd.f32 %v3438, %v3461
          %v3470 = vadd.f32 %v3443, %v3462
          %v3471 = vadd.f32 %v3448, %v3463
          %v3472 = vadd.f32 %v3453, %v3464
          %v3473 = vmax.f32 %v3465, 0.0
          %v3474 = vmax.f32 %v3466, 0.0
          %v3475 = vmax.f32 %v3467, 0.0
          %v3476 = vmax.f32 %v3468, 0.0
          %v3477 = vmax.f32 %v3469, 0.0
          %v3478 = vmax.f32 %v3470, 0.0
          %v3479 = vmax.f32 %v3471, 0.0
          %v3480 = vmax.f32 %v3472, 0.0
          %s3481 = scalar_lea.vmem %s493, %s3187 [#allocation13]
          %3482 = vst [vmem:[%s3481] sm:$0xff] %v3473
          %3483 = vst [vmem:[%s3481 + $0x8] sm:$0xff] %v3474
          %3484 = vst [vmem:[%s3481 + $0x10] sm:$0xff] %v3475
          %3485 = vst [vmem:[%s3481 + $0x18] sm:$0xff] %v3476
          %3486 = vst [vmem:[%s3481 + $0x20] sm:$0xff] %v3477
          %3487 = vst [vmem:[%s3481 + $0x28] sm:$0xff] %v3478
          %3488 = vst [vmem:[%s3481 + $0x30] sm:$0xff] %v3479
          %3489 = vst [vmem:[%s3481 + $0x38] sm:$0xff] %v3480
        $region93: #{tpu_custom_call.1} parent=55 // loop_footer
          %s3186 = sadd.s32 1, %s3182
        $region94: #{tpu_custom_call.1} parent=55 // loop_footer_branch
          %3181 = sbr.rel target = $region90
        $region95: #{tpu_custom_call.1} parent=55 // loop_exit
          _
        %s3490 = sand.u32 %s278, 1
        %s3491 = scalar_lea.sflag [#allocation7], %s3490
        %s3492 = sand.u32 %s278, 1
        %s3493 = smul.addr %s3492, 128
        %s3494 = scalar_lea.vmem [#allocation13], %s3493
        // Predicated region
        $region96: #{tpu_custom_call.1} parent=55 // pred_check
          %p3495 = pneg %p288
        $region97: #{tpu_custom_call.1} parent=55 // pred_check_branch
          %3497 = sbr.rel (%p3495) target = $region99
        $region98: #{tpu_custom_call.1} parent=55 // pred_region
          %s3498 = smul.u32 2, %s35
          %s3500 = ssub.s32 2048, 2048
          %3501 = vsyncadd %s3491, %s3500
          %s3502 = smul.addr %s3498, 8
          %s3503 = smul.addr %s34, 64
          %s3504 = sadd.s32 %s3502, %s3503
          %s3505 = smul.addr %s3504, 128
          %s3506 = scalar_lea.hbm %s9, %s3505
          %s3507 = sshll.u32 %s3494, 4
          %s3508 = int_to_ptr.vmem [resolvable:$true] %s3507
          %3513 = dma.vmem_to_hbm [thread:$0]  %s3508, 2048, %s3506, %s3491, 128, 128, 8
        $region99: #{tpu_custom_call.1} parent=55 // pred_fallthru
          _
      $region56: #{tpu_custom_call.1} parent=5 // pred_fallthru
        _
      %p3514 = scmp.le.s32.totalorder 2, %s25
      // Predicated region
      $region100: #{tpu_custom_call.1} parent=5 // pred_check
        %p3515 = pneg %p3514
      $region101: #{tpu_custom_call.1} parent=5 // pred_check_branch
        %3517 = sbr.rel (%p3515) target = $region103
      $region102: #{tpu_custom_call.1} parent=5 // pred_region
        %s3518 = ssub.s32 %s25, 2
        // Predicated region
        $region104: #{tpu_custom_call.1} parent=102 // pred_check
          %p3519 = pneg %p294
        $region105: #{tpu_custom_call.1} parent=102 // pred_check_branch
          %3521 = sbr.rel (%p3519) target = $region107
        $region106: #{tpu_custom_call.1} parent=102 // pred_region
          %s3522 = sand.u32 %s279, 1
          %s3523 = scalar_lea.sflag [#allocation7], %s3522
          %s3524 = sand.u32 %s279, 1
          %s3525 = smul.addr %s3524, 128
          %s3526 = scalar_lea.vmem [#allocation13], %s3525
          %3527 = dma.done %s3523, 2048
        $region107: #{tpu_custom_call.1} parent=102 // pred_fallthru
          _
      $region103: #{tpu_custom_call.1} parent=5 // pred_fallthru
        _
    $region6: #{tpu_custom_call.1} parent=1 // loop_footer
      %s29 = sadd.s32 1, %s25
    $region7: #{tpu_custom_call.1} parent=1 // loop_footer_branch
      %24 = sbr.rel target = $region3
    $region8: #{tpu_custom_call.1} parent=1 // loop_exit
      _
    %3528 = vsyncpa [#allocation6], 1
    %s3529 = scalar_lea.sflag [#allocation6], 1
    %3530 = vsyncpa %s3529, 1
    %3531 = vsyncpa [#allocation9], 1
    %s3532 = scalar_lea.sflag [#allocation9], 1
    %3533 = vsyncpa %s3532, 1
    %3534 = vsyncpa [#allocation12], 1
    %3535 = vsyncpa [#allocation7], 1
    %s3536 = scalar_lea.sflag [#allocation7], 1
    %3537 = vsyncpa %s3536, 1

</llo_original>
